<compile_context>
chip_gen: v7x
topology: tpu7x:2x2x1
jax: 0.10.0
libtpu: 0.0.40
codegen_flags: <defaults>
</compile_context>

<pallas_src>
import functools

import jax
import jax.numpy as jnp
from jax.experimental import pallas as pl
from jax.experimental.pallas import tpu as pltpu


# ----------------------------- tiled MXU matmul ------------------------------

def _matmul_kernel(a_ref, b_ref, o_ref, acc_ref):
    @pl.when(pl.program_id(2) == 0)
    def _():
        acc_ref[...] = jnp.zeros_like(acc_ref)

    acc_ref[...] += jnp.dot(a_ref[...], b_ref[...],
                            preferred_element_type=jnp.float32)

    @pl.when(pl.program_id(2) == pl.num_programs(2) - 1)
    def _():
        o_ref[...] = acc_ref[...].astype(o_ref.dtype)


def _pick_block(dim, tile):
    """Return (block, padded_dim).  `tile` is (8,128)-aligned; a block equal to
    the full (unpadded) dim is always legal on TPU."""
    if dim <= tile:
        return dim, dim
    pad = (-dim) % tile
    return tile, dim + pad


def pallas_matmul(a, b, *, tm=512, tn=512, tk=512):
    """f32 a @ b on the MXU, tiled with a K-axis accumulator."""
    M, K = a.shape
    K2, N = b.shape
    assert K == K2
    bm, Mp = _pick_block(M, tm)
    bn, Np = _pick_block(N, tn)
    bk, Kp = _pick_block(K, tk)
    if Mp != M or Kp != K:
        a = jnp.pad(a, ((0, Mp - M), (0, Kp - K)))
    if Kp != K or Np != N:
        b = jnp.pad(b, ((0, Kp - K), (0, Np - N)))

    out = pl.pallas_call(
        _matmul_kernel,
        out_shape=jax.ShapeDtypeStruct((Mp, Np), jnp.float32),
        grid_spec=pltpu.PrefetchScalarGridSpec(
            num_scalar_prefetch=0,
            grid=(Mp // bm, Np // bn, Kp // bk),
            in_specs=[pl.BlockSpec((bm, bk), lambda i, j, k: (i, k)),
                      pl.BlockSpec((bk, bn), lambda i, j, k: (k, j))],
            out_specs=pl.BlockSpec((bm, bn), lambda i, j, k: (i, j)),
            scratch_shapes=[pltpu.VMEM((bm, bn), jnp.float32)]),
        compiler_params=pltpu.CompilerParams(
            dimension_semantics=("parallel", "parallel", "arbitrary"),
            vmem_limit_bytes=32 * 1024 * 1024),
    )(a, b)
    if Mp != M or Np != N:
        out = out[:M, :N]
    return out


# ---------------- lane-dense elementwise / BatchNorm kernels -----------------

def _row_tile(rows, cap=512):
    if rows <= cap:
        return rows
    for t in (512, 256, 128, 64, 32, 16, 8):
        if rows % t == 0:
            return t
    return rows  # fallback: single full block


def _bn_stats_kernel(x_ref, sum_ref, ssq_ref):
    @pl.when(pl.program_id(0) == 0)
    def _():
        sum_ref[...] = jnp.zeros_like(sum_ref)
        ssq_ref[...] = jnp.zeros_like(ssq_ref)

    x = x_ref[...]
    sum_ref[...] += jnp.sum(x, axis=0, keepdims=True)
    ssq_ref[...] += jnp.sum(x * x, axis=0, keepdims=True)


def _scale_shift_lrelu_kernel(x_ref, sc_ref, sh_ref, o_ref, *, slope):
    y = x_ref[...] * sc_ref[...] + sh_ref[...]
    o_ref[...] = jnp.where(y > 0, y, slope * y)


def batchnorm_leakyrelu(x_nhwc, gamma, beta, *, eps=1e-5, slope=0.01):
    """PyTorch training-mode BatchNorm2d (batch stats, biased variance) fused
    with LeakyReLU, operating on a lane-dense (N*H, W*C) view of the NHWC
    activation (no transposes, unmasked vector stores)."""
    N, H, W, C = x_nhwc.shape
    R, L = N * H, W * C
    x2d = x_nhwc.reshape(R, L)
    tr = _row_tile(R)
    grid = (R // tr,)

    # Pass 1: per-lane sum and sum-of-squares, accumulated across the M grid.
    s, ssq = pl.pallas_call(
        _bn_stats_kernel,
        out_shape=(jax.ShapeDtypeStruct((1, L), jnp.float32),
                   jax.ShapeDtypeStruct((1, L), jnp.float32)),
        grid=grid,
        in_specs=[pl.BlockSpec((tr, L), lambda i: (i, 0))],
        out_specs=(pl.BlockSpec((1, L), lambda i: (0, 0)),
                   pl.BlockSpec((1, L), lambda i: (0, 0))),
        compiler_params=pltpu.CompilerParams(
            dimension_semantics=("arbitrary",)),
    )(x2d)

    # Fold the W lane-groups into per-channel stats (tiny C-length glue).
    cnt = jnp.float32(N * H * W)
    mean = jnp.sum(s.reshape(W, C), axis=0) / cnt
    var = jnp.sum(ssq.reshape(W, C), axis=0) / cnt - mean * mean  # biased var
    scale_c = gamma * jax.lax.rsqrt(var + eps)
    shift_c = beta - mean * scale_c
    scale = jnp.tile(scale_c, W).reshape(1, L)
    shift = jnp.tile(shift_c, W).reshape(1, L)

    # Pass 2: normalize + LeakyReLU, tiled and fully parallel.
    y = pl.pallas_call(
        functools.partial(_scale_shift_lrelu_kernel, slope=slope),
        out_shape=jax.ShapeDtypeStruct((R, L), jnp.float32),
        grid=grid,
        in_specs=[pl.BlockSpec((tr, L), lambda i: (i, 0)),
                  pl.BlockSpec((1, L), lambda i: (0, 0)),
                  pl.BlockSpec((1, L), lambda i: (0, 0))],
        out_specs=pl.BlockSpec((tr, L), lambda i: (i, 0)),
        compiler_params=pltpu.CompilerParams(
            dimension_semantics=("parallel",)),
    )(x2d, scale, shift)
    return y.reshape(N, H, W, C)


def _tanh_kernel(x_ref, o_ref):
    o_ref[...] = jnp.tanh(x_ref[...])


def pallas_tanh(x):
    """Elementwise tanh on a lane-dense 2-D view (tanh is layout-agnostic)."""
    shape = x.shape
    total = x.size
    L = None
    for cand in (1024, 512, 256, 128):
        if total % cand == 0:
            L = cand
            break
    if L is None:
        L = shape[-1]
    x2d = x.reshape(-1, L)
    R = x2d.shape[0]
    tr = _row_tile(R)
    y = pl.pallas_call(
        _tanh_kernel,
        out_shape=jax.ShapeDtypeStruct((R, L), jnp.float32),
        grid=(R // tr,),
        in_specs=[pl.BlockSpec((tr, L), lambda i: (i, 0))],
        out_specs=pl.BlockSpec((tr, L), lambda i: (i, 0)),
        compiler_params=pltpu.CompilerParams(
            dimension_semantics=("parallel",)),
    )(x2d)
    return y.reshape(shape)


# ---------------- ConvTranspose2d (scatter / col2im form) --------------------

def conv_transpose2d(x_nhwc, wm, *, kH=4, kW=4, stride=2, padding=1):
    """PyTorch-exact ConvTranspose2d (bias=False), scatter form.
    x_nhwc: (N, H, W, Cin);  wm: (Cin, kH*kW*Cout) with taps ordered (kh, kw, co)."""
    N, H, W, Cin = x_nhwc.shape
    Cout = wm.shape[1] // (kH * kW)
    Hout = (H - 1) * stride - 2 * padding + kH
    Wout = (W - 1) * stride - 2 * padding + kW

    # Hot path: one dense MXU GEMM, lane-dense output of width kH*kW*Cout.
    taps = pallas_matmul(x_nhwc.reshape(N * H * W, Cin), wm)

    if H == 1 and W == 1 and stride == 1 and padding == 0:
        # Layer-1 fast path: GEMM output is already NHWC.
        return taps.reshape(N, kH, kW, Cout)

    # Overlap-add (col2im) of the kH*kW taps into the output canvas (JAX glue).
    taps = taps.reshape(N, H, W, kH, kW, Cout)
    Hb = (H - 1) * stride + kH
    Wb = (W - 1) * stride + kW
    he = (H - 1) * stride + 1
    we = (W - 1) * stride + 1
    out = jnp.zeros((N, Hb, Wb, Cout), jnp.float32)
    for kh in range(kH):
        for kw in range(kW):
            out = out.at[:, kh:kh + he:stride, kw:kw + we:stride, :].add(
                taps[:, :, :, kh, kw, :])
    return out[:, padding:padding + Hout, padding:padding + Wout, :]


# ------------------------------ Generator ------------------------------------

def init_generator_params(key, input_size, hidden_size, output_size):
    h = hidden_size
    chans = [(input_size, h * 8), (h * 8, h * 4), (h * 4, h * 2),
             (h * 2, h), (h, output_size)]
    params = {}
    for i, (cin, cout) in enumerate(chans, start=1):
        key, sub = jax.random.split(key)
        params[f"w{i}"] = (0.05 * jax.random.normal(sub, (cin, cout, 4, 4))
                           ).astype(jnp.float32)
    for i, (_, cout) in enumerate(chans[:4], start=1):
        params[f"gamma{i}"] = jnp.ones((cout,), jnp.float32)   # BatchNorm2d defaults
        params[f"beta{i}"] = jnp.zeros((cout,), jnp.float32)
    return params


def pack_generator_params(params):
    """Hoist the loop-invariant weight re-layout out of the forward pass:
    (Cin, Cout, kH, kW) -> (Cin, kH*kW*Cout), taps ordered (kh, kw, co)."""
    packed = dict(params)
    for i in range(1, 6):
        w = packed.pop(f"w{i}")
        cin, cout, kh, kw = w.shape
        packed[f"wm{i}"] = jnp.transpose(w, (0, 2, 3, 1)).reshape(cin, kh * kw * cout)
    return packed


def generator_forward(packed, noise_nchw, condition):
    """noise_nchw: (N, nz, 1, 1); condition: (N, nc).  Returns NCHW output."""
    N = noise_nchw.shape[0]
    # torch.cat((input, condition.view(N,-1,1,1)), 1) on 1x1 spatial == feature concat
    x = jnp.concatenate([noise_nchw.reshape(N, -1), condition.reshape(N, -1)], axis=1)

    # Layer 1: ConvTranspose2d(k=4, s=1, p=0) on a 1x1 input == GEMM -> NHWC directly.
    y = conv_transpose2d(x.reshape(N, 1, 1, -1), packed["wm1"], stride=1, padding=0)
    y = batchnorm_leakyrelu(y, packed["gamma1"], packed["beta1"])

    # Layers 2-4: ConvTranspose2d(k=4, s=2, p=1) + BN + LeakyReLU
    for i in (2, 3, 4):
        y = conv_transpose2d(y, packed[f"wm{i}"], stride=2, padding=1)
        y = batchnorm_leakyrelu(y, packed[f"gamma{i}"], packed[f"beta{i}"])

    # Layer 5: ConvTranspose2d(k=4, s=2, p=1) + Tanh
    # TODO(synk): Tanh cannot be folded into the GEMM epilogue in the scatter
    # form (the overlap-add happens after the matmul), so it stays a separate
    # lane-dense elementwise kernel.
    y = conv_transpose2d(y, packed["wm5"], stride=2, padding=1)
    y = pallas_tanh(y)
    return jnp.transpose(y, (0, 3, 1, 2))              # back to NCHW like PyTorch


# ---------------------- pure-JAX reference (for checking) --------------------

def _ref_forward(params, noise_nchw, condition):
    def convT(x, w, stride, padding):
        k = w.shape[2]
        wc = jnp.transpose(w[:, :, ::-1, ::-1], (1, 0, 2, 3))   # (Cout, Cin, kH, kW)
        return jax.lax.conv_general_dilated(
            x, wc, window_strides=(1, 1),
            padding=[(k - 1 - padding, k - 1 - padding)] * 2,
            lhs_dilation=(stride, stride),
            dimension_numbers=("NCHW", "OIHW", "NCHW"),
            precision=jax.lax.Precision.HIGHEST)

    def bn_lrelu(x, gamma, beta, eps=1e-5, slope=0.01):
        mean = jnp.mean(x, axis=(0, 2, 3), keepdims=True)
        var = jnp.mean((x - mean) ** 2, axis=(0, 2, 3), keepdims=True)
        y = (x - mean) * jax.lax.rsqrt(var + eps)
        y = y * gamma.reshape(1, -1, 1, 1) + beta.reshape(1, -1, 1, 1)
        return jnp.where(y > 0, y, slope * y)

    n = noise_nchw.shape[0]
    x = jnp.concatenate([noise_nchw, condition.reshape(n, -1, 1, 1)], axis=1)
    y = convT(x, params["w1"], 1, 0)
    y = bn_lrelu(y, params["gamma1"], params["beta1"])
    for i in (2, 3, 4):
        y = convT(y, params[f"w{i}"], 2, 1)
        y = bn_lrelu(y, params[f"gamma{i}"], params[f"beta{i}"])
    y = convT(y, params["w5"], 2, 1)
    return jnp.tanh(y)


if __name__ == "__main__":
    key = jax.random.PRNGKey(0)
    nz, nc = 12, 4                       # noise + condition channels
    input_size, hidden_size, output_size = nz + nc, 8, 3
    N = 2
    k1, k2, k3 = jax.random.split(key, 3)
    params = init_generator_params(k1, input_size, hidden_size, output_size)
    packed = pack_generator_params(params)
    noise = jax.random.normal(k2, (N, nz, 1, 1), jnp.float32)
    condition = jax.random.normal(k3, (N, nc), jnp.float32)

    out = jax.jit(generator_forward)(packed, noise, condition)
    out = jax.block_until_ready(out)
    assert out.shape == (N, output_size, 64, 64), out.shape
    assert bool(jnp.all(jnp.isfinite(out)))

    ref = _ref_forward(params, noise, condition)
    err = float(jnp.max(jnp.abs(out - ref)))
    assert err < 2e-3, f"max abs error vs reference = {err}"

    print("KERNEL_OK")
</pallas_src>

<mosaic_0001>
module attributes {stable_mosaic.version = 11 : i64} {
  func.func @_matmul_kernel(%arg0: i32, %arg1: i32, %arg2: i32, %arg3: memref<2x16xf32, #tpu.memory_space<vmem>>, %arg4: memref<16x512xf32, #tpu.memory_space<vmem>>, %arg5: memref<2x512xf32, #tpu.memory_space<vmem>>, %arg6: memref<2x512xf32, #tpu.memory_space<vmem>>) attributes {dimension_semantics = [#tpu.dimension_semantics<parallel>, #tpu.dimension_semantics<parallel>, #tpu.dimension_semantics<arbitrary>], iteration_bounds = array<i64: 1, 2, 1>, scalar_prefetch = 0 : i64, scratch_operands = 1 : i64, tpu.core_type = #tpu.core_type<tc>, window_params = [{transform_indices = @transform_0, window_bounds = array<i64: 2, 16>}, {transform_indices = @transform_1, window_bounds = array<i64: 16, 512>}, {transform_indices = @transform_2, window_bounds = array<i64: 2, 512>}]} {
    %c0_i32 = arith.constant 0 : i32
    %0 = arith.cmpi eq, %arg2, %c0_i32 : i32
    %1 = arith.extui %0 : i1 to i32
    %c0_i32_0 = arith.constant 0 : i32
    %2 = arith.cmpi ne, %1, %c0_i32_0 : i32
    scf.if %2 {
      %cst_10 = arith.constant 0.000000e+00 : f32
      %12 = vector.broadcast %cst_10 : f32 to vector<2x512xf32>
      %c0_11 = arith.constant 0 : index
      %c0_12 = arith.constant 0 : index
      %13 = vector.load %arg6[%c0_11, %c0_12] : memref<2x512xf32, #tpu.memory_space<vmem>>, vector<2x512xf32>
      tpu.vector_store %arg6[%c0_11, %c0_12], %12 {strides = array<i32>} : memref<2x512xf32, #tpu.memory_space<vmem>>, vector<2x512xf32>,
    } else {
    }
    %c0 = arith.constant 0 : index
    %c0_1 = arith.constant 0 : index
    %3 = vector.load %arg6[%c0, %c0_1] : memref<2x512xf32, #tpu.memory_space<vmem>>, vector<2x512xf32>
    %c0_2 = arith.constant 0 : index
    %c0_3 = arith.constant 0 : index
    %4 = vector.load %arg3[%c0_2, %c0_3] : memref<2x16xf32, #tpu.memory_space<vmem>>, vector<2x16xf32>
    %c0_4 = arith.constant 0 : index
    %c0_5 = arith.constant 0 : index
    %5 = vector.load %arg4[%c0_4, %c0_5] : memref<16x512xf32, #tpu.memory_space<vmem>>, vector<16x512xf32>
    %cst = arith.constant dense<0.000000e+00> : vector<2x512xf32>
    %6 = tpu.matmul %4, %5, %cst {dimension_numbers = #tpu.dot_dimension_numbers<[1], [0], [0], [1], [0, 0, 1, 1], [], []>} : vector<2x16xf32>, vector<16x512xf32>, vector<2x512xf32> -> vector<2x512xf32>
    %7 = arith.addf %3, %6 : vector<2x512xf32>
    %c0_6 = arith.constant 0 : index
    %c0_7 = arith.constant 0 : index
    %8 = vector.load %arg6[%c0_6, %c0_7] : memref<2x512xf32, #tpu.memory_space<vmem>>, vector<2x512xf32>
    tpu.vector_store %arg6[%c0_6, %c0_7], %7 {strides = array<i32>} : memref<2x512xf32, #tpu.memory_space<vmem>>, vector<2x512xf32>,
    %c0_i32_8 = arith.constant 0 : i32
    %9 = arith.cmpi eq, %arg2, %c0_i32_8 : i32
    %10 = arith.extui %9 : i1 to i32
    %c0_i32_9 = arith.constant 0 : i32
    %11 = arith.cmpi ne, %10, %c0_i32_9 : i32
    scf.if %11 {
      %c0_10 = arith.constant 0 : index
      %c0_11 = arith.constant 0 : index
      %12 = vector.load %arg6[%c0_10, %c0_11] : memref<2x512xf32, #tpu.memory_space<vmem>>, vector<2x512xf32>
      %c0_12 = arith.constant 0 : index
      %c0_13 = arith.constant 0 : index
      %13 = vector.load %arg5[%c0_12, %c0_13] : memref<2x512xf32, #tpu.memory_space<vmem>>, vector<2x512xf32>
      tpu.vector_store %arg5[%c0_12, %c0_13], %12 {strides = array<i32>} : memref<2x512xf32, #tpu.memory_space<vmem>>, vector<2x512xf32>,
    } else {
    }
    return
  }
  func.func @transform_0(%arg0: i32, %arg1: i32, %arg2: i32) -> (i32, i32) {
    %c0_i32 = arith.constant 0 : i32
    return %arg0, %arg2 : i32, i32
  }
  func.func @transform_1(%arg0: i32, %arg1: i32, %arg2: i32) -> (i32, i32) {
    %c0_i32 = arith.constant 0 : i32
    return %arg2, %arg1 : i32, i32
  }
  func.func @transform_2(%arg0: i32, %arg1: i32, %arg2: i32) -> (i32, i32) {
    %c0_i32 = arith.constant 0 : i32
    return %arg0, %arg1 : i32, i32
  }
}

module attributes {stable_mosaic.version = 11 : i64} {
  func.func @_bn_stats_kernel(%arg0: i32, %arg1: memref<8x256xf32, #tpu.memory_space<vmem>>, %arg2: memref<1x256xf32, #tpu.memory_space<vmem>>, %arg3: memref<1x256xf32, #tpu.memory_space<vmem>>) attributes {dimension_semantics = [#tpu.dimension_semantics<arbitrary>], iteration_bounds = array<i64: 1>, scalar_prefetch = 0 : i64, scratch_operands = 0 : i64, tpu.core_type = #tpu.core_type<tc>, window_params = [{transform_indices = @transform_0, window_bounds = array<i64: 8, 256>}, {pipeline_mode = #tpu.pipeline_mode<synchronous>, transform_indices = @transform_1, window_bounds = array<i64: 1, 256>}, {pipeline_mode = #tpu.pipeline_mode<synchronous>, transform_indices = @transform_2, window_bounds = array<i64: 1, 256>}]} {
    %c0_i32 = arith.constant 0 : i32
    %0 = arith.cmpi eq, %arg0, %c0_i32 : i32
    %1 = arith.extui %0 : i1 to i32
    %c0_i32_0 = arith.constant 0 : i32
    %2 = arith.cmpi ne, %1, %c0_i32_0 : i32
    scf.if %2 {
      %cst_11 = arith.constant 0.000000e+00 : f32
      %15 = vector.broadcast %cst_11 : f32 to vector<1x256xf32>
      %c0_12 = arith.constant 0 : index
      %c0_13 = arith.constant 0 : index
      %16 = vector.load %arg2[%c0_12, %c0_13] : memref<1x256xf32, #tpu.memory_space<vmem>>, vector<1x256xf32>
      tpu.vector_store %arg2[%c0_12, %c0_13], %15 {strides = array<i32>} : memref<1x256xf32, #tpu.memory_space<vmem>>, vector<1x256xf32>,
      %cst_14 = arith.constant 0.000000e+00 : f32
      %17 = vector.broadcast %cst_14 : f32 to vector<1x256xf32>
      %c0_15 = arith.constant 0 : index
      %c0_16 = arith.constant 0 : index
      %18 = vector.load %arg3[%c0_15, %c0_16] : memref<1x256xf32, #tpu.memory_space<vmem>>, vector<1x256xf32>
      tpu.vector_store %arg3[%c0_15, %c0_16], %17 {strides = array<i32>} : memref<1x256xf32, #tpu.memory_space<vmem>>, vector<1x256xf32>,
    } else {
    }
    %c0 = arith.constant 0 : index
    %c0_1 = arith.constant 0 : index
    %3 = vector.load %arg1[%c0, %c0_1] : memref<8x256xf32, #tpu.memory_space<vmem>>, vector<8x256xf32>
    %c0_2 = arith.constant 0 : index
    %c0_3 = arith.constant 0 : index
    %4 = vector.load %arg2[%c0_2, %c0_3] : memref<1x256xf32, #tpu.memory_space<vmem>>, vector<1x256xf32>
    %cst = arith.constant dense<0.000000e+00> : vector<256xf32>
    %5 = vector.multi_reduction <add>, %3, %cst [0] : vector<8x256xf32> to vector<256xf32>
    %6 = vector.shape_cast %5 : vector<256xf32> to vector<1x256xf32>
    %7 = arith.addf %4, %6 : vector<1x256xf32>
    %c0_4 = arith.constant 0 : index
    %c0_5 = arith.constant 0 : index
    %8 = vector.load %arg2[%c0_4, %c0_5] : memref<1x256xf32, #tpu.memory_space<vmem>>, vector<1x256xf32>
    tpu.vector_store %arg2[%c0_4, %c0_5], %7 {strides = array<i32>} : memref<1x256xf32, #tpu.memory_space<vmem>>, vector<1x256xf32>,
    %c0_6 = arith.constant 0 : index
    %c0_7 = arith.constant 0 : index
    %9 = vector.load %arg3[%c0_6, %c0_7] : memref<1x256xf32, #tpu.memory_space<vmem>>, vector<1x256xf32>
    %10 = arith.mulf %3, %3 : vector<8x256xf32>
    %cst_8 = arith.constant dense<0.000000e+00> : vector<256xf32>
    %11 = vector.multi_reduction <add>, %10, %cst_8 [0] : vector<8x256xf32> to vector<256xf32>
    %12 = vector.shape_cast %11 : vector<256xf32> to vector<1x256xf32>
    %13 = arith.addf %9, %12 : vector<1x256xf32>
    %c0_9 = arith.constant 0 : index
    %c0_10 = arith.constant 0 : index
    %14 = vector.load %arg3[%c0_9, %c0_10] : memref<1x256xf32, #tpu.memory_space<vmem>>, vector<1x256xf32>
    tpu.vector_store %arg3[%c0_9, %c0_10], %13 {strides = array<i32>} : memref<1x256xf32, #tpu.memory_space<vmem>>, vector<1x256xf32>,
    return
  }
  func.func @transform_0(%arg0: i32) -> (i32, i32) {
    %c0_i32 = arith.constant 0 : i32
    %c0_i32_0 = arith.constant 0 : i32
    return %arg0, %c0_i32 : i32, i32
  }
  func.func @transform_1(%arg0: i32) -> (i32, i32) {
    %c0_i32 = arith.constant 0 : i32
    %c0_i32_0 = arith.constant 0 : i32
    %c0_i32_1 = arith.constant 0 : i32
    return %c0_i32, %c0_i32_0 : i32, i32
  }
  func.func @transform_2(%arg0: i32) -> (i32, i32) {
    %c0_i32 = arith.constant 0 : i32
    %c0_i32_0 = arith.constant 0 : i32
    %c0_i32_1 = arith.constant 0 : i32
    return %c0_i32, %c0_i32_0 : i32, i32
  }
}

module attributes {stable_mosaic.version = 11 : i64} {
  func.func @_scale_shift_lrelu_kernel(%arg0: i32, %arg1: memref<8x256xf32, #tpu.memory_space<vmem>>, %arg2: memref<1x256xf32, #tpu.memory_space<vmem>>, %arg3: memref<1x256xf32, #tpu.memory_space<vmem>>, %arg4: memref<8x256xf32, #tpu.memory_space<vmem>>) attributes {dimension_semantics = [#tpu.dimension_semantics<parallel>], iteration_bounds = array<i64: 1>, scalar_prefetch = 0 : i64, scratch_operands = 0 : i64, tpu.core_type = #tpu.core_type<tc>, window_params = [{transform_indices = @transform_0, window_bounds = array<i64: 8, 256>}, {pipeline_mode = #tpu.pipeline_mode<synchronous>, transform_indices = @transform_1, window_bounds = array<i64: 1, 256>}, {pipeline_mode = #tpu.pipeline_mode<synchronous>, transform_indices = @transform_2, window_bounds = array<i64: 1, 256>}, {transform_indices = @transform_3, window_bounds = array<i64: 8, 256>}]} {
    %c0 = arith.constant 0 : index
    %c0_0 = arith.constant 0 : index
    %0 = vector.load %arg1[%c0, %c0_0] : memref<8x256xf32, #tpu.memory_space<vmem>>, vector<8x256xf32>
    %c0_1 = arith.constant 0 : index
    %c0_2 = arith.constant 0 : index
    %1 = vector.load %arg2[%c0_1, %c0_2] : memref<1x256xf32, #tpu.memory_space<vmem>>, vector<1x256xf32>
    %2 = vector.broadcast %1 : vector<1x256xf32> to vector<8x256xf32>
    %3 = arith.mulf %0, %2 : vector<8x256xf32>
    %c0_3 = arith.constant 0 : index
    %c0_4 = arith.constant 0 : index
    %4 = vector.load %arg3[%c0_3, %c0_4] : memref<1x256xf32, #tpu.memory_space<vmem>>, vector<1x256xf32>
    %5 = vector.broadcast %4 : vector<1x256xf32> to vector<8x256xf32>
    %6 = arith.addf %3, %5 : vector<8x256xf32>
    %cst = arith.constant 0.000000e+00 : f32
    %7 = vector.broadcast %cst : f32 to vector<8x256xf32>
    %8 = arith.cmpf ogt, %6, %7 : vector<8x256xf32>
    %cst_5 = arith.constant 0.00999999977 : f32
    %9 = vector.broadcast %cst_5 : f32 to vector<8x256xf32>
    %10 = arith.mulf %9, %6 : vector<8x256xf32>
    %11 = arith.select %8, %6, %10 : vector<8x256xi1>, vector<8x256xf32>
    %c0_6 = arith.constant 0 : index
    %c0_7 = arith.constant 0 : index
    %12 = vector.load %arg4[%c0_6, %c0_7] : memref<8x256xf32, #tpu.memory_space<vmem>>, vector<8x256xf32>
    tpu.vector_store %arg4[%c0_6, %c0_7], %11 {strides = array<i32>} : memref<8x256xf32, #tpu.memory_space<vmem>>, vector<8x256xf32>,
    return
  }
  func.func @transform_0(%arg0: i32) -> (i32, i32) {
    %c0_i32 = arith.constant 0 : i32
    %c0_i32_0 = arith.constant 0 : i32
    return %arg0, %c0_i32 : i32, i32
  }
  func.func @transform_1(%arg0: i32) -> (i32, i32) {
    %c0_i32 = arith.constant 0 : i32
    %c0_i32_0 = arith.constant 0 : i32
    %c0_i32_1 = arith.constant 0 : i32
    return %c0_i32, %c0_i32_0 : i32, i32
  }
  func.func @transform_2(%arg0: i32) -> (i32, i32) {
    %c0_i32 = arith.constant 0 : i32
    %c0_i32_0 = arith.constant 0 : i32
    %c0_i32_1 = arith.constant 0 : i32
    return %c0_i32, %c0_i32_0 : i32, i32
  }
  func.func @transform_3(%arg0: i32) -> (i32, i32) {
    %c0_i32 = arith.constant 0 : i32
    %c0_i32_0 = arith.constant 0 : i32
    return %arg0, %c0_i32 : i32, i32
  }
}

module attributes {stable_mosaic.version = 11 : i64} {
  func.func @_matmul_kernel(%arg0: i32, %arg1: i32, %arg2: i32, %arg3: memref<32x64xf32, #tpu.memory_space<vmem>>, %arg4: memref<64x512xf32, #tpu.memory_space<vmem>>, %arg5: memref<32x512xf32, #tpu.memory_space<vmem>>, %arg6: memref<32x512xf32, #tpu.memory_space<vmem>>) attributes {dimension_semantics = [#tpu.dimension_semantics<parallel>, #tpu.dimension_semantics<parallel>, #tpu.dimension_semantics<arbitrary>], iteration_bounds = array<i64: 1, 1, 1>, scalar_prefetch = 0 : i64, scratch_operands = 1 : i64, tpu.core_type = #tpu.core_type<tc>, window_params = [{transform_indices = @transform_0, window_bounds = array<i64: 32, 64>}, {transform_indices = @transform_1, window_bounds = array<i64: 64, 512>}, {transform_indices = @transform_2, window_bounds = array<i64: 32, 512>}]} {
    %c0_i32 = arith.constant 0 : i32
    %0 = arith.cmpi eq, %arg2, %c0_i32 : i32
    %1 = arith.extui %0 : i1 to i32
    %c0_i32_0 = arith.constant 0 : i32
    %2 = arith.cmpi ne, %1, %c0_i32_0 : i32
    scf.if %2 {
      %cst_10 = arith.constant 0.000000e+00 : f32
      %12 = vector.broadcast %cst_10 : f32 to vector<32x512xf32>
      %c0_11 = arith.constant 0 : index
      %c0_12 = arith.constant 0 : index
      %13 = vector.load %arg6[%c0_11, %c0_12] : memref<32x512xf32, #tpu.memory_space<vmem>>, vector<32x512xf32>
      tpu.vector_store %arg6[%c0_11, %c0_12], %12 {strides = array<i32>} : memref<32x512xf32, #tpu.memory_space<vmem>>, vector<32x512xf32>,
    } else {
    }
    %c0 = arith.constant 0 : index
    %c0_1 = arith.constant 0 : index
    %3 = vector.load %arg6[%c0, %c0_1] : memref<32x512xf32, #tpu.memory_space<vmem>>, vector<32x512xf32>
    %c0_2 = arith.constant 0 : index
    %c0_3 = arith.constant 0 : index
    %4 = vector.load %arg3[%c0_2, %c0_3] : memref<32x64xf32, #tpu.memory_space<vmem>>, vector<32x64xf32>
    %c0_4 = arith.constant 0 : index
    %c0_5 = arith.constant 0 : index
    %5 = vector.load %arg4[%c0_4, %c0_5] : memref<64x512xf32, #tpu.memory_space<vmem>>, vector<64x512xf32>
    %cst = arith.constant dense<0.000000e+00> : vector<32x512xf32>
    %6 = tpu.matmul %4, %5, %cst {dimension_numbers = #tpu.dot_dimension_numbers<[1], [0], [0], [1], [0, 0, 1, 1], [], []>} : vector<32x64xf32>, vector<64x512xf32>, vector<32x512xf32> -> vector<32x512xf32>
    %7 = arith.addf %3, %6 : vector<32x512xf32>
    %c0_6 = arith.constant 0 : index
    %c0_7 = arith.constant 0 : index
    %8 = vector.load %arg6[%c0_6, %c0_7] : memref<32x512xf32, #tpu.memory_space<vmem>>, vector<32x512xf32>
    tpu.vector_store %arg6[%c0_6, %c0_7], %7 {strides = array<i32>} : memref<32x512xf32, #tpu.memory_space<vmem>>, vector<32x512xf32>,
    %c0_i32_8 = arith.constant 0 : i32
    %9 = arith.cmpi eq, %arg2, %c0_i32_8 : i32
    %10 = arith.extui %9 : i1 to i32
    %c0_i32_9 = arith.constant 0 : i32
    %11 = arith.cmpi ne, %10, %c0_i32_9 : i32
    scf.if %11 {
      %c0_10 = arith.constant 0 : index
      %c0_11 = arith.constant 0 : index
      %12 = vector.load %arg6[%c0_10, %c0_11] : memref<32x512xf32, #tpu.memory_space<vmem>>, vector<32x512xf32>
      %c0_12 = arith.constant 0 : index
      %c0_13 = arith.constant 0 : index
      %13 = vector.load %arg5[%c0_12, %c0_13] : memref<32x512xf32, #tpu.memory_space<vmem>>, vector<32x512xf32>
      tpu.vector_store %arg5[%c0_12, %c0_13], %12 {strides = array<i32>} : memref<32x512xf32, #tpu.memory_space<vmem>>, vector<32x512xf32>,
    } else {
    }
    return
  }
  func.func @transform_0(%arg0: i32, %arg1: i32, %arg2: i32) -> (i32, i32) {
    %c0_i32 = arith.constant 0 : i32
    return %arg0, %arg2 : i32, i32
  }
  func.func @transform_1(%arg0: i32, %arg1: i32, %arg2: i32) -> (i32, i32) {
    %c0_i32 = arith.constant 0 : i32
    return %arg2, %arg1 : i32, i32
  }
  func.func @transform_2(%arg0: i32, %arg1: i32, %arg2: i32) -> (i32, i32) {
    %c0_i32 = arith.constant 0 : i32
    return %arg0, %arg1 : i32, i32
  }
}

module attributes {stable_mosaic.version = 11 : i64} {
  func.func @_bn_stats_kernel(%arg0: i32, %arg1: memref<16x256xf32, #tpu.memory_space<vmem>>, %arg2: memref<1x256xf32, #tpu.memory_space<vmem>>, %arg3: memref<1x256xf32, #tpu.memory_space<vmem>>) attributes {dimension_semantics = [#tpu.dimension_semantics<arbitrary>], iteration_bounds = array<i64: 1>, scalar_prefetch = 0 : i64, scratch_operands = 0 : i64, tpu.core_type = #tpu.core_type<tc>, window_params = [{transform_indices = @transform_0, window_bounds = array<i64: 16, 256>}, {pipeline_mode = #tpu.pipeline_mode<synchronous>, transform_indices = @transform_1, window_bounds = array<i64: 1, 256>}, {pipeline_mode = #tpu.pipeline_mode<synchronous>, transform_indices = @transform_2, window_bounds = array<i64: 1, 256>}]} {
    %c0_i32 = arith.constant 0 : i32
    %0 = arith.cmpi eq, %arg0, %c0_i32 : i32
    %1 = arith.extui %0 : i1 to i32
    %c0_i32_0 = arith.constant 0 : i32
    %2 = arith.cmpi ne, %1, %c0_i32_0 : i32
    scf.if %2 {
      %cst_11 = arith.constant 0.000000e+00 : f32
      %15 = vector.broadcast %cst_11 : f32 to vector<1x256xf32>
      %c0_12 = arith.constant 0 : index
      %c0_13 = arith.constant 0 : index
      %16 = vector.load %arg2[%c0_12, %c0_13] : memref<1x256xf32, #tpu.memory_space<vmem>>, vector<1x256xf32>
      tpu.vector_store %arg2[%c0_12, %c0_13], %15 {strides = array<i32>} : memref<1x256xf32, #tpu.memory_space<vmem>>, vector<1x256xf32>,
      %cst_14 = arith.constant 0.000000e+00 : f32
      %17 = vector.broadcast %cst_14 : f32 to vector<1x256xf32>
      %c0_15 = arith.constant 0 : index
      %c0_16 = arith.constant 0 : index
      %18 = vector.load %arg3[%c0_15, %c0_16] : memref<1x256xf32, #tpu.memory_space<vmem>>, vector<1x256xf32>
      tpu.vector_store %arg3[%c0_15, %c0_16], %17 {strides = array<i32>} : memref<1x256xf32, #tpu.memory_space<vmem>>, vector<1x256xf32>,
    } else {
    }
    %c0 = arith.constant 0 : index
    %c0_1 = arith.constant 0 : index
    %3 = vector.load %arg1[%c0, %c0_1] : memref<16x256xf32, #tpu.memory_space<vmem>>, vector<16x256xf32>
    %c0_2 = arith.constant 0 : index
    %c0_3 = arith.constant 0 : index
    %4 = vector.load %arg2[%c0_2, %c0_3] : memref<1x256xf32, #tpu.memory_space<vmem>>, vector<1x256xf32>
    %cst = arith.constant dense<0.000000e+00> : vector<256xf32>
    %5 = vector.multi_reduction <add>, %3, %cst [0] : vector<16x256xf32> to vector<256xf32>
    %6 = vector.shape_cast %5 : vector<256xf32> to vector<1x256xf32>
    %7 = arith.addf %4, %6 : vector<1x256xf32>
    %c0_4 = arith.constant 0 : index
    %c0_5 = arith.constant 0 : index
    %8 = vector.load %arg2[%c0_4, %c0_5] : memref<1x256xf32, #tpu.memory_space<vmem>>, vector<1x256xf32>
    tpu.vector_store %arg2[%c0_4, %c0_5], %7 {strides = array<i32>} : memref<1x256xf32, #tpu.memory_space<vmem>>, vector<1x256xf32>,
    %c0_6 = arith.constant 0 : index
    %c0_7 = arith.constant 0 : index
    %9 = vector.load %arg3[%c0_6, %c0_7] : memref<1x256xf32, #tpu.memory_space<vmem>>, vector<1x256xf32>
    %10 = arith.mulf %3, %3 : vector<16x256xf32>
    %cst_8 = arith.constant dense<0.000000e+00> : vector<256xf32>
    %11 = vector.multi_reduction <add>, %10, %cst_8 [0] : vector<16x256xf32> to vector<256xf32>
    %12 = vector.shape_cast %11 : vector<256xf32> to vector<1x256xf32>
    %13 = arith.addf %9, %12 : vector<1x256xf32>
    %c0_9 = arith.constant 0 : index
    %c0_10 = arith.constant 0 : index
    %14 = vector.load %arg3[%c0_9, %c0_10] : memref<1x256xf32, #tpu.memory_space<vmem>>, vector<1x256xf32>
    tpu.vector_store %arg3[%c0_9, %c0_10], %13 {strides = array<i32>} : memref<1x256xf32, #tpu.memory_space<vmem>>, vector<1x256xf32>,
    return
  }
  func.func @transform_0(%arg0: i32) -> (i32, i32) {
    %c0_i32 = arith.constant 0 : i32
    %c0_i32_0 = arith.constant 0 : i32
    return %arg0, %c0_i32 : i32, i32
  }
  func.func @transform_1(%arg0: i32) -> (i32, i32) {
    %c0_i32 = arith.constant 0 : i32
    %c0_i32_0 = arith.constant 0 : i32
    %c0_i32_1 = arith.constant 0 : i32
    return %c0_i32, %c0_i32_0 : i32, i32
  }
  func.func @transform_2(%arg0: i32) -> (i32, i32) {
    %c0_i32 = arith.constant 0 : i32
    %c0_i32_0 = arith.constant 0 : i32
    %c0_i32_1 = arith.constant 0 : i32
    return %c0_i32, %c0_i32_0 : i32, i32
  }
}

module attributes {stable_mosaic.version = 11 : i64} {
  func.func @_scale_shift_lrelu_kernel(%arg0: i32, %arg1: memref<16x256xf32, #tpu.memory_space<vmem>>, %arg2: memref<1x256xf32, #tpu.memory_space<vmem>>, %arg3: memref<1x256xf32, #tpu.memory_space<vmem>>, %arg4: memref<16x256xf32, #tpu.memory_space<vmem>>) attributes {dimension_semantics = [#tpu.dimension_semantics<parallel>], iteration_bounds = array<i64: 1>, scalar_prefetch = 0 : i64, scratch_operands = 0 : i64, tpu.core_type = #tpu.core_type<tc>, window_params = [{transform_indices = @transform_0, window_bounds = array<i64: 16, 256>}, {pipeline_mode = #tpu.pipeline_mode<synchronous>, transform_indices = @transform_1, window_bounds = array<i64: 1, 256>}, {pipeline_mode = #tpu.pipeline_mode<synchronous>, transform_indices = @transform_2, window_bounds = array<i64: 1, 256>}, {transform_indices = @transform_3, window_bounds = array<i64: 16, 256>}]} {
    %c0 = arith.constant 0 : index
    %c0_0 = arith.constant 0 : index
    %0 = vector.load %arg1[%c0, %c0_0] : memref<16x256xf32, #tpu.memory_space<vmem>>, vector<16x256xf32>
    %c0_1 = arith.constant 0 : index
    %c0_2 = arith.constant 0 : index
    %1 = vector.load %arg2[%c0_1, %c0_2] : memref<1x256xf32, #tpu.memory_space<vmem>>, vector<1x256xf32>
    %2 = vector.broadcast %1 : vector<1x256xf32> to vector<16x256xf32>
    %3 = arith.mulf %0, %2 : vector<16x256xf32>
    %c0_3 = arith.constant 0 : index
    %c0_4 = arith.constant 0 : index
    %4 = vector.load %arg3[%c0_3, %c0_4] : memref<1x256xf32, #tpu.memory_space<vmem>>, vector<1x256xf32>
    %5 = vector.broadcast %4 : vector<1x256xf32> to vector<16x256xf32>
    %6 = arith.addf %3, %5 : vector<16x256xf32>
    %cst = arith.constant 0.000000e+00 : f32
    %7 = vector.broadcast %cst : f32 to vector<16x256xf32>
    %8 = arith.cmpf ogt, %6, %7 : vector<16x256xf32>
    %cst_5 = arith.constant 0.00999999977 : f32
    %9 = vector.broadcast %cst_5 : f32 to vector<16x256xf32>
    %10 = arith.mulf %9, %6 : vector<16x256xf32>
    %11 = arith.select %8, %6, %10 : vector<16x256xi1>, vector<16x256xf32>
    %c0_6 = arith.constant 0 : index
    %c0_7 = arith.constant 0 : index
    %12 = vector.load %arg4[%c0_6, %c0_7] : memref<16x256xf32, #tpu.memory_space<vmem>>, vector<16x256xf32>
    tpu.vector_store %arg4[%c0_6, %c0_7], %11 {strides = array<i32>} : memref<16x256xf32, #tpu.memory_space<vmem>>, vector<16x256xf32>,
    return
  }
  func.func @transform_0(%arg0: i32) -> (i32, i32) {
    %c0_i32 = arith.constant 0 : i32
    %c0_i32_0 = arith.constant 0 : i32
    return %arg0, %c0_i32 : i32, i32
  }
  func.func @transform_1(%arg0: i32) -> (i32, i32) {
    %c0_i32 = arith.constant 0 : i32
    %c0_i32_0 = arith.constant 0 : i32
    %c0_i32_1 = arith.constant 0 : i32
    return %c0_i32, %c0_i32_0 : i32, i32
  }
  func.func @transform_2(%arg0: i32) -> (i32, i32) {
    %c0_i32 = arith.constant 0 : i32
    %c0_i32_0 = arith.constant 0 : i32
    %c0_i32_1 = arith.constant 0 : i32
    return %c0_i32, %c0_i32_0 : i32, i32
  }
  func.func @transform_3(%arg0: i32) -> (i32, i32) {
    %c0_i32 = arith.constant 0 : i32
    %c0_i32_0 = arith.constant 0 : i32
    return %arg0, %c0_i32 : i32, i32
  }
}

module attributes {stable_mosaic.version = 11 : i64} {
  func.func @_matmul_kernel(%arg0: i32, %arg1: i32, %arg2: i32, %arg3: memref<128x32xf32, #tpu.memory_space<vmem>>, %arg4: memref<32x256xf32, #tpu.memory_space<vmem>>, %arg5: memref<128x256xf32, #tpu.memory_space<vmem>>, %arg6: memref<128x256xf32, #tpu.memory_space<vmem>>) attributes {dimension_semantics = [#tpu.dimension_semantics<parallel>, #tpu.dimension_semantics<parallel>, #tpu.dimension_semantics<arbitrary>], iteration_bounds = array<i64: 1, 1, 1>, scalar_prefetch = 0 : i64, scratch_operands = 1 : i64, tpu.core_type = #tpu.core_type<tc>, window_params = [{transform_indices = @transform_0, window_bounds = array<i64: 128, 32>}, {transform_indices = @transform_1, window_bounds = array<i64: 32, 256>}, {transform_indices = @transform_2, window_bounds = array<i64: 128, 256>}]} {
    %c0_i32 = arith.constant 0 : i32
    %0 = arith.cmpi eq, %arg2, %c0_i32 : i32
    %1 = arith.extui %0 : i1 to i32
    %c0_i32_0 = arith.constant 0 : i32
    %2 = arith.cmpi ne, %1, %c0_i32_0 : i32
    scf.if %2 {
      %cst_10 = arith.constant 0.000000e+00 : f32
      %12 = vector.broadcast %cst_10 : f32 to vector<128x256xf32>
      %c0_11 = arith.constant 0 : index
      %c0_12 = arith.constant 0 : index
      %13 = vector.load %arg6[%c0_11, %c0_12] : memref<128x256xf32, #tpu.memory_space<vmem>>, vector<128x256xf32>
      tpu.vector_store %arg6[%c0_11, %c0_12], %12 {strides = array<i32>} : memref<128x256xf32, #tpu.memory_space<vmem>>, vector<128x256xf32>,
    } else {
    }
    %c0 = arith.constant 0 : index
    %c0_1 = arith.constant 0 : index
    %3 = vector.load %arg6[%c0, %c0_1] : memref<128x256xf32, #tpu.memory_space<vmem>>, vector<128x256xf32>
    %c0_2 = arith.constant 0 : index
    %c0_3 = arith.constant 0 : index
    %4 = vector.load %arg3[%c0_2, %c0_3] : memref<128x32xf32, #tpu.memory_space<vmem>>, vector<128x32xf32>
    %c0_4 = arith.constant 0 : index
    %c0_5 = arith.constant 0 : index
    %5 = vector.load %arg4[%c0_4, %c0_5] : memref<32x256xf32, #tpu.memory_space<vmem>>, vector<32x256xf32>
    %cst = arith.constant dense<0.000000e+00> : vector<128x256xf32>
    %6 = tpu.matmul %4, %5, %cst {dimension_numbers = #tpu.dot_dimension_numbers<[1], [0], [0], [1], [0, 0, 1, 1], [], []>} : vector<128x32xf32>, vector<32x256xf32>, vector<128x256xf32> -> vector<128x256xf32>
    %7 = arith.addf %3, %6 : vector<128x256xf32>
    %c0_6 = arith.constant 0 : index
    %c0_7 = arith.constant 0 : index
    %8 = vector.load %arg6[%c0_6, %c0_7] : memref<128x256xf32, #tpu.memory_space<vmem>>, vector<128x256xf32>
    tpu.vector_store %arg6[%c0_6, %c0_7], %7 {strides = array<i32>} : memref<128x256xf32, #tpu.memory_space<vmem>>, vector<128x256xf32>,
    %c0_i32_8 = arith.constant 0 : i32
    %9 = arith.cmpi eq, %arg2, %c0_i32_8 : i32
    %10 = arith.extui %9 : i1 to i32
    %c0_i32_9 = arith.constant 0 : i32
    %11 = arith.cmpi ne, %10, %c0_i32_9 : i32
    scf.if %11 {
      %c0_10 = arith.constant 0 : index
      %c0_11 = arith.constant 0 : index
      %12 = vector.load %arg6[%c0_10, %c0_11] : memref<128x256xf32, #tpu.memory_space<vmem>>, vector<128x256xf32>
      %c0_12 = arith.constant 0 : index
      %c0_13 = arith.constant 0 : index
      %13 = vector.load %arg5[%c0_12, %c0_13] : memref<128x256xf32, #tpu.memory_space<vmem>>, vector<128x256xf32>
      tpu.vector_store %arg5[%c0_12, %c0_13], %12 {strides = array<i32>} : memref<128x256xf32, #tpu.memory_space<vmem>>, vector<128x256xf32>,
    } else {
    }
    return
  }
  func.func @transform_0(%arg0: i32, %arg1: i32, %arg2: i32) -> (i32, i32) {
    %c0_i32 = arith.constant 0 : i32
    return %arg0, %arg2 : i32, i32
  }
  func.func @transform_1(%arg0: i32, %arg1: i32, %arg2: i32) -> (i32, i32) {
    %c0_i32 = arith.constant 0 : i32
    return %arg2, %arg1 : i32, i32
  }
  func.func @transform_2(%arg0: i32, %arg1: i32, %arg2: i32) -> (i32, i32) {
    %c0_i32 = arith.constant 0 : i32
    return %arg0, %arg1 : i32, i32
  }
}

module attributes {stable_mosaic.version = 11 : i64} {
  func.func @_bn_stats_kernel(%arg0: i32, %arg1: memref<32x256xf32, #tpu.memory_space<vmem>>, %arg2: memref<1x256xf32, #tpu.memory_space<vmem>>, %arg3: memref<1x256xf32, #tpu.memory_space<vmem>>) attributes {dimension_semantics = [#tpu.dimension_semantics<arbitrary>], iteration_bounds = array<i64: 1>, scalar_prefetch = 0 : i64, scratch_operands = 0 : i64, tpu.core_type = #tpu.core_type<tc>, window_params = [{transform_indices = @transform_0, window_bounds = array<i64: 32, 256>}, {pipeline_mode = #tpu.pipeline_mode<synchronous>, transform_indices = @transform_1, window_bounds = array<i64: 1, 256>}, {pipeline_mode = #tpu.pipeline_mode<synchronous>, transform_indices = @transform_2, window_bounds = array<i64: 1, 256>}]} {
    %c0_i32 = arith.constant 0 : i32
    %0 = arith.cmpi eq, %arg0, %c0_i32 : i32
    %1 = arith.extui %0 : i1 to i32
    %c0_i32_0 = arith.constant 0 : i32
    %2 = arith.cmpi ne, %1, %c0_i32_0 : i32
    scf.if %2 {
      %cst_11 = arith.constant 0.000000e+00 : f32
      %15 = vector.broadcast %cst_11 : f32 to vector<1x256xf32>
      %c0_12 = arith.constant 0 : index
      %c0_13 = arith.constant 0 : index
      %16 = vector.load %arg2[%c0_12, %c0_13] : memref<1x256xf32, #tpu.memory_space<vmem>>, vector<1x256xf32>
      tpu.vector_store %arg2[%c0_12, %c0_13], %15 {strides = array<i32>} : memref<1x256xf32, #tpu.memory_space<vmem>>, vector<1x256xf32>,
      %cst_14 = arith.constant 0.000000e+00 : f32
      %17 = vector.broadcast %cst_14 : f32 to vector<1x256xf32>
      %c0_15 = arith.constant 0 : index
      %c0_16 = arith.constant 0 : index
      %18 = vector.load %arg3[%c0_15, %c0_16] : memref<1x256xf32, #tpu.memory_space<vmem>>, vector<1x256xf32>
      tpu.vector_store %arg3[%c0_15, %c0_16], %17 {strides = array<i32>} : memref<1x256xf32, #tpu.memory_space<vmem>>, vector<1x256xf32>,
    } else {
    }
    %c0 = arith.constant 0 : index
    %c0_1 = arith.constant 0 : index
    %3 = vector.load %arg1[%c0, %c0_1] : memref<32x256xf32, #tpu.memory_space<vmem>>, vector<32x256xf32>
    %c0_2 = arith.constant 0 : index
    %c0_3 = arith.constant 0 : index
    %4 = vector.load %arg2[%c0_2, %c0_3] : memref<1x256xf32, #tpu.memory_space<vmem>>, vector<1x256xf32>
    %cst = arith.constant dense<0.000000e+00> : vector<256xf32>
    %5 = vector.multi_reduction <add>, %3, %cst [0] : vector<32x256xf32> to vector<256xf32>
    %6 = vector.shape_cast %5 : vector<256xf32> to vector<1x256xf32>
    %7 = arith.addf %4, %6 : vector<1x256xf32>
    %c0_4 = arith.constant 0 : index
    %c0_5 = arith.constant 0 : index
    %8 = vector.load %arg2[%c0_4, %c0_5] : memref<1x256xf32, #tpu.memory_space<vmem>>, vector<1x256xf32>
    tpu.vector_store %arg2[%c0_4, %c0_5], %7 {strides = array<i32>} : memref<1x256xf32, #tpu.memory_space<vmem>>, vector<1x256xf32>,
    %c0_6 = arith.constant 0 : index
    %c0_7 = arith.constant 0 : index
    %9 = vector.load %arg3[%c0_6, %c0_7] : memref<1x256xf32, #tpu.memory_space<vmem>>, vector<1x256xf32>
    %10 = arith.mulf %3, %3 : vector<32x256xf32>
    %cst_8 = arith.constant dense<0.000000e+00> : vector<256xf32>
    %11 = vector.multi_reduction <add>, %10, %cst_8 [0] : vector<32x256xf32> to vector<256xf32>
    %12 = vector.shape_cast %11 : vector<256xf32> to vector<1x256xf32>
    %13 = arith.addf %9, %12 : vector<1x256xf32>
    %c0_9 = arith.constant 0 : index
    %c0_10 = arith.constant 0 : index
    %14 = vector.load %arg3[%c0_9, %c0_10] : memref<1x256xf32, #tpu.memory_space<vmem>>, vector<1x256xf32>
    tpu.vector_store %arg3[%c0_9, %c0_10], %13 {strides = array<i32>} : memref<1x256xf32, #tpu.memory_space<vmem>>, vector<1x256xf32>,
    return
  }
  func.func @transform_0(%arg0: i32) -> (i32, i32) {
    %c0_i32 = arith.constant 0 : i32
    %c0_i32_0 = arith.constant 0 : i32
    return %arg0, %c0_i32 : i32, i32
  }
  func.func @transform_1(%arg0: i32) -> (i32, i32) {
    %c0_i32 = arith.constant 0 : i32
    %c0_i32_0 = arith.constant 0 : i32
    %c0_i32_1 = arith.constant 0 : i32
    return %c0_i32, %c0_i32_0 : i32, i32
  }
  func.func @transform_2(%arg0: i32) -> (i32, i32) {
    %c0_i32 = arith.constant 0 : i32
    %c0_i32_0 = arith.constant 0 : i32
    %c0_i32_1 = arith.constant 0 : i32
    return %c0_i32, %c0_i32_0 : i32, i32
  }
}

module attributes {stable_mosaic.version = 11 : i64} {
  func.func @_scale_shift_lrelu_kernel(%arg0: i32, %arg1: memref<32x256xf32, #tpu.memory_space<vmem>>, %arg2: memref<1x256xf32, #tpu.memory_space<vmem>>, %arg3: memref<1x256xf32, #tpu.memory_space<vmem>>, %arg4: memref<32x256xf32, #tpu.memory_space<vmem>>) attributes {dimension_semantics = [#tpu.dimension_semantics<parallel>], iteration_bounds = array<i64: 1>, scalar_prefetch = 0 : i64, scratch_operands = 0 : i64, tpu.core_type = #tpu.core_type<tc>, window_params = [{transform_indices = @transform_0, window_bounds = array<i64: 32, 256>}, {pipeline_mode = #tpu.pipeline_mode<synchronous>, transform_indices = @transform_1, window_bounds = array<i64: 1, 256>}, {pipeline_mode = #tpu.pipeline_mode<synchronous>, transform_indices = @transform_2, window_bounds = array<i64: 1, 256>}, {transform_indices = @transform_3, window_bounds = array<i64: 32, 256>}]} {
    %c0 = arith.constant 0 : index
    %c0_0 = arith.constant 0 : index
    %0 = vector.load %arg1[%c0, %c0_0] : memref<32x256xf32, #tpu.memory_space<vmem>>, vector<32x256xf32>
    %c0_1 = arith.constant 0 : index
    %c0_2 = arith.constant 0 : index
    %1 = vector.load %arg2[%c0_1, %c0_2] : memref<1x256xf32, #tpu.memory_space<vmem>>, vector<1x256xf32>
    %2 = vector.broadcast %1 : vector<1x256xf32> to vector<32x256xf32>
    %3 = arith.mulf %0, %2 : vector<32x256xf32>
    %c0_3 = arith.constant 0 : index
    %c0_4 = arith.constant 0 : index
    %4 = vector.load %arg3[%c0_3, %c0_4] : memref<1x256xf32, #tpu.memory_space<vmem>>, vector<1x256xf32>
    %5 = vector.broadcast %4 : vector<1x256xf32> to vector<32x256xf32>
    %6 = arith.addf %3, %5 : vector<32x256xf32>
    %cst = arith.constant 0.000000e+00 : f32
    %7 = vector.broadcast %cst : f32 to vector<32x256xf32>
    %8 = arith.cmpf ogt, %6, %7 : vector<32x256xf32>
    %cst_5 = arith.constant 0.00999999977 : f32
    %9 = vector.broadcast %cst_5 : f32 to vector<32x256xf32>
    %10 = arith.mulf %9, %6 : vector<32x256xf32>
    %11 = arith.select %8, %6, %10 : vector<32x256xi1>, vector<32x256xf32>
    %c0_6 = arith.constant 0 : index
    %c0_7 = arith.constant 0 : index
    %12 = vector.load %arg4[%c0_6, %c0_7] : memref<32x256xf32, #tpu.memory_space<vmem>>, vector<32x256xf32>
    tpu.vector_store %arg4[%c0_6, %c0_7], %11 {strides = array<i32>} : memref<32x256xf32, #tpu.memory_space<vmem>>, vector<32x256xf32>,
    return
  }
  func.func @transform_0(%arg0: i32) -> (i32, i32) {
    %c0_i32 = arith.constant 0 : i32
    %c0_i32_0 = arith.constant 0 : i32
    return %arg0, %c0_i32 : i32, i32
  }
  func.func @transform_1(%arg0: i32) -> (i32, i32) {
    %c0_i32 = arith.constant 0 : i32
    %c0_i32_0 = arith.constant 0 : i32
    %c0_i32_1 = arith.constant 0 : i32
    return %c0_i32, %c0_i32_0 : i32, i32
  }
  func.func @transform_2(%arg0: i32) -> (i32, i32) {
    %c0_i32 = arith.constant 0 : i32
    %c0_i32_0 = arith.constant 0 : i32
    %c0_i32_1 = arith.constant 0 : i32
    return %c0_i32, %c0_i32_0 : i32, i32
  }
  func.func @transform_3(%arg0: i32) -> (i32, i32) {
    %c0_i32 = arith.constant 0 : i32
    %c0_i32_0 = arith.constant 0 : i32
    return %arg0, %c0_i32 : i32, i32
  }
}

module attributes {stable_mosaic.version = 11 : i64} {
  func.func @_matmul_kernel(%arg0: i32, %arg1: i32, %arg2: i32, %arg3: memref<512x16xf32, #tpu.memory_space<vmem>>, %arg4: memref<16x128xf32, #tpu.memory_space<vmem>>, %arg5: memref<512x128xf32, #tpu.memory_space<vmem>>, %arg6: memref<512x128xf32, #tpu.memory_space<vmem>>) attributes {dimension_semantics = [#tpu.dimension_semantics<parallel>, #tpu.dimension_semantics<parallel>, #tpu.dimension_semantics<arbitrary>], iteration_bounds = array<i64: 1, 1, 1>, scalar_prefetch = 0 : i64, scratch_operands = 1 : i64, tpu.core_type = #tpu.core_type<tc>, window_params = [{transform_indices = @transform_0, window_bounds = array<i64: 512, 16>}, {transform_indices = @transform_1, window_bounds = array<i64: 16, 128>}, {transform_indices = @transform_2, window_bounds = array<i64: 512, 128>}]} {
    %c0_i32 = arith.constant 0 : i32
    %0 = arith.cmpi eq, %arg2, %c0_i32 : i32
    %1 = arith.extui %0 : i1 to i32
    %c0_i32_0 = arith.constant 0 : i32
    %2 = arith.cmpi ne, %1, %c0_i32_0 : i32
    scf.if %2 {
      %cst_10 = arith.constant 0.000000e+00 : f32
      %12 = vector.broadcast %cst_10 : f32 to vector<512x128xf32>
      %c0_11 = arith.constant 0 : index
      %c0_12 = arith.constant 0 : index
      %13 = vector.load %arg6[%c0_11, %c0_12] : memref<512x128xf32, #tpu.memory_space<vmem>>, vector<512x128xf32>
      tpu.vector_store %arg6[%c0_11, %c0_12], %12 {strides = array<i32>} : memref<512x128xf32, #tpu.memory_space<vmem>>, vector<512x128xf32>,
    } else {
    }
    %c0 = arith.constant 0 : index
    %c0_1 = arith.constant 0 : index
    %3 = vector.load %arg6[%c0, %c0_1] : memref<512x128xf32, #tpu.memory_space<vmem>>, vector<512x128xf32>
    %c0_2 = arith.constant 0 : index
    %c0_3 = arith.constant 0 : index
    %4 = vector.load %arg3[%c0_2, %c0_3] : memref<512x16xf32, #tpu.memory_space<vmem>>, vector<512x16xf32>
    %c0_4 = arith.constant 0 : index
    %c0_5 = arith.constant 0 : index
    %5 = vector.load %arg4[%c0_4, %c0_5] : memref<16x128xf32, #tpu.memory_space<vmem>>, vector<16x128xf32>
    %cst = arith.constant dense<0.000000e+00> : vector<512x128xf32>
    %6 = tpu.matmul %4, %5, %cst {dimension_numbers = #tpu.dot_dimension_numbers<[1], [0], [0], [1], [0, 0, 1, 1], [], []>} : vector<512x16xf32>, vector<16x128xf32>, vector<512x128xf32> -> vector<512x128xf32>
    %7 = arith.addf %3, %6 : vector<512x128xf32>
    %c0_6 = arith.constant 0 : index
    %c0_7 = arith.constant 0 : index
    %8 = vector.load %arg6[%c0_6, %c0_7] : memref<512x128xf32, #tpu.memory_space<vmem>>, vector<512x128xf32>
    tpu.vector_store %arg6[%c0_6, %c0_7], %7 {strides = array<i32>} : memref<512x128xf32, #tpu.memory_space<vmem>>, vector<512x128xf32>,
    %c0_i32_8 = arith.constant 0 : i32
    %9 = arith.cmpi eq, %arg2, %c0_i32_8 : i32
    %10 = arith.extui %9 : i1 to i32
    %c0_i32_9 = arith.constant 0 : i32
    %11 = arith.cmpi ne, %10, %c0_i32_9 : i32
    scf.if %11 {
      %c0_10 = arith.constant 0 : index
      %c0_11 = arith.constant 0 : index
      %12 = vector.load %arg6[%c0_10, %c0_11] : memref<512x128xf32, #tpu.memory_space<vmem>>, vector<512x128xf32>
      %c0_12 = arith.constant 0 : index
      %c0_13 = arith.constant 0 : index
      %13 = vector.load %arg5[%c0_12, %c0_13] : memref<512x128xf32, #tpu.memory_space<vmem>>, vector<512x128xf32>
      tpu.vector_store %arg5[%c0_12, %c0_13], %12 {strides = array<i32>} : memref<512x128xf32, #tpu.memory_space<vmem>>, vector<512x128xf32>,
    } else {
    }
    return
  }
  func.func @transform_0(%arg0: i32, %arg1: i32, %arg2: i32) -> (i32, i32) {
    %c0_i32 = arith.constant 0 : i32
    return %arg0, %arg2 : i32, i32
  }
  func.func @transform_1(%arg0: i32, %arg1: i32, %arg2: i32) -> (i32, i32) {
    %c0_i32 = arith.constant 0 : i32
    return %arg2, %arg1 : i32, i32
  }
  func.func @transform_2(%arg0: i32, %arg1: i32, %arg2: i32) -> (i32, i32) {
    %c0_i32 = arith.constant 0 : i32
    return %arg0, %arg1 : i32, i32
  }
}

module attributes {stable_mosaic.version = 11 : i64} {
  func.func @_bn_stats_kernel(%arg0: i32, %arg1: memref<64x256xf32, #tpu.memory_space<vmem>>, %arg2: memref<1x256xf32, #tpu.memory_space<vmem>>, %arg3: memref<1x256xf32, #tpu.memory_space<vmem>>) attributes {dimension_semantics = [#tpu.dimension_semantics<arbitrary>], iteration_bounds = array<i64: 1>, scalar_prefetch = 0 : i64, scratch_operands = 0 : i64, tpu.core_type = #tpu.core_type<tc>, window_params = [{transform_indices = @transform_0, window_bounds = array<i64: 64, 256>}, {pipeline_mode = #tpu.pipeline_mode<synchronous>, transform_indices = @transform_1, window_bounds = array<i64: 1, 256>}, {pipeline_mode = #tpu.pipeline_mode<synchronous>, transform_indices = @transform_2, window_bounds = array<i64: 1, 256>}]} {
    %c0_i32 = arith.constant 0 : i32
    %0 = arith.cmpi eq, %arg0, %c0_i32 : i32
    %1 = arith.extui %0 : i1 to i32
    %c0_i32_0 = arith.constant 0 : i32
    %2 = arith.cmpi ne, %1, %c0_i32_0 : i32
    scf.if %2 {
      %cst_11 = arith.constant 0.000000e+00 : f32
      %15 = vector.broadcast %cst_11 : f32 to vector<1x256xf32>
      %c0_12 = arith.constant 0 : index
      %c0_13 = arith.constant 0 : index
      %16 = vector.load %arg2[%c0_12, %c0_13] : memref<1x256xf32, #tpu.memory_space<vmem>>, vector<1x256xf32>
      tpu.vector_store %arg2[%c0_12, %c0_13], %15 {strides = array<i32>} : memref<1x256xf32, #tpu.memory_space<vmem>>, vector<1x256xf32>,
      %cst_14 = arith.constant 0.000000e+00 : f32
      %17 = vector.broadcast %cst_14 : f32 to vector<1x256xf32>
      %c0_15 = arith.constant 0 : index
      %c0_16 = arith.constant 0 : index
      %18 = vector.load %arg3[%c0_15, %c0_16] : memref<1x256xf32, #tpu.memory_space<vmem>>, vector<1x256xf32>
      tpu.vector_store %arg3[%c0_15, %c0_16], %17 {strides = array<i32>} : memref<1x256xf32, #tpu.memory_space<vmem>>, vector<1x256xf32>,
    } else {
    }
    %c0 = arith.constant 0 : index
    %c0_1 = arith.constant 0 : index
    %3 = vector.load %arg1[%c0, %c0_1] : memref<64x256xf32, #tpu.memory_space<vmem>>, vector<64x256xf32>
    %c0_2 = arith.constant 0 : index
    %c0_3 = arith.constant 0 : index
    %4 = vector.load %arg2[%c0_2, %c0_3] : memref<1x256xf32, #tpu.memory_space<vmem>>, vector<1x256xf32>
    %cst = arith.constant dense<0.000000e+00> : vector<256xf32>
    %5 = vector.multi_reduction <add>, %3, %cst [0] : vector<64x256xf32> to vector<256xf32>
    %6 = vector.shape_cast %5 : vector<256xf32> to vector<1x256xf32>
    %7 = arith.addf %4, %6 : vector<1x256xf32>
    %c0_4 = arith.constant 0 : index
    %c0_5 = arith.constant 0 : index
    %8 = vector.load %arg2[%c0_4, %c0_5] : memref<1x256xf32, #tpu.memory_space<vmem>>, vector<1x256xf32>
    tpu.vector_store %arg2[%c0_4, %c0_5], %7 {strides = array<i32>} : memref<1x256xf32, #tpu.memory_space<vmem>>, vector<1x256xf32>,
    %c0_6 = arith.constant 0 : index
    %c0_7 = arith.constant 0 : index
    %9 = vector.load %arg3[%c0_6, %c0_7] : memref<1x256xf32, #tpu.memory_space<vmem>>, vector<1x256xf32>
    %10 = arith.mulf %3, %3 : vector<64x256xf32>
    %cst_8 = arith.constant dense<0.000000e+00> : vector<256xf32>
    %11 = vector.multi_reduction <add>, %10, %cst_8 [0] : vector<64x256xf32> to vector<256xf32>
    %12 = vector.shape_cast %11 : vector<256xf32> to vector<1x256xf32>
    %13 = arith.addf %9, %12 : vector<1x256xf32>
    %c0_9 = arith.constant 0 : index
    %c0_10 = arith.constant 0 : index
    %14 = vector.load %arg3[%c0_9, %c0_10] : memref<1x256xf32, #tpu.memory_space<vmem>>, vector<1x256xf32>
    tpu.vector_store %arg3[%c0_9, %c0_10], %13 {strides = array<i32>} : memref<1x256xf32, #tpu.memory_space<vmem>>, vector<1x256xf32>,
    return
  }
  func.func @transform_0(%arg0: i32) -> (i32, i32) {
    %c0_i32 = arith.constant 0 : i32
    %c0_i32_0 = arith.constant 0 : i32
    return %arg0, %c0_i32 : i32, i32
  }
  func.func @transform_1(%arg0: i32) -> (i32, i32) {
    %c0_i32 = arith.constant 0 : i32
    %c0_i32_0 = arith.constant 0 : i32
    %c0_i32_1 = arith.constant 0 : i32
    return %c0_i32, %c0_i32_0 : i32, i32
  }
  func.func @transform_2(%arg0: i32) -> (i32, i32) {
    %c0_i32 = arith.constant 0 : i32
    %c0_i32_0 = arith.constant 0 : i32
    %c0_i32_1 = arith.constant 0 : i32
    return %c0_i32, %c0_i32_0 : i32, i32
  }
}

module attributes {stable_mosaic.version = 11 : i64} {
  func.func @_scale_shift_lrelu_kernel(%arg0: i32, %arg1: memref<64x256xf32, #tpu.memory_space<vmem>>, %arg2: memref<1x256xf32, #tpu.memory_space<vmem>>, %arg3: memref<1x256xf32, #tpu.memory_space<vmem>>, %arg4: memref<64x256xf32, #tpu.memory_space<vmem>>) attributes {dimension_semantics = [#tpu.dimension_semantics<parallel>], iteration_bounds = array<i64: 1>, scalar_prefetch = 0 : i64, scratch_operands = 0 : i64, tpu.core_type = #tpu.core_type<tc>, window_params = [{transform_indices = @transform_0, window_bounds = array<i64: 64, 256>}, {pipeline_mode = #tpu.pipeline_mode<synchronous>, transform_indices = @transform_1, window_bounds = array<i64: 1, 256>}, {pipeline_mode = #tpu.pipeline_mode<synchronous>, transform_indices = @transform_2, window_bounds = array<i64: 1, 256>}, {transform_indices = @transform_3, window_bounds = array<i64: 64, 256>}]} {
    %c0 = arith.constant 0 : index
    %c0_0 = arith.constant 0 : index
    %0 = vector.load %arg1[%c0, %c0_0] : memref<64x256xf32, #tpu.memory_space<vmem>>, vector<64x256xf32>
    %c0_1 = arith.constant 0 : index
    %c0_2 = arith.constant 0 : index
    %1 = vector.load %arg2[%c0_1, %c0_2] : memref<1x256xf32, #tpu.memory_space<vmem>>, vector<1x256xf32>
    %2 = vector.broadcast %1 : vector<1x256xf32> to vector<64x256xf32>
    %3 = arith.mulf %0, %2 : vector<64x256xf32>
    %c0_3 = arith.constant 0 : index
    %c0_4 = arith.constant 0 : index
    %4 = vector.load %arg3[%c0_3, %c0_4] : memref<1x256xf32, #tpu.memory_space<vmem>>, vector<1x256xf32>
    %5 = vector.broadcast %4 : vector<1x256xf32> to vector<64x256xf32>
    %6 = arith.addf %3, %5 : vector<64x256xf32>
    %cst = arith.constant 0.000000e+00 : f32
    %7 = vector.broadcast %cst : f32 to vector<64x256xf32>
    %8 = arith.cmpf ogt, %6, %7 : vector<64x256xf32>
    %cst_5 = arith.constant 0.00999999977 : f32
    %9 = vector.broadcast %cst_5 : f32 to vector<64x256xf32>
    %10 = arith.mulf %9, %6 : vector<64x256xf32>
    %11 = arith.select %8, %6, %10 : vector<64x256xi1>, vector<64x256xf32>
    %c0_6 = arith.constant 0 : index
    %c0_7 = arith.constant 0 : index
    %12 = vector.load %arg4[%c0_6, %c0_7] : memref<64x256xf32, #tpu.memory_space<vmem>>, vector<64x256xf32>
    tpu.vector_store %arg4[%c0_6, %c0_7], %11 {strides = array<i32>} : memref<64x256xf32, #tpu.memory_space<vmem>>, vector<64x256xf32>,
    return
  }
  func.func @transform_0(%arg0: i32) -> (i32, i32) {
    %c0_i32 = arith.constant 0 : i32
    %c0_i32_0 = arith.constant 0 : i32
    return %arg0, %c0_i32 : i32, i32
  }
  func.func @transform_1(%arg0: i32) -> (i32, i32) {
    %c0_i32 = arith.constant 0 : i32
    %c0_i32_0 = arith.constant 0 : i32
    %c0_i32_1 = arith.constant 0 : i32
    return %c0_i32, %c0_i32_0 : i32, i32
  }
  func.func @transform_2(%arg0: i32) -> (i32, i32) {
    %c0_i32 = arith.constant 0 : i32
    %c0_i32_0 = arith.constant 0 : i32
    %c0_i32_1 = arith.constant 0 : i32
    return %c0_i32, %c0_i32_0 : i32, i32
  }
  func.func @transform_3(%arg0: i32) -> (i32, i32) {
    %c0_i32 = arith.constant 0 : i32
    %c0_i32_0 = arith.constant 0 : i32
    return %arg0, %c0_i32 : i32, i32
  }
}

module attributes {stable_mosaic.version = 11 : i64} {
  func.func @_matmul_kernel(%arg0: i32, %arg1: i32, %arg2: i32, %arg3: memref<512x8xf32, #tpu.memory_space<vmem>>, %arg4: memref<8x48xf32, #tpu.memory_space<vmem>>, %arg5: memref<512x48xf32, #tpu.memory_space<vmem>>, %arg6: memref<512x48xf32, #tpu.memory_space<vmem>>) attributes {dimension_semantics = [#tpu.dimension_semantics<parallel>, #tpu.dimension_semantics<parallel>, #tpu.dimension_semantics<arbitrary>], iteration_bounds = array<i64: 4, 1, 1>, scalar_prefetch = 0 : i64, scratch_operands = 1 : i64, tpu.core_type = #tpu.core_type<tc>, window_params = [{transform_indices = @transform_0, window_bounds = array<i64: 512, 8>}, {transform_indices = @transform_1, window_bounds = array<i64: 8, 48>}, {transform_indices = @transform_2, window_bounds = array<i64: 512, 48>}]} {
    %c0_i32 = arith.constant 0 : i32
    %0 = arith.cmpi eq, %arg2, %c0_i32 : i32
    %1 = arith.extui %0 : i1 to i32
    %c0_i32_0 = arith.constant 0 : i32
    %2 = arith.cmpi ne, %1, %c0_i32_0 : i32
    scf.if %2 {
      %cst_10 = arith.constant 0.000000e+00 : f32
      %12 = vector.broadcast %cst_10 : f32 to vector<512x48xf32>
      %c0_11 = arith.constant 0 : index
      %c0_12 = arith.constant 0 : index
      %13 = vector.load %arg6[%c0_11, %c0_12] : memref<512x48xf32, #tpu.memory_space<vmem>>, vector<512x48xf32>
      tpu.vector_store %arg6[%c0_11, %c0_12], %12 {strides = array<i32>} : memref<512x48xf32, #tpu.memory_space<vmem>>, vector<512x48xf32>,
    } else {
    }
    %c0 = arith.constant 0 : index
    %c0_1 = arith.constant 0 : index
    %3 = vector.load %arg6[%c0, %c0_1] : memref<512x48xf32, #tpu.memory_space<vmem>>, vector<512x48xf32>
    %c0_2 = arith.constant 0 : index
    %c0_3 = arith.constant 0 : index
    %4 = vector.load %arg3[%c0_2, %c0_3] : memref<512x8xf32, #tpu.memory_space<vmem>>, vector<512x8xf32>
    %c0_4 = arith.constant 0 : index
    %c0_5 = arith.constant 0 : index
    %5 = vector.load %arg4[%c0_4, %c0_5] : memref<8x48xf32, #tpu.memory_space<vmem>>, vector<8x48xf32>
    %cst = arith.constant dense<0.000000e+00> : vector<512x48xf32>
    %6 = tpu.matmul %4, %5, %cst {dimension_numbers = #tpu.dot_dimension_numbers<[1], [0], [0], [1], [0, 0, 1, 1], [], []>} : vector<512x8xf32>, vector<8x48xf32>, vector<512x48xf32> -> vector<512x48xf32>
    %7 = arith.addf %3, %6 : vector<512x48xf32>
    %c0_6 = arith.constant 0 : index
    %c0_7 = arith.constant 0 : index
    %8 = vector.load %arg6[%c0_6, %c0_7] : memref<512x48xf32, #tpu.memory_space<vmem>>, vector<512x48xf32>
    tpu.vector_store %arg6[%c0_6, %c0_7], %7 {strides = array<i32>} : memref<512x48xf32, #tpu.memory_space<vmem>>, vector<512x48xf32>,
    %c0_i32_8 = arith.constant 0 : i32
    %9 = arith.cmpi eq, %arg2, %c0_i32_8 : i32
    %10 = arith.extui %9 : i1 to i32
    %c0_i32_9 = arith.constant 0 : i32
    %11 = arith.cmpi ne, %10, %c0_i32_9 : i32
    scf.if %11 {
      %c0_10 = arith.constant 0 : index
      %c0_11 = arith.constant 0 : index
      %12 = vector.load %arg6[%c0_10, %c0_11] : memref<512x48xf32, #tpu.memory_space<vmem>>, vector<512x48xf32>
      %c0_12 = arith.constant 0 : index
      %c0_13 = arith.constant 0 : index
      %13 = vector.load %arg5[%c0_12, %c0_13] : memref<512x48xf32, #tpu.memory_space<vmem>>, vector<512x48xf32>
      tpu.vector_store %arg5[%c0_12, %c0_13], %12 {strides = array<i32>} : memref<512x48xf32, #tpu.memory_space<vmem>>, vector<512x48xf32>,
    } else {
    }
    return
  }
  func.func @transform_0(%arg0: i32, %arg1: i32, %arg2: i32) -> (i32, i32) {
    %c0_i32 = arith.constant 0 : i32
    return %arg0, %arg2 : i32, i32
  }
  func.func @transform_1(%arg0: i32, %arg1: i32, %arg2: i32) -> (i32, i32) {
    %c0_i32 = arith.constant 0 : i32
    return %arg2, %arg1 : i32, i32
  }
  func.func @transform_2(%arg0: i32, %arg1: i32, %arg2: i32) -> (i32, i32) {
    %c0_i32 = arith.constant 0 : i32
    return %arg0, %arg1 : i32, i32
  }
}

module attributes {stable_mosaic.version = 11 : i64} {
  func.func @_tanh_kernel(%arg0: i32, %arg1: memref<24x1024xf32, #tpu.memory_space<vmem>>, %arg2: memref<24x1024xf32, #tpu.memory_space<vmem>>) attributes {dimension_semantics = [#tpu.dimension_semantics<parallel>], iteration_bounds = array<i64: 1>, scalar_prefetch = 0 : i64, scratch_operands = 0 : i64, tpu.core_type = #tpu.core_type<tc>, window_params = [{transform_indices = @transform_0, window_bounds = array<i64: 24, 1024>}, {transform_indices = @transform_1, window_bounds = array<i64: 24, 1024>}]} {
    %c0 = arith.constant 0 : index
    %c0_0 = arith.constant 0 : index
    %0 = vector.load %arg1[%c0, %c0_0] : memref<24x1024xf32, #tpu.memory_space<vmem>>, vector<24x1024xf32>
    %1 = math.tanh %0 : vector<24x1024xf32>
    %c0_1 = arith.constant 0 : index
    %c0_2 = arith.constant 0 : index
    %2 = vector.load %arg2[%c0_1, %c0_2] : memref<24x1024xf32, #tpu.memory_space<vmem>>, vector<24x1024xf32>
    tpu.vector_store %arg2[%c0_1, %c0_2], %1 {strides = array<i32>} : memref<24x1024xf32, #tpu.memory_space<vmem>>, vector<24x1024xf32>,
    return
  }
  func.func @transform_0(%arg0: i32) -> (i32, i32) {
    %c0_i32 = arith.constant 0 : i32
    %c0_i32_0 = arith.constant 0 : i32
    return %arg0, %c0_i32 : i32, i32
  }
  func.func @transform_1(%arg0: i32) -> (i32, i32) {
    %c0_i32 = arith.constant 0 : i32
    %c0_i32_0 = arith.constant 0 : i32
    return %arg0, %c0_i32 : i32, i32
  }
}

</mosaic_0001>

<llo_original>
// kernel: tile.43
$region0: #{tile.43}
  #allocation0 [shape = 's32[1]{0}', space=sflag, size = 0x4, scoped, tag = 'scoped memory for tile.43']
  %s0 = inlined_call_operand.vmem [shape: f32[64], index: 0, kind: input, shape index: {}]
  %s1 = inlined_call_operand.vmem [shape: f32[4,64], index: 1, kind: output, shape index: {}]
  // Predicated region
  $region2: #{tile.43} parent=0 // pred_check
    _
  $region3: #{tile.43} parent=0 // pred_check_branch
    %3 = sbr.rel (0) target = $region5
  $region4: #{tile.43} parent=0 // pred_region
    _
  $region5: #{tile.43} parent=0 // pred_fallthru
    _
  %v4 = vld [vmem:[%s0] ss:$0 sm:$0xff]
  %5 = vst [vmem:[%s1] sm:$0xf] %v4

// kernel: tile.44
$region0: #{tile.44}
  %s0 = inlined_call_operand.vmem [shape: f32[4,64], index: 0, kind: input, shape index: {}]
  %s1 = inlined_call_operand.vmem [shape: f32[1,256], index: 1, kind: output, shape index: {}]
  $region1: #{tile.44} parent=0
    #allocation0 [shape = 'u8[8192]{0}', space=vmem, size = 0x2000, scoped, tag = 'scoped mem for output reshape']
    #allocation1 [shape = 'u8[4096]{0}', space=vmem, size = 0x1000, scoped, tag = 'scoped mem for input reshape']
    %s3 = sshllo.u32 0, 4
    %v4 = vld [vmem:[%s0] sm:%s3]
    %5 = vst [vmem:[#allocation1] sm:%s3] %v4
    %s6 = smov 3
    %v7 = vld [vmem:[#allocation1] ss:$2 sm:%s6]
    %vm8 = vcmask 523264
    %9 = vst.msk [vmem:[#allocation0] ss:$8 sm:$0x3] %vm8, %v7
    %s10 = scalar_lea.vmem [#allocation1], 1
    %s11 = smov 3
    %v12 = vld [vmem:[%s10] ss:$2 sm:%s11]
    %13 = vrot.lane.b32.xlu0 %v12, 64
    %v14 = vpop.permute.xlu0 %13
    %vm15 = vcmask 1048064
    %16 = vst.msk [vmem:[#allocation0] ss:$8 sm:$0x3] %vm15, %v14
    %s18 = sshllo.u32 0, 1
    %v20 = vld [vmem:[#allocation0] sm:%s18]
    %s21 = sshllo.u32 0, 1
    %22 = vst [vmem:[%s1] sm:%s21] %v20
    %s23 = scalar_lea.vmem [#allocation0], 8
    %v24 = vld [vmem:[%s23] sm:%s18]
    %s25 = sshllo.u32 0, 1
    %s26 = scalar_lea.vmem %s1, 1
    %27 = vst [vmem:[%s26] sm:%s25] %v24

// kernel: generator_forward.15
$region0: #{generator_forward.15}
  #allocation0 [shape = 'u32[]', space=smem, size = 0x4, offset = 0x4, fixed_abs, tag = 'smem constant byte address 0x4 - core index']
  #allocation1 [shape = 'u32[144,128]{1,0:T(1,128)}', space=vmem, size = 0x12000, scoped, tag = 'internal scratch']
  %s0 = inlined_call_operand.vmem [shape: f32[8,256], index: 0, kind: input, shape index: {}]
  %s1 = inlined_call_operand.vmem [shape: f32[1,256], index: 1, kind: output, shape index: {0}]
  %s2 = inlined_call_operand.vmem [shape: f32[1,256], index: 2, kind: output, shape index: {1}]
  %3 = xla_tuple %s1, %s2
  %s4 = sld [smem:[#allocation0]]
  $region26: #{generator_forward.15} parent=0
    _
  %s6 = ssub.s32 1, %s4
  %s7 = scalar_select 0, %s6, %s4
  // Predicated region
  $region2: #{generator_forward.15} parent=0 // pred_check
    _
  $region3: #{generator_forward.15} parent=0 // pred_check_branch
    %9 = sbr.rel (0) target = $region5
  $region4: #{generator_forward.15} parent=0 // pred_region
    _
  $region5: #{generator_forward.15} parent=0 // pred_fallthru
    _
  %p10 = scmp.eq.s32.totalorder 0, 0
  // Predicated region
  $region6: #{generator_forward.15} parent=0 // pred_check
    %p11 = pneg %p10
  $region7: #{generator_forward.15} parent=0 // pred_check_branch
    %13 = sbr.rel (%p11) target = $region9
  $region8: #{generator_forward.15} parent=0 // pred_region
    %v14 = vlaneseq
    %vm15 = vcmp.ge.s32.totalorder %v14, 0
    %vm16 = vcmp.lt.s32.totalorder %v14, 256
    %vm17 = vmand %vm15, %vm16
    %18 = vst.msk [vmem:[%s1] sm:$0x3] %vm17, 0.0
    %19 = vst.msk [vmem:[%s2] sm:$0x3] %vm17, 0.0
  $region9: #{generator_forward.15} parent=0 // pred_fallthru
    _
  %v20 = vld [vmem:[%s0] sm:$0xff]
  %v21 = vld [vmem:[%s0 + $0x8] sm:$0xff]
  %v22 = vld [vmem:[%s1] sm:$0x3]
  %v23 = vrot.slane %v20, 4
  %v24 = vadd.f32 %v20, %v23
  %v25 = vrot.slane %v24, 2
  %v26 = vadd.f32 %v24, %v25
  %v27 = vrot.slane %v26, 1
  %v28 = vadd.f32 %v26, %v27
  %v29 = vrot.slane %v21, 4
  %v30 = vadd.f32 %v21, %v29
  %v31 = vrot.slane %v30, 2
  %v32 = vadd.f32 %v30, %v31
  %v33 = vrot.slane %v32, 1
  %v34 = vadd.f32 %v32, %v33
  %v37 = vcombine.low %v28, %v34
  %v39 = vunpack.c.l.s4 1966171168
  %v40 = vunpack.c.0.s8 %v39
  %v41 = vlaneseq
  %v42 = vshrl.u32 %v41, 7
  %v43 = vsub.s32 %v40, %v42
  %v44 = vrot.slane %v37, %v43
  %v46 = vunpack.c.l.s4 1966171168
  %v47 = vunpack.c.0.s8 %v46
  %v48 = vlaneseq
  %v49 = vshrl.u32 %v48, 7
  %v50 = vsub.s32 %v47, %v49
  %v51 = vrot.slane %v44, %v50
  %v53 = vadd.f32 %v22, %v51
  %v54 = vlaneseq
  %vm55 = vcmp.ge.s32.totalorder %v54, 0
  %vm56 = vcmp.lt.s32.totalorder %v54, 256
  %vm57 = vmand %vm55, %vm56
  %58 = vst.msk [vmem:[%s1] sm:$0x3] %vm57, %v53
  %v59 = vld [vmem:[%s2] sm:$0x3]
  %v60 = vmul.f32 %v20, %v20
  %v61 = vmul.f32 %v21, %v21
  %v62 = vrot.slane %v60, 4
  %v63 = vadd.f32 %v60, %v62
  %v64 = vrot.slane %v63, 2
  %v65 = vadd.f32 %v63, %v64
  %v66 = vrot.slane %v65, 1
  %v67 = vadd.f32 %v65, %v66
  %v68 = vrot.slane %v61, 4
  %v69 = vadd.f32 %v61, %v68
  %v70 = vrot.slane %v69, 2
  %v71 = vadd.f32 %v69, %v70
  %v72 = vrot.slane %v71, 1
  %v73 = vadd.f32 %v71, %v72
  %v76 = vcombine.low %v67, %v73
  %v78 = vunpack.c.l.s4 1966171168
  %v79 = vunpack.c.0.s8 %v78
  %v80 = vlaneseq
  %v81 = vshrl.u32 %v80, 7
  %v82 = vsub.s32 %v79, %v81
  %v83 = vrot.slane %v76, %v82
  %v85 = vunpack.c.l.s4 1966171168
  %v86 = vunpack.c.0.s8 %v85
  %v87 = vlaneseq
  %v88 = vshrl.u32 %v87, 7
  %v89 = vsub.s32 %v86, %v88
  %v90 = vrot.slane %v83, %v89
  %v92 = vadd.f32 %v59, %v90
  %93 = vst.msk [vmem:[%s2] sm:$0x3] %vm57, %v92
  // Predicated region
  $region10: #{generator_forward.15} parent=0 // pred_check
    _
  $region11: #{generator_forward.15} parent=0 // pred_check_branch
    %95 = sbr.rel (0) target = $region13
  $region12: #{generator_forward.15} parent=0 // pred_region
    _
  $region13: #{generator_forward.15} parent=0 // pred_fallthru
    _
  // Predicated region
  $region14: #{generator_forward.15} parent=0 // pred_check
    _
  $region15: #{generator_forward.15} parent=0 // pred_check_branch
    %97 = sbr.rel (0) target = $region17
  $region16: #{generator_forward.15} parent=0 // pred_region
    _
  $region17: #{generator_forward.15} parent=0 // pred_fallthru
    _
  // Predicated region
  $region18: #{generator_forward.15} parent=0 // pred_check
    _
  $region19: #{generator_forward.15} parent=0 // pred_check_branch
    %99 = sbr.rel (0) target = $region21
  $region20: #{generator_forward.15} parent=0 // pred_region
    _
  $region21: #{generator_forward.15} parent=0 // pred_fallthru
    _
  // Predicated region
  $region22: #{generator_forward.15} parent=0 // pred_check
    _
  $region23: #{generator_forward.15} parent=0 // pred_check_branch
    %101 = sbr.rel (0) target = $region25
  $region24: #{generator_forward.15} parent=0 // pred_region
    _
  $region25: #{generator_forward.15} parent=0 // pred_fallthru
    _

// kernel: generator_forward.14
$region0: #{generator_forward.14}
  #allocation0 [shape = 'u32[]', space=smem, size = 0x4, offset = 0x4, fixed_abs, tag = 'smem constant byte address 0x4 - core index']
  #allocation1 [shape = 'u32[144,128]{1,0:T(1,128)}', space=vmem, size = 0x12000, scoped, tag = 'internal scratch']
  #allocation2 [shape = 'f32[2,512]{1,0:T(2,128)}', space=vmem, size = 0x1000, scoped, tag = 'scratch operand']
  %s0 = inlined_call_operand.vmem [shape: f32[2,16], index: 0, kind: input, shape index: {}]
  %s1 = inlined_call_operand.hbm [shape: f32[16,1024], index: 1, kind: input, shape index: {}]
  %s2 = inlined_call_operand.vmem [shape: f32[2,1024], index: 2, kind: output, shape index: {}]
  %s3 = sld [smem:[#allocation0]]
  $region53: #{generator_forward.14} parent=0
    _
  %s5 = ssub.s32 1, %s3
  %s6 = scalar_select 0, %s5, %s3
  $region1: #{generator_forward.14} parent=0
    #allocation3 [shape = 'u8[65536]{0}', space=vmem, size = 0x10000, scoped, tag = 'input window, operand 1']
    #allocation4 [shape = 's32[2]{0}', space=sflag, size = 0x8, scoped, tag = 'scoped memory for generator_forward.14']
    %7 = vsyncpa [#allocation4], 0
    %s8 = scalar_lea.sflag [#allocation4], 1
    %9 = vsyncpa %s8, 0
    loop: start=0, step=1, limit=4
    $region2: #{generator_forward.14} parent=1 // loop_pre_header
      _
    $region3: #{generator_forward.14} parent=1 // loop_header
      %s11 = sphi 0, %s15
      %p12 = scmp.ge.s32.totalorder %s11, 4
      %s18 = sphi 0, %s37
      %s19 = sphi 0, %s33
      %s20 = sphi 0, %s29
      %s21 = sphi 0, %s18
      %s22 = sphi 0, %s19
      %s23 = sphi 0, %s20
      %s24 = sphi 0, %s21
      %s25 = sphi 0, %s22
      %s26 = sphi 0, %s23
      %s42 = sphi 0, %s44
      %s45 = sphi 0, %s42
      %s46 = sphi 0, %s45
      %s62 = sphi 0, %s46
      %s70 = sphi 0, %s72
      %s73 = sphi 0, %s70
      %s74 = sphi 0, %s73
      %s90 = sphi 0, %s74
      %s98 = sphi 0, %s100
      %s101 = sphi 0, %s98
      %s102 = sphi 0, %s101
      %s118 = sphi 0, %s102
    $region4: #{generator_forward.14} parent=1 // loop_header_branch
      %14 = sbr.rel (%p12) target = $region8
    $region5: #{generator_forward.14} parent=1 // loop_body
      %s16 = ssub.s32 %s11, 1
      %s17 = ssub.s32 %s11, 2
      %s27 = sadd.s32 1, %s20
      %p28 = scmp.ge.s32.totalorder %s27, 1
      %s29 = scalar_select %p28, 0, %s27
      %s30 = sadd.s32 1, %s19
      %s31 = scalar_select %p28, %s30, %s19
      %p32 = scmp.ge.s32.totalorder %s31, 2
      %s33 = scalar_select %p32, 0, %s31
      %s34 = sadd.s32 1, %s18
      %s35 = scalar_select %p32, %s34, %s18
      %p36 = scmp.ge.s32.totalorder %s35, 1
      %s37 = scalar_select %p36, 0, %s35
      %s38 = ssub.s32 %s18, %s37
      %s39 = ssub.s32 %s20, %s29
      %s40 = sor.u32 %s38, %s39
      %p41 = scmp.eq.s32.totalorder %s40, 0
      %s43 = sadd.s32 %s42, 1
      %s44 = scalar_select %p41, %s42, %s43
      %p47 = pneg %p41
      %p48 = scmp.eq.s32.totalorder %s11, 1
      %p49 = por %p47, %p48
      %p50 = scmp.ne.s32.totalorder %s42, %s45
      %p51 = scmp.eq.s32.totalorder %s11, 0
      %p52 = por %p50, %p51
      %p53 = scmp.ne.s32.totalorder %s42, %s45
      %p54 = scmp.eq.s32.totalorder %s16, 1
      %p55 = por %p53, %p54
      %p56 = scmp.ne.s32.totalorder %s45, %s46
      %p57 = scmp.eq.s32.totalorder %s16, 0
      %p58 = por %p56, %p57
      %p59 = scmp.ne.s32.totalorder %s45, %s46
      %p60 = scmp.eq.s32.totalorder %s17, 1
      %p61 = por %p59, %p60
      %p63 = scmp.ne.s32.totalorder %s46, %s62
      %p64 = scmp.eq.s32.totalorder %s17, 0
      %p65 = por %p63, %p64
      %s66 = ssub.s32 %s20, %s29
      %s67 = ssub.s32 %s19, %s33
      %s68 = sor.u32 %s66, %s67
      %p69 = scmp.eq.s32.totalorder %s68, 0
      %s71 = sadd.s32 %s70, 1
      %s72 = scalar_select %p69, %s70, %s71
      %p75 = pneg %p69
      %p76 = scmp.eq.s32.totalorder %s11, 1
      %p77 = por %p75, %p76
      %p78 = scmp.ne.s32.totalorder %s70, %s73
      %p79 = scmp.eq.s32.totalorder %s11, 0
      %p80 = por %p78, %p79
      %p81 = scmp.ne.s32.totalorder %s70, %s73
      %p82 = scmp.eq.s32.totalorder %s16, 1
      %p83 = por %p81, %p82
      %p84 = scmp.ne.s32.totalorder %s73, %s74
      %p85 = scmp.eq.s32.totalorder %s16, 0
      %p86 = por %p84, %p85
      %p87 = scmp.ne.s32.totalorder %s73, %s74
      %p88 = scmp.eq.s32.totalorder %s17, 1
      %p89 = por %p87, %p88
      %p91 = scmp.ne.s32.totalorder %s74, %s90
      %p92 = scmp.eq.s32.totalorder %s17, 0
      %p93 = por %p91, %p92
      %s94 = ssub.s32 %s18, %s37
      %s95 = ssub.s32 %s19, %s33
      %s96 = sor.u32 %s94, %s95
      %p97 = scmp.eq.s32.totalorder %s96, 0
      %s99 = sadd.s32 %s98, 1
      %s100 = scalar_select %p97, %s98, %s99
      %p103 = pneg %p97
      %p104 = scmp.eq.s32.totalorder %s11, 1
      %p105 = por %p103, %p104
      %p106 = scmp.ne.s32.totalorder %s98, %s101
      %p107 = scmp.eq.s32.totalorder %s11, 0
      %p108 = por %p106, %p107
      %p109 = scmp.ne.s32.totalorder %s98, %s101
      %p110 = scmp.eq.s32.totalorder %s16, 1
      %p111 = por %p109, %p110
      %p112 = scmp.ne.s32.totalorder %s101, %s102
      %p113 = scmp.eq.s32.totalorder %s16, 0
      %p114 = por %p112, %p113
      %p115 = scmp.ne.s32.totalorder %s101, %s102
      %p116 = scmp.eq.s32.totalorder %s17, 1
      %p117 = por %p115, %p116
      %p119 = scmp.ne.s32.totalorder %s102, %s118
      %p120 = scmp.eq.s32.totalorder %s17, 0
      %p121 = por %p119, %p120
      %p122 = scmp.le.s32.totalorder 1, %s11
      %p123 = scmp.lt.s32.totalorder %s11, 3
      %p124 = pnand %p122, %p123
      %p125 = pneg %p124
      // Predicated region
      $region9: #{generator_forward.14} parent=5 // pred_check
        _
      $region10: #{generator_forward.14} parent=5 // pred_check_branch
        %127 = sbr.rel (%p124) target = $region12
      $region11: #{generator_forward.14} parent=5 // pred_region
        %s128 = ssub.s32 %s11, 1
        // Predicated region
        $region13: #{generator_forward.14} parent=11 // pred_check
          %p129 = pneg %p58
        $region14: #{generator_forward.14} parent=11 // pred_check_branch
          %131 = sbr.rel (%p129) target = $region16
        $region15: #{generator_forward.14} parent=11 // pred_region
          %p132 = scmp.lt.s32.totalorder %s21, 0
          %s133 = scalar_select %p132, %s21, 0
          %p134 = scmp.lt.s32.totalorder %s23, 0
          %s135 = scalar_select %p134, %s23, 0
          %s136 = sadd.s32 %s135, %s133
          %s137 = smul.addr %s136, 2
          %s138 = scalar_lea.vmem %s0, %s137
        $region16: #{generator_forward.14} parent=11 // pred_fallthru
          _
      $region12: #{generator_forward.14} parent=5 // pred_fallthru
        _
      %p139 = scmp.lt.s32.totalorder %s11, 2
      // Predicated region
      $region17: #{generator_forward.14} parent=5 // pred_check
        %p140 = pneg %p139
      $region18: #{generator_forward.14} parent=5 // pred_check_branch
        %142 = sbr.rel (%p140) target = $region20
      $region19: #{generator_forward.14} parent=5 // pred_region
        // Predicated region
        $region21: #{generator_forward.14} parent=19 // pred_check
          %p143 = pneg %p80
        $region22: #{generator_forward.14} parent=19 // pred_check_branch
          %145 = sbr.rel (%p143) target = $region24
        $region23: #{generator_forward.14} parent=19 // pred_region
          %s146 = sand.u32 %s70, 1
          %s147 = scalar_lea.sflag [#allocation4], %s146
          %s148 = sand.u32 %s70, 1
          %s149 = smul.addr %s148, 64
          %s150 = scalar_lea.vmem [#allocation3], %s149
          %s151 = smul.u32 2, %s20
          %s152 = smul.u32 4, %s19
          %s154 = ssub.s32 1024, 1024
          %155 = vsyncadd %s147, %s154
          %s156 = smul.addr %s151, 8
          %s157 = sadd.s32 %s152, %s156
          %s158 = smul.addr %s157, 128
          %s159 = scalar_lea.hbm %s1, %s158
          %s160 = sshll.u32 %s150, 4
          %s161 = int_to_ptr.vmem [resolvable:$true] %s160
          %166 = dma.hbm_to_vmem [thread:$0]  %s159, 1024, %s161, %s147, 1024, 512, 32
        $region24: #{generator_forward.14} parent=19 // pred_fallthru
          _
      $region20: #{generator_forward.14} parent=5 // pred_fallthru
        _
      %p167 = scmp.le.s32.totalorder 1, %s11
      %p168 = scmp.lt.s32.totalorder %s11, 3
      %p169 = pnand %p167, %p168
      %p170 = pneg %p169
      // Predicated region
      $region25: #{generator_forward.14} parent=5 // pred_check
        _
      $region26: #{generator_forward.14} parent=5 // pred_check_branch
        %172 = sbr.rel (%p169) target = $region28
      $region27: #{generator_forward.14} parent=5 // pred_region
        %s173 = ssub.s32 %s11, 1
        %s174 = sand.u32 %s73, 1
        %s175 = scalar_lea.sflag [#allocation4], %s174
        %s176 = sand.u32 %s73, 1
        %s177 = smul.addr %s176, 64
        %s178 = scalar_lea.vmem [#allocation3], %s177
        // Predicated region
        $region29: #{generator_forward.14} parent=27 // pred_check
          %p179 = pneg %p86
        $region30: #{generator_forward.14} parent=27 // pred_check_branch
          %181 = sbr.rel (%p179) target = $region32
        $region31: #{generator_forward.14} parent=27 // pred_region
          %182 = dma.done %s175, 1024
        $region32: #{generator_forward.14} parent=27 // pred_fallthru
          _
        %p183 = scmp.lt.s32.totalorder %s21, 0
        %s184 = scalar_select %p183, %s21, 0
        %p185 = scmp.lt.s32.totalorder %s23, 0
        %s186 = scalar_select %p185, %s23, 0
        %s187 = sadd.s32 %s186, %s184
        %s188 = smul.addr %s187, 2
        %s189 = scalar_lea.vmem %s0, %s188
        %p190 = pneg %p58
        %p191 = pneg %p55
        %s192 = sand.u32 %s73, 1
        %s193 = scalar_lea.sflag [#allocation4], %s192
        %s194 = sand.u32 %s73, 1
        %s195 = smul.addr %s194, 64
        %s196 = scalar_lea.vmem [#allocation3], %s195
        %p197 = pneg %p86
        %p198 = pneg %p83
        %p199 = pneg %p114
        %p200 = pneg %p111
        %s201 = smul.u32 4, %s22
        %p202 = scmp.lt.s32.totalorder %s21, 0
        %s203 = scalar_select %p202, %s21, 0
        %p204 = scmp.lt.s32.totalorder %s201, 7
        %s205 = scalar_select %p204, %s201, 7
        %s206 = smul.addr %s203, 8
        %s207 = sadd.s32 %s205, %s206
        %s208 = smul.addr %s207, 2
        %s209 = scalar_lea.vmem %s2, %s208
        %p210 = scmp.lt.s32.totalorder %s21, 0
        %s211 = scalar_select %p210, %s21, 0
        %p212 = scmp.lt.s32.totalorder %s23, 0
        %s213 = scalar_select %p212, %s23, 0
        %s214 = sadd.s32 %s213, %s211
        %s215 = smul.addr %s214, 2
        %s216 = scalar_lea.vmem %s0, %s215
        %s217 = smul.u32 2, %s23
        %s218 = smul.u32 4, %s22
        %s219 = smul.u32 4, %s22
        %p220 = scmp.lt.s32.totalorder %s21, 0
        %s221 = scalar_select %p220, %s21, 0
        %p222 = scmp.lt.s32.totalorder %s219, 7
        %s223 = scalar_select %p222, %s219, 7
        %s224 = smul.addr %s221, 8
        %s225 = sadd.s32 %s223, %s224
        %s226 = smul.addr %s225, 2
        %s227 = scalar_lea.vmem %s2, %s226
        %s228 = smul.u32 4, %s22
        %p229 = scmp.eq.s32.totalorder %s23, 0
        // Predicated region
        $region33: #{generator_forward.14} parent=27 // pred_check
          %p230 = pneg %p229
        $region34: #{generator_forward.14} parent=27 // pred_check_branch
          %232 = sbr.rel (%p230) target = $region36
        $region35: #{generator_forward.14} parent=27 // pred_region
          %233 = vst [vmem:[#allocation2] sm:$0xff] 0.0
        $region36: #{generator_forward.14} parent=27 // pred_fallthru
          _
        %v234 = vld [vmem:[#allocation2] sm:$0xff]
        %v235 = vld [vmem:[%s216] sm:$0x3]
        %v236 = vld [vmem:[%s178] sm:$0xff]
        %v237 = vld [vmem:[%s178 + $0x8] sm:$0xff]
        %v238 = vld [vmem:[%s178 + $0x10] sm:$0xff]
        %v239 = vld [vmem:[%s178 + $0x18] sm:$0xff]
        %v240 = vld [vmem:[%s178 + $0x20] sm:$0xff]
        %v241 = vld [vmem:[%s178 + $0x28] sm:$0xff]
        %v242 = vld [vmem:[%s178 + $0x30] sm:$0xff]
        %v243 = vld [vmem:[%s178 + $0x38] sm:$0xff]
        %vm244 = vcmask 130048
        %v246 = vsel %vm244, %v235, 0
        %248 = vmatprep.subr.mxu0 %v237
        %249 = vmatpush1.msra.mxu0 %v236
        %250 = vmatprep.subr.mxu0 %v241
        %251 = vmatpush1.msra.mxu0 %v240
        %252 = vmatprep.subr.mxu0 0.0
        %253 = vmatpush1.msra.mxu0 0.0
        %254 = vmatprep.subr.mxu0 0.0
        %255 = vmatpush1.msra.mxu0 0.0
        %256 = vmatprep.subr.mxu0 0.0
        %257 = vmatpush1.msra.mxu0 0.0
        %258 = vmatprep.subr.mxu0 0.0
        %259 = vmatpush1.msra.mxu0 0.0
        %260 = vmatprep.subr.mxu0 0.0
        %261 = vmatpush1.msra.mxu0 0.0
        %262 = vmatprep.subr.mxu0 0.0
        %263 = vmatpush1.msra.mxu0 0.0
        %264 = vmatprep.subr.mxu0 0.0
        %265 = vmatpush1.msra.mxu0 0.0
        %266 = vmatprep.subr.mxu0 0.0
        %267 = vmatpush1.msra.mxu0 0.0
        %268 = vmatprep.subr.mxu0 0.0
        %269 = vmatpush1.msra.mxu0 0.0
        %270 = vmatprep.subr.mxu0 0.0
        %271 = vmatpush1.msra.mxu0 0.0
        %272 = vmatprep.subr.mxu0 0.0
        %273 = vmatpush1.msra.mxu0 0.0
        %274 = vmatprep.subr.mxu0 0.0
        %275 = vmatpush1.msra.mxu0 0.0
        %276 = vmatprep.subr.mxu0 0.0
        %277 = vmatpush1.msra.mxu0 0.0
        %278 = vmatprep.subr.mxu0 0.0
        %279 = vmatpush1.msra.mxu0 0.0
        %280 = vmatprep.subr.mxu0 0.0
        %281 = vmatpush1.msra.mxu0 0.0
        %282 = vmatprep.subr.mxu0 0.0
        %283 = vmatpush1.msra.mxu0 0.0
        %284 = vmatprep.subr.mxu0 0.0
        %285 = vmatpush1.msra.mxu0 0.0
        %286 = vmatprep.subr.mxu0 0.0
        %287 = vmatpush1.msra.mxu0 0.0
        %288 = vmatprep.subr.mxu0 0.0
        %289 = vmatpush1.msra.mxu0 0.0
        %290 = vmatprep.subr.mxu0 0.0
        %291 = vmatpush1.msra.mxu0 0.0
        %292 = vmatprep.subr.mxu0 0.0
        %293 = vmatpush1.msra.mxu0 0.0
        %294 = vmatprep.subr.mxu0 0.0
        %295 = vmatpush1.msra.mxu0 0.0
        %296 = vmatprep.subr.mxu0 0.0
        %297 = vmatpush1.msra.mxu0 0.0
        %298 = vmatprep.subr.mxu0 0.0
        %299 = vmatpush1.msra.mxu0 0.0
        %300 = vmatprep.subr.mxu0 0.0
        %301 = vmatpush1.msra.mxu0 0.0
        %302 = vmatprep.subr.mxu0 0.0
        %303 = vmatpush1.msra.mxu0 0.0
        %304 = vmatprep.subr.mxu0 0.0
        %305 = vmatpush1.msra.mxu0 0.0
        %306 = vmatprep.subr.mxu0 0.0
        %307 = vmatpush1.msra.mxu0 0.0
        %308 = vmatprep.subr.mxu0 0.0
        %309 = vmatpush1.msra.mxu0 0.0
        %310 = vmatprep.subr.mxu0 0.0
        %311 = vmatpush1.msra.mxu0 0.0
        %312 = vmatprep.mubr.f32.mxu0 0.0
        %313 = vmatmul.mubr.f32.gmra.mrb[0].mxu0 %v246
        %v314 = vpop.f32.mrb[0].mxu0
        %v315 = vadd.f32 0.0, %v314
        %v316 = vpop.f32.mrb[0].mxu0
        %v317 = vadd.f32 0.0, %v316
        %318 = vdwg.mxu0
        %319 = vmatprep.subr.mxu0 %v239
        %320 = vmatpush1.msra.mxu0 %v238
        %321 = vmatprep.subr.mxu0 %v243
        %322 = vmatpush1.msra.mxu0 %v242
        %323 = vmatprep.subr.mxu0 0.0
        %324 = vmatpush1.msra.mxu0 0.0
        %325 = vmatprep.subr.mxu0 0.0
        %326 = vmatpush1.msra.mxu0 0.0
        %327 = vmatprep.subr.mxu0 0.0
        %328 = vmatpush1.msra.mxu0 0.0
        %329 = vmatprep.subr.mxu0 0.0
        %330 = vmatpush1.msra.mxu0 0.0
        %331 = vmatprep.subr.mxu0 0.0
        %332 = vmatpush1.msra.mxu0 0.0
        %333 = vmatprep.subr.mxu0 0.0
        %334 = vmatpush1.msra.mxu0 0.0
        %335 = vmatprep.subr.mxu0 0.0
        %336 = vmatpush1.msra.mxu0 0.0
        %337 = vmatprep.subr.mxu0 0.0
        %338 = vmatpush1.msra.mxu0 0.0
        %339 = vmatprep.subr.mxu0 0.0
        %340 = vmatpush1.msra.mxu0 0.0
        %341 = vmatprep.subr.mxu0 0.0
        %342 = vmatpush1.msra.mxu0 0.0
        %343 = vmatprep.subr.mxu0 0.0
        %344 = vmatpush1.msra.mxu0 0.0
        %345 = vmatprep.subr.mxu0 0.0
        %346 = vmatpush1.msra.mxu0 0.0
        %347 = vmatprep.subr.mxu0 0.0
        %348 = vmatpush1.msra.mxu0 0.0
        %349 = vmatprep.subr.mxu0 0.0
        %350 = vmatpush1.msra.mxu0 0.0
        %351 = vmatprep.subr.mxu0 0.0
        %352 = vmatpush1.msra.mxu0 0.0
        %353 = vmatprep.subr.mxu0 0.0
        %354 = vmatpush1.msra.mxu0 0.0
        %355 = vmatprep.subr.mxu0 0.0
        %356 = vmatpush1.msra.mxu0 0.0
        %357 = vmatprep.subr.mxu0 0.0
        %358 = vmatpush1.msra.mxu0 0.0
        %359 = vmatprep.subr.mxu0 0.0
        %360 = vmatpush1.msra.mxu0 0.0
        %361 = vmatprep.subr.mxu0 0.0
        %362 = vmatpush1.msra.mxu0 0.0
        %363 = vmatprep.subr.mxu0 0.0
        %364 = vmatpush1.msra.mxu0 0.0
        %365 = vmatprep.subr.mxu0 0.0
        %366 = vmatpush1.msra.mxu0 0.0
        %367 = vmatprep.subr.mxu0 0.0
        %368 = vmatpush1.msra.mxu0 0.0
        %369 = vmatprep.subr.mxu0 0.0
        %370 = vmatpush1.msra.mxu0 0.0
        %371 = vmatprep.subr.mxu0 0.0
        %372 = vmatpush1.msra.mxu0 0.0
        %373 = vmatprep.subr.mxu0 0.0
        %374 = vmatpush1.msra.mxu0 0.0
        %375 = vmatprep.subr.mxu0 0.0
        %376 = vmatpush1.msra.mxu0 0.0
        %377 = vmatprep.subr.mxu0 0.0
        %378 = vmatpush1.msra.mxu0 0.0
        %379 = vmatprep.subr.mxu0 0.0
        %380 = vmatpush1.msra.mxu0 0.0
        %381 = vmatprep.subr.mxu0 0.0
        %382 = vmatpush1.msra.mxu0 0.0
        %383 = vmatprep.mubr.f32.mxu0 0.0
        %384 = vmatmul.mubr.f32.gmra.mrb[0].mxu0 %v246
        %v385 = vpop.f32.mrb[0].mxu0
        %v386 = vadd.f32 0.0, %v385
        %v387 = vpop.f32.mrb[0].mxu0
        %v388 = vadd.f32 0.0, %v387
        %389 = vdwg.mxu0
        %v394 = vcombine.low %v315, %v317
        %v395 = vcombine.low %v386, %v388
        %v397 = vunpack.c.l.s4 1983009808
        %v398 = vunpack.c.0.s8 %v397
        %v399 = vlaneseq
        %v400 = vshrl.u32 %v399, 7
        %v401 = vsub.s32 %v398, %v400
        %v402 = vrot.slane %v394, %v401
        %v404 = vunpack.c.l.s4 1983009808
        %v405 = vunpack.c.0.s8 %v404
        %v406 = vlaneseq
        %v407 = vshrl.u32 %v406, 7
        %v408 = vsub.s32 %v405, %v407
        %v409 = vrot.slane %v395, %v408
        %v410 = vcombine.low %v402, %v409
        %v412 = vadd.f32 %v234, %v410
        %413 = vst [vmem:[#allocation2] sm:$0xff] %v412
        // Predicated region
        $region37: #{generator_forward.14} parent=27 // pred_check
          %p414 = pneg %p229
        $region38: #{generator_forward.14} parent=27 // pred_check_branch
          %416 = sbr.rel (%p414) target = $region40
        $region39: #{generator_forward.14} parent=27 // pred_region
          %v417 = vld [vmem:[#allocation2] sm:$0xff]
          %418 = vst [vmem:[%s227] sm:$0xff] %v417
        $region40: #{generator_forward.14} parent=27 // pred_fallthru
          _
        %s419 = smul.u32 4, %s22
        %p420 = scmp.lt.s32.totalorder %s21, 0
        %s421 = scalar_select %p420, %s21, 0
        %p422 = scmp.lt.s32.totalorder %s419, 7
        %s423 = scalar_select %p422, %s419, 7
        %s424 = smul.addr %s421, 8
        %s425 = sadd.s32 %s423, %s424
        %s426 = smul.addr %s425, 2
        %s427 = scalar_lea.vmem %s2, %s426
        // Predicated region
        $region41: #{generator_forward.14} parent=27 // pred_check
          %p428 = pneg %p111
        $region42: #{generator_forward.14} parent=27 // pred_check_branch
          %430 = sbr.rel (%p428) target = $region44
        $region43: #{generator_forward.14} parent=27 // pred_region
          %s431 = smul.u32 4, %s22
        $region44: #{generator_forward.14} parent=27 // pred_fallthru
          _
      $region28: #{generator_forward.14} parent=5 // pred_fallthru
        _
      %p432 = scmp.le.s32.totalorder 2, %s11
      // Predicated region
      $region45: #{generator_forward.14} parent=5 // pred_check
        %p433 = pneg %p432
      $region46: #{generator_forward.14} parent=5 // pred_check_branch
        %435 = sbr.rel (%p433) target = $region48
      $region47: #{generator_forward.14} parent=5 // pred_region
        %s436 = ssub.s32 %s11, 2
        // Predicated region
        $region49: #{generator_forward.14} parent=47 // pred_check
          %p437 = pneg %p117
        $region50: #{generator_forward.14} parent=47 // pred_check_branch
          %439 = sbr.rel (%p437) target = $region52
        $region51: #{generator_forward.14} parent=47 // pred_region
          %s440 = smul.u32 4, %s25
          %p441 = scmp.lt.s32.totalorder %s24, 0
          %s442 = scalar_select %p441, %s24, 0
          %p443 = scmp.lt.s32.totalorder %s440, 7
          %s444 = scalar_select %p443, %s440, 7
          %s445 = smul.addr %s442, 8
          %s446 = sadd.s32 %s444, %s445
          %s447 = smul.addr %s446, 2
          %s448 = scalar_lea.vmem %s2, %s447
        $region52: #{generator_forward.14} parent=47 // pred_fallthru
          _
      $region48: #{generator_forward.14} parent=5 // pred_fallthru
        _
    $region6: #{generator_forward.14} parent=1 // loop_footer
      %s15 = sadd.s32 1, %s11
    $region7: #{generator_forward.14} parent=1 // loop_footer_branch
      %10 = sbr.rel target = $region3
    $region8: #{generator_forward.14} parent=1 // loop_exit
      _
    %449 = vsyncpa [#allocation4], 1
    %s450 = scalar_lea.sflag [#allocation4], 1
    %451 = vsyncpa %s450, 1

// kernel: generator_forward.16
$region0: #{generator_forward.16}
  #allocation0 [shape = 'u32[]', space=smem, size = 0x4, offset = 0x4, fixed_abs, tag = 'smem constant byte address 0x4 - core index']
  #allocation1 [shape = 'u32[144,128]{1,0:T(1,128)}', space=vmem, size = 0x12000, scoped, tag = 'internal scratch']
  %s0 = inlined_call_operand.vmem [shape: f32[8,256], index: 0, kind: input, shape index: {}]
  %s1 = inlined_call_operand.vmem [shape: f32[1,256], index: 1, kind: input, shape index: {}]
  %s2 = inlined_call_operand.vmem [shape: f32[1,256], index: 2, kind: input, shape index: {}]
  %s3 = inlined_call_operand.vmem [shape: f32[8,256], index: 3, kind: output, shape index: {}]
  %s4 = sld [smem:[#allocation0]]
  $region22: #{generator_forward.16} parent=0
    _
  %s6 = ssub.s32 1, %s4
  %s7 = scalar_select 0, %s6, %s4
  // Predicated region
  $region2: #{generator_forward.16} parent=0 // pred_check
    _
  $region3: #{generator_forward.16} parent=0 // pred_check_branch
    %9 = sbr.rel (0) target = $region5
  $region4: #{generator_forward.16} parent=0 // pred_region
    _
  $region5: #{generator_forward.16} parent=0 // pred_fallthru
    _
  // Predicated region
  $region6: #{generator_forward.16} parent=0 // pred_check
    _
  $region7: #{generator_forward.16} parent=0 // pred_check_branch
    %11 = sbr.rel (0) target = $region9
  $region8: #{generator_forward.16} parent=0 // pred_region
    _
  $region9: #{generator_forward.16} parent=0 // pred_fallthru
    _
  // Predicated region
  $region10: #{generator_forward.16} parent=0 // pred_check
    _
  $region11: #{generator_forward.16} parent=0 // pred_check_branch
    %13 = sbr.rel (0) target = $region13
  $region12: #{generator_forward.16} parent=0 // pred_region
    _
  $region13: #{generator_forward.16} parent=0 // pred_fallthru
    _
  %v14 = vld [vmem:[%s0] sm:$0xff]
  %v15 = vld [vmem:[%s0 + $0x8] sm:$0xff]
  %v16 = vld [vmem:[%s1] sm:$0x3]
  %v18 = vlaneseq
  %v19 = vshrl.u32 %v18, 7
  %v20 = vsub.s32 0, %v19
  %v21 = vrot.slane %v16, %v20
  %v22 = vlaneseq
  %v23 = vshrl.u32 %v22, 7
  %v24 = vsub.s32 1, %v23
  %v25 = vrot.slane %v16, %v24
  %v28 = vmul.f32 %v14, %v21
  %v29 = vmul.f32 %v15, %v25
  %v30 = vld [vmem:[%s2] sm:$0x3]
  %v32 = vlaneseq
  %v33 = vshrl.u32 %v32, 7
  %v34 = vsub.s32 0, %v33
  %v35 = vrot.slane %v30, %v34
  %v36 = vlaneseq
  %v37 = vshrl.u32 %v36, 7
  %v38 = vsub.s32 1, %v37
  %v39 = vrot.slane %v30, %v38
  %v42 = vadd.f32 %v28, %v35
  %v43 = vadd.f32 %v29, %v39
  %vm44 = vcmp.gt.f32.partialorder %v42, 0.0
  %vm45 = vcmp.gt.f32.partialorder %v43, 0.0
  %v46 = vmul.f32 %v42, 0.01
  %v47 = vmul.f32 %v43, 0.01
  %v48 = vsel %vm44, %v42, %v46
  %v49 = vsel %vm45, %v43, %v47
  %50 = vst [vmem:[%s3] sm:$0xff] %v48
  %51 = vst [vmem:[%s3 + $0x8] sm:$0xff] %v49
  // Predicated region
  $region14: #{generator_forward.16} parent=0 // pred_check
    _
  $region15: #{generator_forward.16} parent=0 // pred_check_branch
    %53 = sbr.rel (0) target = $region17
  $region16: #{generator_forward.16} parent=0 // pred_region
    _
  $region17: #{generator_forward.16} parent=0 // pred_fallthru
    _
  // Predicated region
  $region18: #{generator_forward.16} parent=0 // pred_check
    _
  $region19: #{generator_forward.16} parent=0 // pred_check_branch
    %55 = sbr.rel (0) target = $region21
  $region20: #{generator_forward.16} parent=0 // pred_region
    _
  $region21: #{generator_forward.16} parent=0 // pred_fallthru
    _

// kernel: generator_forward.17
$region0: #{generator_forward.17}
  #allocation0 [shape = 'u32[]', space=smem, size = 0x4, offset = 0x4, fixed_abs, tag = 'smem constant byte address 0x4 - core index']
  #allocation1 [shape = 'u32[144,128]{1,0:T(1,128)}', space=vmem, size = 0x12000, scoped, tag = 'internal scratch']
  #allocation2 [shape = 'f32[32,512]{1,0:T(8,128)}', space=vmem, size = 0x10000, scoped, tag = 'scratch operand']
  %s0 = inlined_call_operand.vmem [shape: f32[32,64], index: 0, kind: input, shape index: {}]
  %s1 = inlined_call_operand.hbm [shape: f32[64,512], index: 1, kind: input, shape index: {}]
  %s2 = inlined_call_operand.vmem [shape: f32[32,512], index: 2, kind: output, shape index: {}]
  %s3 = sld [smem:[#allocation0]]
  $region30: #{generator_forward.17} parent=0
    _
  %s5 = ssub.s32 1, %s3
  %s6 = scalar_select 0, %s5, %s3
  $region1: #{generator_forward.17} parent=0
    #allocation3 [shape = 'u8[131072]{0}', space=vmem, size = 0x20000, scoped, tag = 'input window, operand 1, single buffered']
    #allocation4 [shape = 's32[1]{0}', space=sflag, size = 0x4, scoped, tag = 'scoped memory for generator_forward.17']
    %7 = vsyncpa [#allocation4], 0
    // Predicated region
    $region2: #{generator_forward.17} parent=1 // pred_check
      _
    $region3: #{generator_forward.17} parent=1 // pred_check_branch
      %9 = sbr.rel (0) target = $region5
    $region4: #{generator_forward.17} parent=1 // pred_region
      _
    $region5: #{generator_forward.17} parent=1 // pred_fallthru
      _
    // Predicated region
    $region6: #{generator_forward.17} parent=1 // pred_check
      _
    $region7: #{generator_forward.17} parent=1 // pred_check_branch
      %11 = sbr.rel (0) target = $region9
    $region8: #{generator_forward.17} parent=1 // pred_region
      %s13 = ssub.s32 4096, 4096
      %14 = vsyncadd [#allocation4], %s13
      %s15 = sshll.u32 [#allocation3], 4
      %s16 = int_to_ptr.vmem [resolvable:$true] %s15
      %21 = dma.hbm_to_vmem [thread:$0]  %s1, 4096, %s16, [#allocation4], 512, 512, 32
    $region9: #{generator_forward.17} parent=1 // pred_fallthru
      _
    // Predicated region
    $region10: #{generator_forward.17} parent=1 // pred_check
      _
    $region11: #{generator_forward.17} parent=1 // pred_check_branch
      %23 = sbr.rel (0) target = $region13
    $region12: #{generator_forward.17} parent=1 // pred_region
      %24 = dma.done [#allocation4], 4096
    $region13: #{generator_forward.17} parent=1 // pred_fallthru
      _
    %p25 = scmp.eq.s32.totalorder 0, 0
    // Predicated region
    $region14: #{generator_forward.17} parent=1 // pred_check
      %p26 = pneg %p25
    $region15: #{generator_forward.17} parent=1 // pred_check_branch
      %28 = sbr.rel (%p26) target = $region17
    $region16: #{generator_forward.17} parent=1 // pred_region
      %29 = vst [vmem:[#allocation2] sm:$0xff] 0.0
      %30 = vst [vmem:[#allocation2 + $0x8] sm:$0xff] 0.0
      %31 = vst [vmem:[#allocation2 + $0x10] sm:$0xff] 0.0
      %32 = vst [vmem:[#allocation2 + $0x18] sm:$0xff] 0.0
      %33 = vst [vmem:[#allocation2 + $0x20] sm:$0xff] 0.0
      %34 = vst [vmem:[#allocation2 + $0x28] sm:$0xff] 0.0
      %35 = vst [vmem:[#allocation2 + $0x30] sm:$0xff] 0.0
      %36 = vst [vmem:[#allocation2 + $0x38] sm:$0xff] 0.0
      %37 = vst [vmem:[#allocation2 + $0x40] sm:$0xff] 0.0
      %38 = vst [vmem:[#allocation2 + $0x48] sm:$0xff] 0.0
      %39 = vst [vmem:[#allocation2 + $0x50] sm:$0xff] 0.0
      %40 = vst [vmem:[#allocation2 + $0x58] sm:$0xff] 0.0
      %41 = vst [vmem:[#allocation2 + $0x60] sm:$0xff] 0.0
      %42 = vst [vmem:[#allocation2 + $0x68] sm:$0xff] 0.0
      %43 = vst [vmem:[#allocation2 + $0x70] sm:$0xff] 0.0
      %44 = vst [vmem:[#allocation2 + $0x78] sm:$0xff] 0.0
    $region17: #{generator_forward.17} parent=1 // pred_fallthru
      _
    %v45 = vld [vmem:[#allocation2] sm:$0xff]
    %v46 = vld [vmem:[#allocation2 + $0x8] sm:$0xff]
    %v47 = vld [vmem:[#allocation2 + $0x10] sm:$0xff]
    %v48 = vld [vmem:[#allocation2 + $0x18] sm:$0xff]
    %v49 = vld [vmem:[#allocation2 + $0x20] sm:$0xff]
    %v50 = vld [vmem:[#allocation2 + $0x28] sm:$0xff]
    %v51 = vld [vmem:[#allocation2 + $0x30] sm:$0xff]
    %v52 = vld [vmem:[#allocation2 + $0x38] sm:$0xff]
    %v53 = vld [vmem:[#allocation2 + $0x40] sm:$0xff]
    %v54 = vld [vmem:[#allocation2 + $0x48] sm:$0xff]
    %v55 = vld [vmem:[#allocation2 + $0x50] sm:$0xff]
    %v56 = vld [vmem:[#allocation2 + $0x58] sm:$0xff]
    %v57 = vld [vmem:[#allocation2 + $0x60] sm:$0xff]
    %v58 = vld [vmem:[#allocation2 + $0x68] sm:$0xff]
    %v59 = vld [vmem:[#allocation2 + $0x70] sm:$0xff]
    %v60 = vld [vmem:[#allocation2 + $0x78] sm:$0xff]
    %v61 = vld [vmem:[%s0] sm:$0xff]
    %v62 = vld [vmem:[%s0 + $0x8] sm:$0xff]
    %v63 = vld [vmem:[%s0 + $0x10] sm:$0xff]
    %v64 = vld [vmem:[%s0 + $0x18] sm:$0xff]
    %v65 = vld [vmem:[#allocation3] sm:$0xff]
    %v66 = vld [vmem:[#allocation3 + $0x8] sm:$0xff]
    %v67 = vld [vmem:[#allocation3 + $0x10] sm:$0xff]
    %v68 = vld [vmem:[#allocation3 + $0x18] sm:$0xff]
    %v69 = vld [vmem:[#allocation3 + $0x20] sm:$0xff]
    %v70 = vld [vmem:[#allocation3 + $0x28] sm:$0xff]
    %v71 = vld [vmem:[#allocation3 + $0x30] sm:$0xff]
    %v72 = vld [vmem:[#allocation3 + $0x38] sm:$0xff]
    %v73 = vld [vmem:[#allocation3 + $0x40] sm:$0xff]
    %v74 = vld [vmem:[#allocation3 + $0x48] sm:$0xff]
    %v75 = vld [vmem:[#allocation3 + $0x50] sm:$0xff]
    %v76 = vld [vmem:[#allocation3 + $0x58] sm:$0xff]
    %v77 = vld [vmem:[#allocation3 + $0x60] sm:$0xff]
    %v78 = vld [vmem:[#allocation3 + $0x68] sm:$0xff]
    %v79 = vld [vmem:[#allocation3 + $0x70] sm:$0xff]
    %v80 = vld [vmem:[#allocation3 + $0x78] sm:$0xff]
    %v81 = vld [vmem:[#allocation3 + $0x80] sm:$0xff]
    %v82 = vld [vmem:[#allocation3 + $0x88] sm:$0xff]
    %v83 = vld [vmem:[#allocation3 + $0x90] sm:$0xff]
    %v84 = vld [vmem:[#allocation3 + $0x98] sm:$0xff]
    %v85 = vld [vmem:[#allocation3 + $0xa0] sm:$0xff]
    %v86 = vld [vmem:[#allocation3 + $0xa8] sm:$0xff]
    %v87 = vld [vmem:[#allocation3 + $0xb0] sm:$0xff]
    %v88 = vld [vmem:[#allocation3 + $0xb8] sm:$0xff]
    %v89 = vld [vmem:[#allocation3 + $0xc0] sm:$0xff]
    %v90 = vld [vmem:[#allocation3 + $0xc8] sm:$0xff]
    %v91 = vld [vmem:[#allocation3 + $0xd0] sm:$0xff]
    %v92 = vld [vmem:[#allocation3 + $0xd8] sm:$0xff]
    %v93 = vld [vmem:[#allocation3 + $0xe0] sm:$0xff]
    %v94 = vld [vmem:[#allocation3 + $0xe8] sm:$0xff]
    %v95 = vld [vmem:[#allocation3 + $0xf0] sm:$0xff]
    %v96 = vld [vmem:[#allocation3 + $0xf8] sm:$0xff]
    %vm97 = vcmask 523264
    %v99 = vsel %vm97, %v61, 0
    %v102 = vsel %vm97, %v62, 0
    %v105 = vsel %vm97, %v63, 0
    %v108 = vsel %vm97, %v64, 0
    %110 = vmatprep.subr.mxu0 %v66
    %111 = vmatpush1.msra.mxu0 %v65
    %112 = vmatprep.subr.mxu0 %v70
    %113 = vmatpush1.msra.mxu0 %v69
    %114 = vmatprep.subr.mxu0 %v74
    %115 = vmatpush1.msra.mxu0 %v73
    %116 = vmatprep.subr.mxu0 %v78
    %117 = vmatpush1.msra.mxu0 %v77
    %118 = vmatprep.subr.mxu0 %v82
    %119 = vmatpush1.msra.mxu0 %v81
    %120 = vmatprep.subr.mxu0 %v86
    %121 = vmatpush1.msra.mxu0 %v85
    %122 = vmatprep.subr.mxu0 %v90
    %123 = vmatpush1.msra.mxu0 %v89
    %124 = vmatprep.subr.mxu0 %v94
    %125 = vmatpush1.msra.mxu0 %v93
    %126 = vmatprep.subr.mxu0 0.0
    %127 = vmatpush1.msra.mxu0 0.0
    %128 = vmatprep.subr.mxu0 0.0
    %129 = vmatpush1.msra.mxu0 0.0
    %130 = vmatprep.subr.mxu0 0.0
    %131 = vmatpush1.msra.mxu0 0.0
    %132 = vmatprep.subr.mxu0 0.0
    %133 = vmatpush1.msra.mxu0 0.0
    %134 = vmatprep.subr.mxu0 0.0
    %135 = vmatpush1.msra.mxu0 0.0
    %136 = vmatprep.subr.mxu0 0.0
    %137 = vmatpush1.msra.mxu0 0.0
    %138 = vmatprep.subr.mxu0 0.0
    %139 = vmatpush1.msra.mxu0 0.0
    %140 = vmatprep.subr.mxu0 0.0
    %141 = vmatpush1.msra.mxu0 0.0
    %142 = vmatprep.subr.mxu0 0.0
    %143 = vmatpush1.msra.mxu0 0.0
    %144 = vmatprep.subr.mxu0 0.0
    %145 = vmatpush1.msra.mxu0 0.0
    %146 = vmatprep.subr.mxu0 0.0
    %147 = vmatpush1.msra.mxu0 0.0
    %148 = vmatprep.subr.mxu0 0.0
    %149 = vmatpush1.msra.mxu0 0.0
    %150 = vmatprep.subr.mxu0 0.0
    %151 = vmatpush1.msra.mxu0 0.0
    %152 = vmatprep.subr.mxu0 0.0
    %153 = vmatpush1.msra.mxu0 0.0
    %154 = vmatprep.subr.mxu0 0.0
    %155 = vmatpush1.msra.mxu0 0.0
    %156 = vmatprep.subr.mxu0 0.0
    %157 = vmatpush1.msra.mxu0 0.0
    %158 = vmatprep.subr.mxu0 0.0
    %159 = vmatpush1.msra.mxu0 0.0
    %160 = vmatprep.subr.mxu0 0.0
    %161 = vmatpush1.msra.mxu0 0.0
    %162 = vmatprep.subr.mxu0 0.0
    %163 = vmatpush1.msra.mxu0 0.0
    %164 = vmatprep.subr.mxu0 0.0
    %165 = vmatpush1.msra.mxu0 0.0
    %166 = vmatprep.subr.mxu0 0.0
    %167 = vmatpush1.msra.mxu0 0.0
    %168 = vmatprep.subr.mxu0 0.0
    %169 = vmatpush1.msra.mxu0 0.0
    %170 = vmatprep.subr.mxu0 0.0
    %171 = vmatpush1.msra.mxu0 0.0
    %172 = vmatprep.subr.mxu0 0.0
    %173 = vmatpush1.msra.mxu0 0.0
    %174 = vmatprep.mubr.f32.mxu0 0.0
    %175 = vmatmul.mubr.f32.gmra.mrb[0].mxu0 %v99
    %v176 = vpop.f32.mrb[0].mxu0
    %v177 = vadd.f32 0.0, %v176
    %v178 = vpop.f32.mrb[0].mxu0
    %v179 = vadd.f32 0.0, %v178
    %180 = vmatprep.mubr.f32.mxu0 0.0
    %181 = vmatmul.mubr.f32.gmra.mrb[0].mxu0 %v102
    %v182 = vpop.f32.mrb[0].mxu0
    %v183 = vadd.f32 0.0, %v182
    %v184 = vpop.f32.mrb[0].mxu0
    %v185 = vadd.f32 0.0, %v184
    %186 = vmatprep.mubr.f32.mxu0 0.0
    %187 = vmatmul.mubr.f32.gmra.mrb[0].mxu0 %v105
    %v188 = vpop.f32.mrb[0].mxu0
    %v189 = vadd.f32 0.0, %v188
    %v190 = vpop.f32.mrb[0].mxu0
    %v191 = vadd.f32 0.0, %v190
    %192 = vmatprep.mubr.f32.mxu0 0.0
    %193 = vmatmul.mubr.f32.gmra.mrb[0].mxu0 %v108
    %v194 = vpop.f32.mrb[0].mxu0
    %v195 = vadd.f32 0.0, %v194
    %v196 = vpop.f32.mrb[0].mxu0
    %v197 = vadd.f32 0.0, %v196
    %198 = vdwg.mxu0
    %199 = vmatprep.subr.mxu0 %v68
    %200 = vmatpush1.msra.mxu0 %v67
    %201 = vmatprep.subr.mxu0 %v72
    %202 = vmatpush1.msra.mxu0 %v71
    %203 = vmatprep.subr.mxu0 %v76
    %204 = vmatpush1.msra.mxu0 %v75
    %205 = vmatprep.subr.mxu0 %v80
    %206 = vmatpush1.msra.mxu0 %v79
    %207 = vmatprep.subr.mxu0 %v84
    %208 = vmatpush1.msra.mxu0 %v83
    %209 = vmatprep.subr.mxu0 %v88
    %210 = vmatpush1.msra.mxu0 %v87
    %211 = vmatprep.subr.mxu0 %v92
    %212 = vmatpush1.msra.mxu0 %v91
    %213 = vmatprep.subr.mxu0 %v96
    %214 = vmatpush1.msra.mxu0 %v95
    %215 = vmatprep.subr.mxu0 0.0
    %216 = vmatpush1.msra.mxu0 0.0
    %217 = vmatprep.subr.mxu0 0.0
    %218 = vmatpush1.msra.mxu0 0.0
    %219 = vmatprep.subr.mxu0 0.0
    %220 = vmatpush1.msra.mxu0 0.0
    %221 = vmatprep.subr.mxu0 0.0
    %222 = vmatpush1.msra.mxu0 0.0
    %223 = vmatprep.subr.mxu0 0.0
    %224 = vmatpush1.msra.mxu0 0.0
    %225 = vmatprep.subr.mxu0 0.0
    %226 = vmatpush1.msra.mxu0 0.0
    %227 = vmatprep.subr.mxu0 0.0
    %228 = vmatpush1.msra.mxu0 0.0
    %229 = vmatprep.subr.mxu0 0.0
    %230 = vmatpush1.msra.mxu0 0.0
    %231 = vmatprep.subr.mxu0 0.0
    %232 = vmatpush1.msra.mxu0 0.0
    %233 = vmatprep.subr.mxu0 0.0
    %234 = vmatpush1.msra.mxu0 0.0
    %235 = vmatprep.subr.mxu0 0.0
    %236 = vmatpush1.msra.mxu0 0.0
    %237 = vmatprep.subr.mxu0 0.0
    %238 = vmatpush1.msra.mxu0 0.0
    %239 = vmatprep.subr.mxu0 0.0
    %240 = vmatpush1.msra.mxu0 0.0
    %241 = vmatprep.subr.mxu0 0.0
    %242 = vmatpush1.msra.mxu0 0.0
    %243 = vmatprep.subr.mxu0 0.0
    %244 = vmatpush1.msra.mxu0 0.0
    %245 = vmatprep.subr.mxu0 0.0
    %246 = vmatpush1.msra.mxu0 0.0
    %247 = vmatprep.subr.mxu0 0.0
    %248 = vmatpush1.msra.mxu0 0.0
    %249 = vmatprep.subr.mxu0 0.0
    %250 = vmatpush1.msra.mxu0 0.0
    %251 = vmatprep.subr.mxu0 0.0
    %252 = vmatpush1.msra.mxu0 0.0
    %253 = vmatprep.subr.mxu0 0.0
    %254 = vmatpush1.msra.mxu0 0.0
    %255 = vmatprep.subr.mxu0 0.0
    %256 = vmatpush1.msra.mxu0 0.0
    %257 = vmatprep.subr.mxu0 0.0
    %258 = vmatpush1.msra.mxu0 0.0
    %259 = vmatprep.subr.mxu0 0.0
    %260 = vmatpush1.msra.mxu0 0.0
    %261 = vmatprep.subr.mxu0 0.0
    %262 = vmatpush1.msra.mxu0 0.0
    %263 = vmatprep.mubr.f32.mxu0 0.0
    %264 = vmatmul.mubr.f32.gmra.mrb[0].mxu0 %v99
    %v265 = vpop.f32.mrb[0].mxu0
    %v266 = vadd.f32 0.0, %v265
    %v267 = vpop.f32.mrb[0].mxu0
    %v268 = vadd.f32 0.0, %v267
    %269 = vmatprep.mubr.f32.mxu0 0.0
    %270 = vmatmul.mubr.f32.gmra.mrb[0].mxu0 %v102
    %v271 = vpop.f32.mrb[0].mxu0
    %v272 = vadd.f32 0.0, %v271
    %v273 = vpop.f32.mrb[0].mxu0
    %v274 = vadd.f32 0.0, %v273
    %275 = vmatprep.mubr.f32.mxu0 0.0
    %276 = vmatmul.mubr.f32.gmra.mrb[0].mxu0 %v105
    %v277 = vpop.f32.mrb[0].mxu0
    %v278 = vadd.f32 0.0, %v277
    %v279 = vpop.f32.mrb[0].mxu0
    %v280 = vadd.f32 0.0, %v279
    %281 = vmatprep.mubr.f32.mxu0 0.0
    %282 = vmatmul.mubr.f32.gmra.mrb[0].mxu0 %v108
    %v283 = vpop.f32.mrb[0].mxu0
    %v284 = vadd.f32 0.0, %v283
    %v285 = vpop.f32.mrb[0].mxu0
    %v286 = vadd.f32 0.0, %v285
    %287 = vdwg.mxu0
    %v288 = vadd.f32 %v45, %v177
    %v289 = vadd.f32 %v46, %v179
    %v290 = vadd.f32 %v47, %v266
    %v291 = vadd.f32 %v48, %v268
    %v292 = vadd.f32 %v49, %v183
    %v293 = vadd.f32 %v50, %v185
    %v294 = vadd.f32 %v51, %v272
    %v295 = vadd.f32 %v52, %v274
    %v296 = vadd.f32 %v53, %v189
    %v297 = vadd.f32 %v54, %v191
    %v298 = vadd.f32 %v55, %v278
    %v299 = vadd.f32 %v56, %v280
    %v300 = vadd.f32 %v57, %v195
    %v301 = vadd.f32 %v58, %v197
    %v302 = vadd.f32 %v59, %v284
    %v303 = vadd.f32 %v60, %v286
    %304 = vst [vmem:[#allocation2] sm:$0xff] %v288
    %305 = vst [vmem:[#allocation2 + $0x8] sm:$0xff] %v289
    %306 = vst [vmem:[#allocation2 + $0x10] sm:$0xff] %v290
    %307 = vst [vmem:[#allocation2 + $0x18] sm:$0xff] %v291
    %308 = vst [vmem:[#allocation2 + $0x20] sm:$0xff] %v292
    %309 = vst [vmem:[#allocation2 + $0x28] sm:$0xff] %v293
    %310 = vst [vmem:[#allocation2 + $0x30] sm:$0xff] %v294
    %311 = vst [vmem:[#allocation2 + $0x38] sm:$0xff] %v295
    %312 = vst [vmem:[#allocation2 + $0x40] sm:$0xff] %v296
    %313 = vst [vmem:[#allocation2 + $0x48] sm:$0xff] %v297
    %314 = vst [vmem:[#allocation2 + $0x50] sm:$0xff] %v298
    %315 = vst [vmem:[#allocation2 + $0x58] sm:$0xff] %v299
    %316 = vst [vmem:[#allocation2 + $0x60] sm:$0xff] %v300
    %317 = vst [vmem:[#allocation2 + $0x68] sm:$0xff] %v301
    %318 = vst [vmem:[#allocation2 + $0x70] sm:$0xff] %v302
    %319 = vst [vmem:[#allocation2 + $0x78] sm:$0xff] %v303
    // Predicated region
    $region18: #{generator_forward.17} parent=1 // pred_check
      %p320 = pneg %p25
    $region19: #{generator_forward.17} parent=1 // pred_check_branch
      %322 = sbr.rel (%p320) target = $region21
    $region20: #{generator_forward.17} parent=1 // pred_region
      %v323 = vld [vmem:[#allocation2] sm:$0xff]
      %v324 = vld [vmem:[#allocation2 + $0x8] sm:$0xff]
      %v325 = vld [vmem:[#allocation2 + $0x10] sm:$0xff]
      %v326 = vld [vmem:[#allocation2 + $0x18] sm:$0xff]
      %v327 = vld [vmem:[#allocation2 + $0x20] sm:$0xff]
      %v328 = vld [vmem:[#allocation2 + $0x28] sm:$0xff]
      %v329 = vld [vmem:[#allocation2 + $0x30] sm:$0xff]
      %v330 = vld [vmem:[#allocation2 + $0x38] sm:$0xff]
      %v331 = vld [vmem:[#allocation2 + $0x40] sm:$0xff]
      %v332 = vld [vmem:[#allocation2 + $0x48] sm:$0xff]
      %v333 = vld [vmem:[#allocation2 + $0x50] sm:$0xff]
      %v334 = vld [vmem:[#allocation2 + $0x58] sm:$0xff]
      %v335 = vld [vmem:[#allocation2 + $0x60] sm:$0xff]
      %v336 = vld [vmem:[#allocation2 + $0x68] sm:$0xff]
      %v337 = vld [vmem:[#allocation2 + $0x70] sm:$0xff]
      %v338 = vld [vmem:[#allocation2 + $0x78] sm:$0xff]
      %339 = vst [vmem:[%s2] sm:$0xff] %v323
      %340 = vst [vmem:[%s2 + $0x8] sm:$0xff] %v324
      %341 = vst [vmem:[%s2 + $0x10] sm:$0xff] %v325
      %342 = vst [vmem:[%s2 + $0x18] sm:$0xff] %v326
      %343 = vst [vmem:[%s2 + $0x20] sm:$0xff] %v327
      %344 = vst [vmem:[%s2 + $0x28] sm:$0xff] %v328
      %345 = vst [vmem:[%s2 + $0x30] sm:$0xff] %v329
      %346 = vst [vmem:[%s2 + $0x38] sm:$0xff] %v330
      %347 = vst [vmem:[%s2 + $0x40] sm:$0xff] %v331
      %348 = vst [vmem:[%s2 + $0x48] sm:$0xff] %v332
      %349 = vst [vmem:[%s2 + $0x50] sm:$0xff] %v333
      %350 = vst [vmem:[%s2 + $0x58] sm:$0xff] %v334
      %351 = vst [vmem:[%s2 + $0x60] sm:$0xff] %v335
      %352 = vst [vmem:[%s2 + $0x68] sm:$0xff] %v336
      %353 = vst [vmem:[%s2 + $0x70] sm:$0xff] %v337
      %354 = vst [vmem:[%s2 + $0x78] sm:$0xff] %v338
    $region21: #{generator_forward.17} parent=1 // pred_fallthru
      _
    // Predicated region
    $region22: #{generator_forward.17} parent=1 // pred_check
      _
    $region23: #{generator_forward.17} parent=1 // pred_check_branch
      %356 = sbr.rel (0) target = $region25
    $region24: #{generator_forward.17} parent=1 // pred_region
      _
    $region25: #{generator_forward.17} parent=1 // pred_fallthru
      _
    // Predicated region
    $region26: #{generator_forward.17} parent=1 // pred_check
      _
    $region27: #{generator_forward.17} parent=1 // pred_check_branch
      %358 = sbr.rel (0) target = $region29
    $region28: #{generator_forward.17} parent=1 // pred_region
      _
    $region29: #{generator_forward.17} parent=1 // pred_fallthru
      _
    %359 = vsyncpa [#allocation4], 1

// kernel: tile.53
$region0: #{tile.53}
  #allocation0 [shape = 's32[1]{0}', space=sflag, size = 0x4, scoped, tag = 'scoped memory for tile.53']
  %s0 = inlined_call_operand.vmem [shape: f32[32], index: 0, kind: input, shape index: {}]
  %s1 = inlined_call_operand.vmem [shape: f32[8,32], index: 1, kind: output, shape index: {}]
  // Predicated region
  $region2: #{tile.53} parent=0 // pred_check
    _
  $region3: #{tile.53} parent=0 // pred_check_branch
    %3 = sbr.rel (0) target = $region5
  $region4: #{tile.53} parent=0 // pred_region
    _
  $region5: #{tile.53} parent=0 // pred_fallthru
    _
  %v4 = vld [vmem:[%s0] ss:$0 sm:$0xff]
  %5 = vst [vmem:[%s1] sm:$0xff] %v4

// kernel: tile.54
$region0: #{tile.54}
  %s0 = inlined_call_operand.vmem [shape: f32[8,32], index: 0, kind: input, shape index: {}]
  %s1 = inlined_call_operand.vmem [shape: f32[1,256], index: 1, kind: output, shape index: {}]
  $region1: #{tile.54} parent=0
    #allocation0 [shape = 'u8[8192]{0}', space=vmem, size = 0x2000, scoped, tag = 'scoped mem for output reshape']
    %s2 = smov 3
    %v3 = vld [vmem:[%s0] ss:$4 sm:%s2]
    %vm4 = vcmask 261120
    %5 = vst.msk [vmem:[#allocation0] ss:$8 sm:$0x3] %vm4, %v3
    %s6 = scalar_lea.vmem %s0, 3
    %s7 = smov 3
    %v8 = vld [vmem:[%s6] ss:$4 sm:%s7]
    %9 = vrot.lane.b32.xlu0 %v8, 96
    %v10 = vpop.permute.xlu0 %9
    %vm11 = vcmask 1048320
    %12 = vst.msk [vmem:[#allocation0] ss:$8 sm:$0x3] %vm11, %v10
    %s13 = scalar_lea.vmem %s0, 2
    %s14 = smov 3
    %v15 = vld [vmem:[%s13] ss:$4 sm:%s14]
    %16 = vrot.lane.b32.xlu0 %v15, 64
    %v17 = vpop.permute.xlu0 %16
    %vm18 = vcmask 785920
    %19 = vst.msk [vmem:[#allocation0] ss:$8 sm:$0x3] %vm18, %v17
    %s20 = scalar_lea.vmem %s0, 1
    %s21 = smov 3
    %v22 = vld [vmem:[%s20] ss:$4 sm:%s21]
    %23 = vrot.lane.b32.xlu0 %v22, 32
    %v24 = vpop.permute.xlu0 %23
    %vm25 = vcmask 523520
    %26 = vst.msk [vmem:[#allocation0] ss:$8 sm:$0x3] %vm25, %v24
    %s28 = sshllo.u32 0, 1
    %v30 = vld [vmem:[#allocation0] sm:%s28]
    %s31 = sshllo.u32 0, 1
    %32 = vst [vmem:[%s1] sm:%s31] %v30
    %s33 = scalar_lea.vmem [#allocation0], 8
    %v34 = vld [vmem:[%s33] sm:%s28]
    %s35 = sshllo.u32 0, 1
    %s36 = scalar_lea.vmem %s1, 1
    %37 = vst [vmem:[%s36] sm:%s35] %v34

// kernel: generator_forward.18
$region0: #{generator_forward.18}
  #allocation0 [shape = 'u32[]', space=smem, size = 0x4, offset = 0x4, fixed_abs, tag = 'smem constant byte address 0x4 - core index']
  #allocation1 [shape = 'u32[144,128]{1,0:T(1,128)}', space=vmem, size = 0x12000, scoped, tag = 'internal scratch']
  %s0 = inlined_call_operand.vmem [shape: f32[16,256], index: 0, kind: input, shape index: {}]
  %s1 = inlined_call_operand.vmem [shape: f32[1,256], index: 1, kind: output, shape index: {0}]
  %s2 = inlined_call_operand.vmem [shape: f32[1,256], index: 2, kind: output, shape index: {1}]
  %3 = xla_tuple %s1, %s2
  %s4 = sld [smem:[#allocation0]]
  $region26: #{generator_forward.18} parent=0
    _
  %s6 = ssub.s32 1, %s4
  %s7 = scalar_select 0, %s6, %s4
  // Predicated region
  $region2: #{generator_forward.18} parent=0 // pred_check
    _
  $region3: #{generator_forward.18} parent=0 // pred_check_branch
    %9 = sbr.rel (0) target = $region5
  $region4: #{generator_forward.18} parent=0 // pred_region
    _
  $region5: #{generator_forward.18} parent=0 // pred_fallthru
    _
  %p10 = scmp.eq.s32.totalorder 0, 0
  // Predicated region
  $region6: #{generator_forward.18} parent=0 // pred_check
    %p11 = pneg %p10
  $region7: #{generator_forward.18} parent=0 // pred_check_branch
    %13 = sbr.rel (%p11) target = $region9
  $region8: #{generator_forward.18} parent=0 // pred_region
    %v14 = vlaneseq
    %vm15 = vcmp.ge.s32.totalorder %v14, 0
    %vm16 = vcmp.lt.s32.totalorder %v14, 256
    %vm17 = vmand %vm15, %vm16
    %18 = vst.msk [vmem:[%s1] sm:$0x3] %vm17, 0.0
    %19 = vst.msk [vmem:[%s2] sm:$0x3] %vm17, 0.0
  $region9: #{generator_forward.18} parent=0 // pred_fallthru
    _
  %v20 = vld [vmem:[%s0] sm:$0xff]
  %v21 = vld [vmem:[%s0 + $0x8] sm:$0xff]
  %v22 = vld [vmem:[%s0 + $0x10] sm:$0xff]
  %v23 = vld [vmem:[%s0 + $0x18] sm:$0xff]
  %v24 = vld [vmem:[%s1] sm:$0x3]
  %v25 = vadd.f32 %v20, %v22
  %v26 = vrot.slane %v25, 4
  %v27 = vadd.f32 %v25, %v26
  %v28 = vrot.slane %v27, 2
  %v29 = vadd.f32 %v27, %v28
  %v30 = vrot.slane %v29, 1
  %v31 = vadd.f32 %v29, %v30
  %v32 = vadd.f32 %v21, %v23
  %v33 = vrot.slane %v32, 4
  %v34 = vadd.f32 %v32, %v33
  %v35 = vrot.slane %v34, 2
  %v36 = vadd.f32 %v34, %v35
  %v37 = vrot.slane %v36, 1
  %v38 = vadd.f32 %v36, %v37
  %v41 = vcombine.low %v31, %v38
  %v43 = vunpack.c.l.s4 1966171168
  %v44 = vunpack.c.0.s8 %v43
  %v45 = vlaneseq
  %v46 = vshrl.u32 %v45, 7
  %v47 = vsub.s32 %v44, %v46
  %v48 = vrot.slane %v41, %v47
  %v50 = vunpack.c.l.s4 1966171168
  %v51 = vunpack.c.0.s8 %v50
  %v52 = vlaneseq
  %v53 = vshrl.u32 %v52, 7
  %v54 = vsub.s32 %v51, %v53
  %v55 = vrot.slane %v48, %v54
  %v57 = vadd.f32 %v24, %v55
  %v58 = vlaneseq
  %vm59 = vcmp.ge.s32.totalorder %v58, 0
  %vm60 = vcmp.lt.s32.totalorder %v58, 256
  %vm61 = vmand %vm59, %vm60
  %62 = vst.msk [vmem:[%s1] sm:$0x3] %vm61, %v57
  %v63 = vld [vmem:[%s2] sm:$0x3]
  %v64 = vmul.f32 %v20, %v20
  %v65 = vmul.f32 %v21, %v21
  %v66 = vmul.f32 %v22, %v22
  %v67 = vmul.f32 %v23, %v23
  %v68 = vadd.f32 %v64, %v66
  %v69 = vrot.slane %v68, 4
  %v70 = vadd.f32 %v68, %v69
  %v71 = vrot.slane %v70, 2
  %v72 = vadd.f32 %v70, %v71
  %v73 = vrot.slane %v72, 1
  %v74 = vadd.f32 %v72, %v73
  %v75 = vadd.f32 %v65, %v67
  %v76 = vrot.slane %v75, 4
  %v77 = vadd.f32 %v75, %v76
  %v78 = vrot.slane %v77, 2
  %v79 = vadd.f32 %v77, %v78
  %v80 = vrot.slane %v79, 1
  %v81 = vadd.f32 %v79, %v80
  %v84 = vcombine.low %v74, %v81
  %v86 = vunpack.c.l.s4 1966171168
  %v87 = vunpack.c.0.s8 %v86
  %v88 = vlaneseq
  %v89 = vshrl.u32 %v88, 7
  %v90 = vsub.s32 %v87, %v89
  %v91 = vrot.slane %v84, %v90
  %v93 = vunpack.c.l.s4 1966171168
  %v94 = vunpack.c.0.s8 %v93
  %v95 = vlaneseq
  %v96 = vshrl.u32 %v95, 7
  %v97 = vsub.s32 %v94, %v96
  %v98 = vrot.slane %v91, %v97
  %v100 = vadd.f32 %v63, %v98
  %101 = vst.msk [vmem:[%s2] sm:$0x3] %vm61, %v100
  // Predicated region
  $region10: #{generator_forward.18} parent=0 // pred_check
    _
  $region11: #{generator_forward.18} parent=0 // pred_check_branch
    %103 = sbr.rel (0) target = $region13
  $region12: #{generator_forward.18} parent=0 // pred_region
    _
  $region13: #{generator_forward.18} parent=0 // pred_fallthru
    _
  // Predicated region
  $region14: #{generator_forward.18} parent=0 // pred_check
    _
  $region15: #{generator_forward.18} parent=0 // pred_check_branch
    %105 = sbr.rel (0) target = $region17
  $region16: #{generator_forward.18} parent=0 // pred_region
    _
  $region17: #{generator_forward.18} parent=0 // pred_fallthru
    _
  // Predicated region
  $region18: #{generator_forward.18} parent=0 // pred_check
    _
  $region19: #{generator_forward.18} parent=0 // pred_check_branch
    %107 = sbr.rel (0) target = $region21
  $region20: #{generator_forward.18} parent=0 // pred_region
    _
  $region21: #{generator_forward.18} parent=0 // pred_fallthru
    _
  // Predicated region
  $region22: #{generator_forward.18} parent=0 // pred_check
    _
  $region23: #{generator_forward.18} parent=0 // pred_check_branch
    %109 = sbr.rel (0) target = $region25
  $region24: #{generator_forward.18} parent=0 // pred_region
    _
  $region25: #{generator_forward.18} parent=0 // pred_fallthru
    _

// kernel: generator_forward.19
$region0: #{generator_forward.19}
  #allocation0 [shape = 'u32[]', space=smem, size = 0x4, offset = 0x4, fixed_abs, tag = 'smem constant byte address 0x4 - core index']
  #allocation1 [shape = 'u32[144,128]{1,0:T(1,128)}', space=vmem, size = 0x12000, scoped, tag = 'internal scratch']
  %s0 = inlined_call_operand.vmem [shape: f32[16,256], index: 0, kind: input, shape index: {}]
  %s1 = inlined_call_operand.vmem [shape: f32[1,256], index: 1, kind: input, shape index: {}]
  %s2 = inlined_call_operand.vmem [shape: f32[1,256], index: 2, kind: input, shape index: {}]
  %s3 = inlined_call_operand.vmem [shape: f32[16,256], index: 3, kind: output, shape index: {}]
  %s4 = sld [smem:[#allocation0]]
  $region22: #{generator_forward.19} parent=0
    _
  %s6 = ssub.s32 1, %s4
  %s7 = scalar_select 0, %s6, %s4
  // Predicated region
  $region2: #{generator_forward.19} parent=0 // pred_check
    _
  $region3: #{generator_forward.19} parent=0 // pred_check_branch
    %9 = sbr.rel (0) target = $region5
  $region4: #{generator_forward.19} parent=0 // pred_region
    _
  $region5: #{generator_forward.19} parent=0 // pred_fallthru
    _
  // Predicated region
  $region6: #{generator_forward.19} parent=0 // pred_check
    _
  $region7: #{generator_forward.19} parent=0 // pred_check_branch
    %11 = sbr.rel (0) target = $region9
  $region8: #{generator_forward.19} parent=0 // pred_region
    _
  $region9: #{generator_forward.19} parent=0 // pred_fallthru
    _
  // Predicated region
  $region10: #{generator_forward.19} parent=0 // pred_check
    _
  $region11: #{generator_forward.19} parent=0 // pred_check_branch
    %13 = sbr.rel (0) target = $region13
  $region12: #{generator_forward.19} parent=0 // pred_region
    _
  $region13: #{generator_forward.19} parent=0 // pred_fallthru
    _
  %v14 = vld [vmem:[%s0] sm:$0xff]
  %v15 = vld [vmem:[%s0 + $0x8] sm:$0xff]
  %v16 = vld [vmem:[%s0 + $0x10] sm:$0xff]
  %v17 = vld [vmem:[%s0 + $0x18] sm:$0xff]
  %v18 = vld [vmem:[%s1] sm:$0x3]
  %v20 = vlaneseq
  %v21 = vshrl.u32 %v20, 7
  %v22 = vsub.s32 0, %v21
  %v23 = vrot.slane %v18, %v22
  %v24 = vlaneseq
  %v25 = vshrl.u32 %v24, 7
  %v26 = vsub.s32 1, %v25
  %v27 = vrot.slane %v18, %v26
  %v30 = vmul.f32 %v14, %v23
  %v31 = vmul.f32 %v15, %v27
  %v32 = vmul.f32 %v16, %v23
  %v33 = vmul.f32 %v17, %v27
  %v34 = vld [vmem:[%s2] sm:$0x3]
  %v36 = vlaneseq
  %v37 = vshrl.u32 %v36, 7
  %v38 = vsub.s32 0, %v37
  %v39 = vrot.slane %v34, %v38
  %v40 = vlaneseq
  %v41 = vshrl.u32 %v40, 7
  %v42 = vsub.s32 1, %v41
  %v43 = vrot.slane %v34, %v42
  %v46 = vadd.f32 %v30, %v39
  %v47 = vadd.f32 %v31, %v43
  %v48 = vadd.f32 %v32, %v39
  %v49 = vadd.f32 %v33, %v43
  %vm50 = vcmp.gt.f32.partialorder %v46, 0.0
  %vm51 = vcmp.gt.f32.partialorder %v47, 0.0
  %vm52 = vcmp.gt.f32.partialorder %v48, 0.0
  %vm53 = vcmp.gt.f32.partialorder %v49, 0.0
  %v54 = vmul.f32 %v46, 0.01
  %v55 = vmul.f32 %v47, 0.01
  %v56 = vmul.f32 %v48, 0.01
  %v57 = vmul.f32 %v49, 0.01
  %v58 = vsel %vm50, %v46, %v54
  %v59 = vsel %vm51, %v47, %v55
  %v60 = vsel %vm52, %v48, %v56
  %v61 = vsel %vm53, %v49, %v57
  %62 = vst [vmem:[%s3] sm:$0xff] %v58
  %63 = vst [vmem:[%s3 + $0x8] sm:$0xff] %v59
  %64 = vst [vmem:[%s3 + $0x10] sm:$0xff] %v60
  %65 = vst [vmem:[%s3 + $0x18] sm:$0xff] %v61
  // Predicated region
  $region14: #{generator_forward.19} parent=0 // pred_check
    _
  $region15: #{generator_forward.19} parent=0 // pred_check_branch
    %67 = sbr.rel (0) target = $region17
  $region16: #{generator_forward.19} parent=0 // pred_region
    _
  $region17: #{generator_forward.19} parent=0 // pred_fallthru
    _
  // Predicated region
  $region18: #{generator_forward.19} parent=0 // pred_check
    _
  $region19: #{generator_forward.19} parent=0 // pred_check_branch
    %69 = sbr.rel (0) target = $region21
  $region20: #{generator_forward.19} parent=0 // pred_region
    _
  $region21: #{generator_forward.19} parent=0 // pred_fallthru
    _

// kernel: generator_forward.20
$region0: #{generator_forward.20}
  #allocation0 [shape = 'u32[]', space=smem, size = 0x4, offset = 0x4, fixed_abs, tag = 'smem constant byte address 0x4 - core index']
  #allocation1 [shape = 'u32[144,128]{1,0:T(1,128)}', space=vmem, size = 0x12000, scoped, tag = 'internal scratch']
  #allocation2 [shape = 'f32[128,256]{1,0:T(8,128)}', space=vmem, size = 0x20000, scoped, tag = 'scratch operand']
  %s0 = inlined_call_operand.vmem [shape: f32[128,32], index: 0, kind: input, shape index: {}]
  %s1 = inlined_call_operand.vmem [shape: f32[32,256], index: 1, kind: input, shape index: {}]
  %s2 = inlined_call_operand.vmem [shape: f32[128,256], index: 2, kind: output, shape index: {}]
  %s3 = sld [smem:[#allocation0]]
  $region26: #{generator_forward.20} parent=0
    _
  %s5 = ssub.s32 1, %s3
  %s6 = scalar_select 0, %s5, %s3
  // Predicated region
  $region2: #{generator_forward.20} parent=0 // pred_check
    _
  $region3: #{generator_forward.20} parent=0 // pred_check_branch
    %8 = sbr.rel (0) target = $region5
  $region4: #{generator_forward.20} parent=0 // pred_region
    _
  $region5: #{generator_forward.20} parent=0 // pred_fallthru
    _
  // Predicated region
  $region6: #{generator_forward.20} parent=0 // pred_check
    _
  $region7: #{generator_forward.20} parent=0 // pred_check_branch
    %10 = sbr.rel (0) target = $region9
  $region8: #{generator_forward.20} parent=0 // pred_region
    _
  $region9: #{generator_forward.20} parent=0 // pred_fallthru
    _
  %p11 = scmp.eq.s32.totalorder 0, 0
  // Predicated region
  $region10: #{generator_forward.20} parent=0 // pred_check
    %p12 = pneg %p11
  $region11: #{generator_forward.20} parent=0 // pred_check_branch
    %14 = sbr.rel (%p12) target = $region13
  $region12: #{generator_forward.20} parent=0 // pred_region
    %15 = vst [vmem:[#allocation2] sm:$0xff] 0.0
    %16 = vst [vmem:[#allocation2 + $0x8] sm:$0xff] 0.0
    %17 = vst [vmem:[#allocation2 + $0x10] sm:$0xff] 0.0
    %18 = vst [vmem:[#allocation2 + $0x18] sm:$0xff] 0.0
    %19 = vst [vmem:[#allocation2 + $0x20] sm:$0xff] 0.0
    %20 = vst [vmem:[#allocation2 + $0x28] sm:$0xff] 0.0
    %21 = vst [vmem:[#allocation2 + $0x30] sm:$0xff] 0.0
    %22 = vst [vmem:[#allocation2 + $0x38] sm:$0xff] 0.0
    %23 = vst [vmem:[#allocation2 + $0x40] sm:$0xff] 0.0
    %24 = vst [vmem:[#allocation2 + $0x48] sm:$0xff] 0.0
    %25 = vst [vmem:[#allocation2 + $0x50] sm:$0xff] 0.0
    %26 = vst [vmem:[#allocation2 + $0x58] sm:$0xff] 0.0
    %27 = vst [vmem:[#allocation2 + $0x60] sm:$0xff] 0.0
    %28 = vst [vmem:[#allocation2 + $0x68] sm:$0xff] 0.0
    %29 = vst [vmem:[#allocation2 + $0x70] sm:$0xff] 0.0
    %30 = vst [vmem:[#allocation2 + $0x78] sm:$0xff] 0.0
    %31 = vst [vmem:[#allocation2 + $0x80] sm:$0xff] 0.0
    %32 = vst [vmem:[#allocation2 + $0x88] sm:$0xff] 0.0
    %33 = vst [vmem:[#allocation2 + $0x90] sm:$0xff] 0.0
    %34 = vst [vmem:[#allocation2 + $0x98] sm:$0xff] 0.0
    %35 = vst [vmem:[#allocation2 + $0xa0] sm:$0xff] 0.0
    %36 = vst [vmem:[#allocation2 + $0xa8] sm:$0xff] 0.0
    %37 = vst [vmem:[#allocation2 + $0xb0] sm:$0xff] 0.0
    %38 = vst [vmem:[#allocation2 + $0xb8] sm:$0xff] 0.0
    %39 = vst [vmem:[#allocation2 + $0xc0] sm:$0xff] 0.0
    %40 = vst [vmem:[#allocation2 + $0xc8] sm:$0xff] 0.0
    %41 = vst [vmem:[#allocation2 + $0xd0] sm:$0xff] 0.0
    %42 = vst [vmem:[#allocation2 + $0xd8] sm:$0xff] 0.0
    %43 = vst [vmem:[#allocation2 + $0xe0] sm:$0xff] 0.0
    %44 = vst [vmem:[#allocation2 + $0xe8] sm:$0xff] 0.0
    %45 = vst [vmem:[#allocation2 + $0xf0] sm:$0xff] 0.0
    %46 = vst [vmem:[#allocation2 + $0xf8] sm:$0xff] 0.0
  $region13: #{generator_forward.20} parent=0 // pred_fallthru
    _
  %v47 = vld [vmem:[#allocation2] sm:$0xff]
  %v48 = vld [vmem:[#allocation2 + $0x8] sm:$0xff]
  %v49 = vld [vmem:[#allocation2 + $0x10] sm:$0xff]
  %v50 = vld [vmem:[#allocation2 + $0x18] sm:$0xff]
  %v51 = vld [vmem:[#allocation2 + $0x20] sm:$0xff]
  %v52 = vld [vmem:[#allocation2 + $0x28] sm:$0xff]
  %v53 = vld [vmem:[#allocation2 + $0x30] sm:$0xff]
  %v54 = vld [vmem:[#allocation2 + $0x38] sm:$0xff]
  %v55 = vld [vmem:[#allocation2 + $0x40] sm:$0xff]
  %v56 = vld [vmem:[#allocation2 + $0x48] sm:$0xff]
  %v57 = vld [vmem:[#allocation2 + $0x50] sm:$0xff]
  %v58 = vld [vmem:[#allocation2 + $0x58] sm:$0xff]
  %v59 = vld [vmem:[#allocation2 + $0x60] sm:$0xff]
  %v60 = vld [vmem:[#allocation2 + $0x68] sm:$0xff]
  %v61 = vld [vmem:[#allocation2 + $0x70] sm:$0xff]
  %v62 = vld [vmem:[#allocation2 + $0x78] sm:$0xff]
  %v63 = vld [vmem:[#allocation2 + $0x80] sm:$0xff]
  %v64 = vld [vmem:[#allocation2 + $0x88] sm:$0xff]
  %v65 = vld [vmem:[#allocation2 + $0x90] sm:$0xff]
  %v66 = vld [vmem:[#allocation2 + $0x98] sm:$0xff]
  %v67 = vld [vmem:[#allocation2 + $0xa0] sm:$0xff]
  %v68 = vld [vmem:[#allocation2 + $0xa8] sm:$0xff]
  %v69 = vld [vmem:[#allocation2 + $0xb0] sm:$0xff]
  %v70 = vld [vmem:[#allocation2 + $0xb8] sm:$0xff]
  %v71 = vld [vmem:[#allocation2 + $0xc0] sm:$0xff]
  %v72 = vld [vmem:[#allocation2 + $0xc8] sm:$0xff]
  %v73 = vld [vmem:[#allocation2 + $0xd0] sm:$0xff]
  %v74 = vld [vmem:[#allocation2 + $0xd8] sm:$0xff]
  %v75 = vld [vmem:[#allocation2 + $0xe0] sm:$0xff]
  %v76 = vld [vmem:[#allocation2 + $0xe8] sm:$0xff]
  %v77 = vld [vmem:[#allocation2 + $0xf0] sm:$0xff]
  %v78 = vld [vmem:[#allocation2 + $0xf8] sm:$0xff]
  %v79 = vld [vmem:[%s0] sm:$0xff]
  %v80 = vld [vmem:[%s0 + $0x8] sm:$0xff]
  %v81 = vld [vmem:[%s0 + $0x10] sm:$0xff]
  %v82 = vld [vmem:[%s0 + $0x18] sm:$0xff]
  %v83 = vld [vmem:[%s0 + $0x20] sm:$0xff]
  %v84 = vld [vmem:[%s0 + $0x28] sm:$0xff]
  %v85 = vld [vmem:[%s0 + $0x30] sm:$0xff]
  %v86 = vld [vmem:[%s0 + $0x38] sm:$0xff]
  %v87 = vld [vmem:[%s0 + $0x40] sm:$0xff]
  %v88 = vld [vmem:[%s0 + $0x48] sm:$0xff]
  %v89 = vld [vmem:[%s0 + $0x50] sm:$0xff]
  %v90 = vld [vmem:[%s0 + $0x58] sm:$0xff]
  %v91 = vld [vmem:[%s0 + $0x60] sm:$0xff]
  %v92 = vld [vmem:[%s0 + $0x68] sm:$0xff]
  %v93 = vld [vmem:[%s0 + $0x70] sm:$0xff]
  %v94 = vld [vmem:[%s0 + $0x78] sm:$0xff]
  %v95 = vld [vmem:[%s1] sm:$0xff]
  %v96 = vld [vmem:[%s1 + $0x8] sm:$0xff]
  %v97 = vld [vmem:[%s1 + $0x10] sm:$0xff]
  %v98 = vld [vmem:[%s1 + $0x18] sm:$0xff]
  %v99 = vld [vmem:[%s1 + $0x20] sm:$0xff]
  %v100 = vld [vmem:[%s1 + $0x28] sm:$0xff]
  %v101 = vld [vmem:[%s1 + $0x30] sm:$0xff]
  %v102 = vld [vmem:[%s1 + $0x38] sm:$0xff]
  %vm103 = vcmask 261120
  %v105 = vsel %vm103, %v79, 0
  %v108 = vsel %vm103, %v80, 0
  %v111 = vsel %vm103, %v81, 0
  %v114 = vsel %vm103, %v82, 0
  %v117 = vsel %vm103, %v83, 0
  %v120 = vsel %vm103, %v84, 0
  %v123 = vsel %vm103, %v85, 0
  %v126 = vsel %vm103, %v86, 0
  %v129 = vsel %vm103, %v87, 0
  %v132 = vsel %vm103, %v88, 0
  %v135 = vsel %vm103, %v89, 0
  %v138 = vsel %vm103, %v90, 0
  %v141 = vsel %vm103, %v91, 0
  %v144 = vsel %vm103, %v92, 0
  %v147 = vsel %vm103, %v93, 0
  %v150 = vsel %vm103, %v94, 0
  %152 = vmatprep.subr.mxu0 %v96
  %153 = vmatpush1.msra.mxu0 %v95
  %154 = vmatprep.subr.mxu0 %v98
  %155 = vmatpush1.msra.mxu0 %v97
  %156 = vmatprep.subr.mxu0 %v100
  %157 = vmatpush1.msra.mxu0 %v99
  %158 = vmatprep.subr.mxu0 %v102
  %159 = vmatpush1.msra.mxu0 %v101
  %160 = vmatprep.subr.mxu0 0.0
  %161 = vmatpush1.msra.mxu0 0.0
  %162 = vmatprep.subr.mxu0 0.0
  %163 = vmatpush1.msra.mxu0 0.0
  %164 = vmatprep.subr.mxu0 0.0
  %165 = vmatpush1.msra.mxu0 0.0
  %166 = vmatprep.subr.mxu0 0.0
  %167 = vmatpush1.msra.mxu0 0.0
  %168 = vmatprep.subr.mxu0 0.0
  %169 = vmatpush1.msra.mxu0 0.0
  %170 = vmatprep.subr.mxu0 0.0
  %171 = vmatpush1.msra.mxu0 0.0
  %172 = vmatprep.subr.mxu0 0.0
  %173 = vmatpush1.msra.mxu0 0.0
  %174 = vmatprep.subr.mxu0 0.0
  %175 = vmatpush1.msra.mxu0 0.0
  %176 = vmatprep.subr.mxu0 0.0
  %177 = vmatpush1.msra.mxu0 0.0
  %178 = vmatprep.subr.mxu0 0.0
  %179 = vmatpush1.msra.mxu0 0.0
  %180 = vmatprep.subr.mxu0 0.0
  %181 = vmatpush1.msra.mxu0 0.0
  %182 = vmatprep.subr.mxu0 0.0
  %183 = vmatpush1.msra.mxu0 0.0
  %184 = vmatprep.subr.mxu0 0.0
  %185 = vmatpush1.msra.mxu0 0.0
  %186 = vmatprep.subr.mxu0 0.0
  %187 = vmatpush1.msra.mxu0 0.0
  %188 = vmatprep.subr.mxu0 0.0
  %189 = vmatpush1.msra.mxu0 0.0
  %190 = vmatprep.subr.mxu0 0.0
  %191 = vmatpush1.msra.mxu0 0.0
  %192 = vmatprep.subr.mxu0 0.0
  %193 = vmatpush1.msra.mxu0 0.0
  %194 = vmatprep.subr.mxu0 0.0
  %195 = vmatpush1.msra.mxu0 0.0
  %196 = vmatprep.subr.mxu0 0.0
  %197 = vmatpush1.msra.mxu0 0.0
  %198 = vmatprep.subr.mxu0 0.0
  %199 = vmatpush1.msra.mxu0 0.0
  %200 = vmatprep.subr.mxu0 0.0
  %201 = vmatpush1.msra.mxu0 0.0
  %202 = vmatprep.subr.mxu0 0.0
  %203 = vmatpush1.msra.mxu0 0.0
  %204 = vmatprep.subr.mxu0 0.0
  %205 = vmatpush1.msra.mxu0 0.0
  %206 = vmatprep.subr.mxu0 0.0
  %207 = vmatpush1.msra.mxu0 0.0
  %208 = vmatprep.subr.mxu0 0.0
  %209 = vmatpush1.msra.mxu0 0.0
  %210 = vmatprep.subr.mxu0 0.0
  %211 = vmatpush1.msra.mxu0 0.0
  %212 = vmatprep.subr.mxu0 0.0
  %213 = vmatpush1.msra.mxu0 0.0
  %214 = vmatprep.subr.mxu0 0.0
  %215 = vmatpush1.msra.mxu0 0.0
  %216 = vmatprep.mubr.f32.mxu0 0.0
  %217 = vmatmul.mubr.f32.gmra.mrb[0].mxu0 %v105
  %v218 = vpop.f32.mrb[0].mxu0
  %v219 = vadd.f32 0.0, %v218
  %v220 = vpop.f32.mrb[0].mxu0
  %v221 = vadd.f32 0.0, %v220
  %222 = vmatprep.mubr.f32.mxu0 0.0
  %223 = vmatmul.mubr.f32.gmra.mrb[0].mxu0 %v108
  %v224 = vpop.f32.mrb[0].mxu0
  %v225 = vadd.f32 0.0, %v224
  %v226 = vpop.f32.mrb[0].mxu0
  %v227 = vadd.f32 0.0, %v226
  %228 = vmatprep.mubr.f32.mxu0 0.0
  %229 = vmatmul.mubr.f32.gmra.mrb[0].mxu0 %v111
  %v230 = vpop.f32.mrb[0].mxu0
  %v231 = vadd.f32 0.0, %v230
  %v232 = vpop.f32.mrb[0].mxu0
  %v233 = vadd.f32 0.0, %v232
  %234 = vmatprep.mubr.f32.mxu0 0.0
  %235 = vmatmul.mubr.f32.gmra.mrb[0].mxu0 %v114
  %v236 = vpop.f32.mrb[0].mxu0
  %v237 = vadd.f32 0.0, %v236
  %v238 = vpop.f32.mrb[0].mxu0
  %v239 = vadd.f32 0.0, %v238
  %240 = vmatprep.mubr.f32.mxu0 0.0
  %241 = vmatmul.mubr.f32.gmra.mrb[0].mxu0 %v117
  %v242 = vpop.f32.mrb[0].mxu0
  %v243 = vadd.f32 0.0, %v242
  %v244 = vpop.f32.mrb[0].mxu0
  %v245 = vadd.f32 0.0, %v244
  %246 = vmatprep.mubr.f32.mxu0 0.0
  %247 = vmatmul.mubr.f32.gmra.mrb[0].mxu0 %v120
  %v248 = vpop.f32.mrb[0].mxu0
  %v249 = vadd.f32 0.0, %v248
  %v250 = vpop.f32.mrb[0].mxu0
  %v251 = vadd.f32 0.0, %v250
  %252 = vmatprep.mubr.f32.mxu0 0.0
  %253 = vmatmul.mubr.f32.gmra.mrb[0].mxu0 %v123
  %v254 = vpop.f32.mrb[0].mxu0
  %v255 = vadd.f32 0.0, %v254
  %v256 = vpop.f32.mrb[0].mxu0
  %v257 = vadd.f32 0.0, %v256
  %258 = vmatprep.mubr.f32.mxu0 0.0
  %259 = vmatmul.mubr.f32.gmra.mrb[0].mxu0 %v126
  %v260 = vpop.f32.mrb[0].mxu0
  %v261 = vadd.f32 0.0, %v260
  %v262 = vpop.f32.mrb[0].mxu0
  %v263 = vadd.f32 0.0, %v262
  %264 = vmatprep.mubr.f32.mxu0 0.0
  %265 = vmatmul.mubr.f32.gmra.mrb[0].mxu0 %v129
  %v266 = vpop.f32.mrb[0].mxu0
  %v267 = vadd.f32 0.0, %v266
  %v268 = vpop.f32.mrb[0].mxu0
  %v269 = vadd.f32 0.0, %v268
  %270 = vmatprep.mubr.f32.mxu0 0.0
  %271 = vmatmul.mubr.f32.gmra.mrb[0].mxu0 %v132
  %v272 = vpop.f32.mrb[0].mxu0
  %v273 = vadd.f32 0.0, %v272
  %v274 = vpop.f32.mrb[0].mxu0
  %v275 = vadd.f32 0.0, %v274
  %276 = vmatprep.mubr.f32.mxu0 0.0
  %277 = vmatmul.mubr.f32.gmra.mrb[0].mxu0 %v135
  %v278 = vpop.f32.mrb[0].mxu0
  %v279 = vadd.f32 0.0, %v278
  %v280 = vpop.f32.mrb[0].mxu0
  %v281 = vadd.f32 0.0, %v280
  %282 = vmatprep.mubr.f32.mxu0 0.0
  %283 = vmatmul.mubr.f32.gmra.mrb[0].mxu0 %v138
  %v284 = vpop.f32.mrb[0].mxu0
  %v285 = vadd.f32 0.0, %v284
  %v286 = vpop.f32.mrb[0].mxu0
  %v287 = vadd.f32 0.0, %v286
  %288 = vmatprep.mubr.f32.mxu0 0.0
  %289 = vmatmul.mubr.f32.gmra.mrb[0].mxu0 %v141
  %v290 = vpop.f32.mrb[0].mxu0
  %v291 = vadd.f32 0.0, %v290
  %v292 = vpop.f32.mrb[0].mxu0
  %v293 = vadd.f32 0.0, %v292
  %294 = vmatprep.mubr.f32.mxu0 0.0
  %295 = vmatmul.mubr.f32.gmra.mrb[0].mxu0 %v144
  %v296 = vpop.f32.mrb[0].mxu0
  %v297 = vadd.f32 0.0, %v296
  %v298 = vpop.f32.mrb[0].mxu0
  %v299 = vadd.f32 0.0, %v298
  %300 = vmatprep.mubr.f32.mxu0 0.0
  %301 = vmatmul.mubr.f32.gmra.mrb[0].mxu0 %v147
  %v302 = vpop.f32.mrb[0].mxu0
  %v303 = vadd.f32 0.0, %v302
  %v304 = vpop.f32.mrb[0].mxu0
  %v305 = vadd.f32 0.0, %v304
  %306 = vmatprep.mubr.f32.mxu0 0.0
  %307 = vmatmul.mubr.f32.gmra.mrb[0].mxu0 %v150
  %v308 = vpop.f32.mrb[0].mxu0
  %v309 = vadd.f32 0.0, %v308
  %v310 = vpop.f32.mrb[0].mxu0
  %v311 = vadd.f32 0.0, %v310
  %312 = vdwg.mxu0
  %v313 = vadd.f32 %v47, %v219
  %v314 = vadd.f32 %v48, %v221
  %v315 = vadd.f32 %v49, %v225
  %v316 = vadd.f32 %v50, %v227
  %v317 = vadd.f32 %v51, %v231
  %v318 = vadd.f32 %v52, %v233
  %v319 = vadd.f32 %v53, %v237
  %v320 = vadd.f32 %v54, %v239
  %v321 = vadd.f32 %v55, %v243
  %v322 = vadd.f32 %v56, %v245
  %v323 = vadd.f32 %v57, %v249
  %v324 = vadd.f32 %v58, %v251
  %v325 = vadd.f32 %v59, %v255
  %v326 = vadd.f32 %v60, %v257
  %v327 = vadd.f32 %v61, %v261
  %v328 = vadd.f32 %v62, %v263
  %v329 = vadd.f32 %v63, %v267
  %v330 = vadd.f32 %v64, %v269
  %v331 = vadd.f32 %v65, %v273
  %v332 = vadd.f32 %v66, %v275
  %v333 = vadd.f32 %v67, %v279
  %v334 = vadd.f32 %v68, %v281
  %v335 = vadd.f32 %v69, %v285
  %v336 = vadd.f32 %v70, %v287
  %v337 = vadd.f32 %v71, %v291
  %v338 = vadd.f32 %v72, %v293
  %v339 = vadd.f32 %v73, %v297
  %v340 = vadd.f32 %v74, %v299
  %v341 = vadd.f32 %v75, %v303
  %v342 = vadd.f32 %v76, %v305
  %v343 = vadd.f32 %v77, %v309
  %v344 = vadd.f32 %v78, %v311
  %345 = vst [vmem:[#allocation2] sm:$0xff] %v313
  %346 = vst [vmem:[#allocation2 + $0x8] sm:$0xff] %v314
  %347 = vst [vmem:[#allocation2 + $0x10] sm:$0xff] %v315
  %348 = vst [vmem:[#allocation2 + $0x18] sm:$0xff] %v316
  %349 = vst [vmem:[#allocation2 + $0x20] sm:$0xff] %v317
  %350 = vst [vmem:[#allocation2 + $0x28] sm:$0xff] %v318
  %351 = vst [vmem:[#allocation2 + $0x30] sm:$0xff] %v319
  %352 = vst [vmem:[#allocation2 + $0x38] sm:$0xff] %v320
  %353 = vst [vmem:[#allocation2 + $0x40] sm:$0xff] %v321
  %354 = vst [vmem:[#allocation2 + $0x48] sm:$0xff] %v322
  %355 = vst [vmem:[#allocation2 + $0x50] sm:$0xff] %v323
  %356 = vst [vmem:[#allocation2 + $0x58] sm:$0xff] %v324
  %357 = vst [vmem:[#allocation2 + $0x60] sm:$0xff] %v325
  %358 = vst [vmem:[#allocation2 + $0x68] sm:$0xff] %v326
  %359 = vst [vmem:[#allocation2 + $0x70] sm:$0xff] %v327
  %360 = vst [vmem:[#allocation2 + $0x78] sm:$0xff] %v328
  %361 = vst [vmem:[#allocation2 + $0x80] sm:$0xff] %v329
  %362 = vst [vmem:[#allocation2 + $0x88] sm:$0xff] %v330
  %363 = vst [vmem:[#allocation2 + $0x90] sm:$0xff] %v331
  %364 = vst [vmem:[#allocation2 + $0x98] sm:$0xff] %v332
  %365 = vst [vmem:[#allocation2 + $0xa0] sm:$0xff] %v333
  %366 = vst [vmem:[#allocation2 + $0xa8] sm:$0xff] %v334
  %367 = vst [vmem:[#allocation2 + $0xb0] sm:$0xff] %v335
  %368 = vst [vmem:[#allocation2 + $0xb8] sm:$0xff] %v336
  %369 = vst [vmem:[#allocation2 + $0xc0] sm:$0xff] %v337
  %370 = vst [vmem:[#allocation2 + $0xc8] sm:$0xff] %v338
  %371 = vst [vmem:[#allocation2 + $0xd0] sm:$0xff] %v339
  %372 = vst [vmem:[#allocation2 + $0xd8] sm:$0xff] %v340
  %373 = vst [vmem:[#allocation2 + $0xe0] sm:$0xff] %v341
  %374 = vst [vmem:[#allocation2 + $0xe8] sm:$0xff] %v342
  %375 = vst [vmem:[#allocation2 + $0xf0] sm:$0xff] %v343
  %376 = vst [vmem:[#allocation2 + $0xf8] sm:$0xff] %v344
  // Predicated region
  $region14: #{generator_forward.20} parent=0 // pred_check
    %p377 = pneg %p11
  $region15: #{generator_forward.20} parent=0 // pred_check_branch
    %379 = sbr.rel (%p377) target = $region17
  $region16: #{generator_forward.20} parent=0 // pred_region
    %v380 = vld [vmem:[#allocation2] sm:$0xff]
    %v381 = vld [vmem:[#allocation2 + $0x8] sm:$0xff]
    %v382 = vld [vmem:[#allocation2 + $0x10] sm:$0xff]
    %v383 = vld [vmem:[#allocation2 + $0x18] sm:$0xff]
    %v384 = vld [vmem:[#allocation2 + $0x20] sm:$0xff]
    %v385 = vld [vmem:[#allocation2 + $0x28] sm:$0xff]
    %v386 = vld [vmem:[#allocation2 + $0x30] sm:$0xff]
    %v387 = vld [vmem:[#allocation2 + $0x38] sm:$0xff]
    %v388 = vld [vmem:[#allocation2 + $0x40] sm:$0xff]
    %v389 = vld [vmem:[#allocation2 + $0x48] sm:$0xff]
    %v390 = vld [vmem:[#allocation2 + $0x50] sm:$0xff]
    %v391 = vld [vmem:[#allocation2 + $0x58] sm:$0xff]
    %v392 = vld [vmem:[#allocation2 + $0x60] sm:$0xff]
    %v393 = vld [vmem:[#allocation2 + $0x68] sm:$0xff]
    %v394 = vld [vmem:[#allocation2 + $0x70] sm:$0xff]
    %v395 = vld [vmem:[#allocation2 + $0x78] sm:$0xff]
    %v396 = vld [vmem:[#allocation2 + $0x80] sm:$0xff]
    %v397 = vld [vmem:[#allocation2 + $0x88] sm:$0xff]
    %v398 = vld [vmem:[#allocation2 + $0x90] sm:$0xff]
    %v399 = vld [vmem:[#allocation2 + $0x98] sm:$0xff]
    %v400 = vld [vmem:[#allocation2 + $0xa0] sm:$0xff]
    %v401 = vld [vmem:[#allocation2 + $0xa8] sm:$0xff]
    %v402 = vld [vmem:[#allocation2 + $0xb0] sm:$0xff]
    %v403 = vld [vmem:[#allocation2 + $0xb8] sm:$0xff]
    %v404 = vld [vmem:[#allocation2 + $0xc0] sm:$0xff]
    %v405 = vld [vmem:[#allocation2 + $0xc8] sm:$0xff]
    %v406 = vld [vmem:[#allocation2 + $0xd0] sm:$0xff]
    %v407 = vld [vmem:[#allocation2 + $0xd8] sm:$0xff]
    %v408 = vld [vmem:[#allocation2 + $0xe0] sm:$0xff]
    %v409 = vld [vmem:[#allocation2 + $0xe8] sm:$0xff]
    %v410 = vld [vmem:[#allocation2 + $0xf0] sm:$0xff]
    %v411 = vld [vmem:[#allocation2 + $0xf8] sm:$0xff]
    %412 = vst [vmem:[%s2] sm:$0xff] %v380
    %413 = vst [vmem:[%s2 + $0x8] sm:$0xff] %v381
    %414 = vst [vmem:[%s2 + $0x10] sm:$0xff] %v382
    %415 = vst [vmem:[%s2 + $0x18] sm:$0xff] %v383
    %416 = vst [vmem:[%s2 + $0x20] sm:$0xff] %v384
    %417 = vst [vmem:[%s2 + $0x28] sm:$0xff] %v385
    %418 = vst [vmem:[%s2 + $0x30] sm:$0xff] %v386
    %419 = vst [vmem:[%s2 + $0x38] sm:$0xff] %v387
    %420 = vst [vmem:[%s2 + $0x40] sm:$0xff] %v388
    %421 = vst [vmem:[%s2 + $0x48] sm:$0xff] %v389
    %422 = vst [vmem:[%s2 + $0x50] sm:$0xff] %v390
    %423 = vst [vmem:[%s2 + $0x58] sm:$0xff] %v391
    %424 = vst [vmem:[%s2 + $0x60] sm:$0xff] %v392
    %425 = vst [vmem:[%s2 + $0x68] sm:$0xff] %v393
    %426 = vst [vmem:[%s2 + $0x70] sm:$0xff] %v394
    %427 = vst [vmem:[%s2 + $0x78] sm:$0xff] %v395
    %428 = vst [vmem:[%s2 + $0x80] sm:$0xff] %v396
    %429 = vst [vmem:[%s2 + $0x88] sm:$0xff] %v397
    %430 = vst [vmem:[%s2 + $0x90] sm:$0xff] %v398
    %431 = vst [vmem:[%s2 + $0x98] sm:$0xff] %v399
    %432 = vst [vmem:[%s2 + $0xa0] sm:$0xff] %v400
    %433 = vst [vmem:[%s2 + $0xa8] sm:$0xff] %v401
    %434 = vst [vmem:[%s2 + $0xb0] sm:$0xff] %v402
    %435 = vst [vmem:[%s2 + $0xb8] sm:$0xff] %v403
    %436 = vst [vmem:[%s2 + $0xc0] sm:$0xff] %v404
    %437 = vst [vmem:[%s2 + $0xc8] sm:$0xff] %v405
    %438 = vst [vmem:[%s2 + $0xd0] sm:$0xff] %v406
    %439 = vst [vmem:[%s2 + $0xd8] sm:$0xff] %v407
    %440 = vst [vmem:[%s2 + $0xe0] sm:$0xff] %v408
    %441 = vst [vmem:[%s2 + $0xe8] sm:$0xff] %v409
    %442 = vst [vmem:[%s2 + $0xf0] sm:$0xff] %v410
    %443 = vst [vmem:[%s2 + $0xf8] sm:$0xff] %v411
  $region17: #{generator_forward.20} parent=0 // pred_fallthru
    _
  // Predicated region
  $region18: #{generator_forward.20} parent=0 // pred_check
    _
  $region19: #{generator_forward.20} parent=0 // pred_check_branch
    %445 = sbr.rel (0) target = $region21
  $region20: #{generator_forward.20} parent=0 // pred_region
    _
  $region21: #{generator_forward.20} parent=0 // pred_fallthru
    _
  // Predicated region
  $region22: #{generator_forward.20} parent=0 // pred_check
    _
  $region23: #{generator_forward.20} parent=0 // pred_check_branch
    %447 = sbr.rel (0) target = $region25
  $region24: #{generator_forward.20} parent=0 // pred_region
    _
  $region25: #{generator_forward.20} parent=0 // pred_fallthru
    _

// kernel: tile.63
$region0: #{tile.63}
  #allocation0 [shape = 's32[1]{0}', space=sflag, size = 0x4, scoped, tag = 'scoped memory for tile.63']
  %s0 = inlined_call_operand.vmem [shape: f32[16], index: 0, kind: input, shape index: {}]
  %s1 = inlined_call_operand.vmem [shape: f32[16,16], index: 1, kind: output, shape index: {}]
  // Predicated region
  $region2: #{tile.63} parent=0 // pred_check
    _
  $region3: #{tile.63} parent=0 // pred_check_branch
    %3 = sbr.rel (0) target = $region5
  $region4: #{tile.63} parent=0 // pred_region
    _
  $region5: #{tile.63} parent=0 // pred_fallthru
    _
  %v4 = vld [vmem:[%s0] ss:$0 sm:$0xff]
  %5 = vst [vmem:[%s1] sm:$0xff] %v4
  %s6 = scalar_lea.vmem %s1, 8
  %7 = vst [vmem:[%s6] sm:$0xff] %v4

// kernel: tile.64
$region0: #{tile.64}
  %s0 = inlined_call_operand.vmem [shape: f32[16,16], index: 0, kind: input, shape index: {}]
  %s1 = inlined_call_operand.vmem [shape: f32[1,256], index: 1, kind: output, shape index: {}]
  $region1: #{tile.64} parent=0
    #allocation0 [shape = 'u8[8192]{0}', space=vmem, size = 0x2000, scoped, tag = 'scoped mem for output reshape']
    %s2 = smov 3
    %v3 = vld [vmem:[%s0] ss:$8 sm:%s2]
    %vm4 = vcmask 130048
    %5 = vst.msk [vmem:[#allocation0] ss:$8 sm:$0x3] %vm4, %v3
    %s6 = scalar_lea.vmem %s0, 7
    %s7 = smov 3
    %v8 = vld [vmem:[%s6] ss:$8 sm:%s7]
    %9 = vrot.lane.b32.xlu0 %v8, 112
    %v10 = vpop.permute.xlu0 %9
    %vm11 = vcmask 1048448
    %12 = vst.msk [vmem:[#allocation0] ss:$8 sm:$0x3] %vm11, %v10
    %s13 = scalar_lea.vmem %s0, 6
    %s14 = smov 3
    %v15 = vld [vmem:[%s13] ss:$8 sm:%s14]
    %16 = vrot.lane.b32.xlu0 %v15, 96
    %v17 = vpop.permute.xlu0 %16
    %vm18 = vcmask 917248
    %19 = vst.msk [vmem:[#allocation0] ss:$8 sm:$0x3] %vm18, %v17
    %s20 = scalar_lea.vmem %s0, 5
    %s21 = smov 3
    %v22 = vld [vmem:[%s20] ss:$8 sm:%s21]
    %23 = vrot.lane.b32.xlu0 %v22, 80
    %v24 = vpop.permute.xlu0 %23
    %vm25 = vcmask 786048
    %26 = vst.msk [vmem:[#allocation0] ss:$8 sm:$0x3] %vm25, %v24
    %s27 = scalar_lea.vmem %s0, 4
    %s28 = smov 3
    %v29 = vld [vmem:[%s27] ss:$8 sm:%s28]
    %30 = vrot.lane.b32.xlu0 %v29, 64
    %v31 = vpop.permute.xlu0 %30
    %vm32 = vcmask 654848
    %33 = vst.msk [vmem:[#allocation0] ss:$8 sm:$0x3] %vm32, %v31
    %s34 = scalar_lea.vmem %s0, 3
    %s35 = smov 3
    %v36 = vld [vmem:[%s34] ss:$8 sm:%s35]
    %37 = vrot.lane.b32.xlu0 %v36, 48
    %v38 = vpop.permute.xlu0 %37
    %vm39 = vcmask 523648
    %40 = vst.msk [vmem:[#allocation0] ss:$8 sm:$0x3] %vm39, %v38
    %s41 = scalar_lea.vmem %s0, 2
    %s42 = smov 3
    %v43 = vld [vmem:[%s41] ss:$8 sm:%s42]
    %44 = vrot.lane.b32.xlu0 %v43, 32
    %v45 = vpop.permute.xlu0 %44
    %vm46 = vcmask 392448
    %47 = vst.msk [vmem:[#allocation0] ss:$8 sm:$0x3] %vm46, %v45
    %s48 = scalar_lea.vmem %s0, 1
    %s49 = smov 3
    %v50 = vld [vmem:[%s48] ss:$8 sm:%s49]
    %51 = vrot.lane.b32.xlu0 %v50, 16
    %v52 = vpop.permute.xlu0 %51
    %vm53 = vcmask 261248
    %54 = vst.msk [vmem:[#allocation0] ss:$8 sm:$0x3] %vm53, %v52
    %s56 = sshllo.u32 0, 1
    %v58 = vld [vmem:[#allocation0] sm:%s56]
    %s59 = sshllo.u32 0, 1
    %60 = vst [vmem:[%s1] sm:%s59] %v58
    %s61 = scalar_lea.vmem [#allocation0], 8
    %v62 = vld [vmem:[%s61] sm:%s56]
    %s63 = sshllo.u32 0, 1
    %s64 = scalar_lea.vmem %s1, 1
    %65 = vst [vmem:[%s64] sm:%s63] %v62

// kernel: generator_forward.21
$region0: #{generator_forward.21}
  #allocation0 [shape = 'u32[]', space=smem, size = 0x4, offset = 0x4, fixed_abs, tag = 'smem constant byte address 0x4 - core index']
  #allocation1 [shape = 'u32[144,128]{1,0:T(1,128)}', space=vmem, size = 0x12000, scoped, tag = 'internal scratch']
  %s0 = inlined_call_operand.vmem [shape: f32[32,256], index: 0, kind: input, shape index: {}]
  %s1 = inlined_call_operand.vmem [shape: f32[1,256], index: 1, kind: output, shape index: {0}]
  %s2 = inlined_call_operand.vmem [shape: f32[1,256], index: 2, kind: output, shape index: {1}]
  %3 = xla_tuple %s1, %s2
  %s4 = sld [smem:[#allocation0]]
  $region26: #{generator_forward.21} parent=0
    _
  %s6 = ssub.s32 1, %s4
  %s7 = scalar_select 0, %s6, %s4
  // Predicated region
  $region2: #{generator_forward.21} parent=0 // pred_check
    _
  $region3: #{generator_forward.21} parent=0 // pred_check_branch
    %9 = sbr.rel (0) target = $region5
  $region4: #{generator_forward.21} parent=0 // pred_region
    _
  $region5: #{generator_forward.21} parent=0 // pred_fallthru
    _
  %p10 = scmp.eq.s32.totalorder 0, 0
  // Predicated region
  $region6: #{generator_forward.21} parent=0 // pred_check
    %p11 = pneg %p10
  $region7: #{generator_forward.21} parent=0 // pred_check_branch
    %13 = sbr.rel (%p11) target = $region9
  $region8: #{generator_forward.21} parent=0 // pred_region
    %v14 = vlaneseq
    %vm15 = vcmp.ge.s32.totalorder %v14, 0
    %vm16 = vcmp.lt.s32.totalorder %v14, 256
    %vm17 = vmand %vm15, %vm16
    %18 = vst.msk [vmem:[%s1] sm:$0x3] %vm17, 0.0
    %19 = vst.msk [vmem:[%s2] sm:$0x3] %vm17, 0.0
  $region9: #{generator_forward.21} parent=0 // pred_fallthru
    _
  %v20 = vld [vmem:[%s0] sm:$0xff]
  %v21 = vld [vmem:[%s0 + $0x8] sm:$0xff]
  %v22 = vld [vmem:[%s0 + $0x10] sm:$0xff]
  %v23 = vld [vmem:[%s0 + $0x18] sm:$0xff]
  %v24 = vld [vmem:[%s0 + $0x20] sm:$0xff]
  %v25 = vld [vmem:[%s0 + $0x28] sm:$0xff]
  %v26 = vld [vmem:[%s0 + $0x30] sm:$0xff]
  %v27 = vld [vmem:[%s0 + $0x38] sm:$0xff]
  %v28 = vld [vmem:[%s1] sm:$0x3]
  %v29 = vadd.f32 %v20, %v22
  %v30 = vadd.f32 %v29, %v24
  %v31 = vadd.f32 %v30, %v26
  %v32 = vrot.slane %v31, 4
  %v33 = vadd.f32 %v31, %v32
  %v34 = vrot.slane %v33, 2
  %v35 = vadd.f32 %v33, %v34
  %v36 = vrot.slane %v35, 1
  %v37 = vadd.f32 %v35, %v36
  %v38 = vadd.f32 %v21, %v23
  %v39 = vadd.f32 %v38, %v25
  %v40 = vadd.f32 %v39, %v27
  %v41 = vrot.slane %v40, 4
  %v42 = vadd.f32 %v40, %v41
  %v43 = vrot.slane %v42, 2
  %v44 = vadd.f32 %v42, %v43
  %v45 = vrot.slane %v44, 1
  %v46 = vadd.f32 %v44, %v45
  %v49 = vcombine.low %v37, %v46
  %v51 = vunpack.c.l.s4 1966171168
  %v52 = vunpack.c.0.s8 %v51
  %v53 = vlaneseq
  %v54 = vshrl.u32 %v53, 7
  %v55 = vsub.s32 %v52, %v54
  %v56 = vrot.slane %v49, %v55
  %v58 = vunpack.c.l.s4 1966171168
  %v59 = vunpack.c.0.s8 %v58
  %v60 = vlaneseq
  %v61 = vshrl.u32 %v60, 7
  %v62 = vsub.s32 %v59, %v61
  %v63 = vrot.slane %v56, %v62
  %v65 = vadd.f32 %v28, %v63
  %v66 = vlaneseq
  %vm67 = vcmp.ge.s32.totalorder %v66, 0
  %vm68 = vcmp.lt.s32.totalorder %v66, 256
  %vm69 = vmand %vm67, %vm68
  %70 = vst.msk [vmem:[%s1] sm:$0x3] %vm69, %v65
  %v71 = vld [vmem:[%s2] sm:$0x3]
  %v72 = vmul.f32 %v20, %v20
  %v73 = vmul.f32 %v21, %v21
  %v74 = vmul.f32 %v22, %v22
  %v75 = vmul.f32 %v23, %v23
  %v76 = vmul.f32 %v24, %v24
  %v77 = vmul.f32 %v25, %v25
  %v78 = vmul.f32 %v26, %v26
  %v79 = vmul.f32 %v27, %v27
  %v80 = vadd.f32 %v72, %v74
  %v81 = vadd.f32 %v80, %v76
  %v82 = vadd.f32 %v81, %v78
  %v83 = vrot.slane %v82, 4
  %v84 = vadd.f32 %v82, %v83
  %v85 = vrot.slane %v84, 2
  %v86 = vadd.f32 %v84, %v85
  %v87 = vrot.slane %v86, 1
  %v88 = vadd.f32 %v86, %v87
  %v89 = vadd.f32 %v73, %v75
  %v90 = vadd.f32 %v89, %v77
  %v91 = vadd.f32 %v90, %v79
  %v92 = vrot.slane %v91, 4
  %v93 = vadd.f32 %v91, %v92
  %v94 = vrot.slane %v93, 2
  %v95 = vadd.f32 %v93, %v94
  %v96 = vrot.slane %v95, 1
  %v97 = vadd.f32 %v95, %v96
  %v100 = vcombine.low %v88, %v97
  %v102 = vunpack.c.l.s4 1966171168
  %v103 = vunpack.c.0.s8 %v102
  %v104 = vlaneseq
  %v105 = vshrl.u32 %v104, 7
  %v106 = vsub.s32 %v103, %v105
  %v107 = vrot.slane %v100, %v106
  %v109 = vunpack.c.l.s4 1966171168
  %v110 = vunpack.c.0.s8 %v109
  %v111 = vlaneseq
  %v112 = vshrl.u32 %v111, 7
  %v113 = vsub.s32 %v110, %v112
  %v114 = vrot.slane %v107, %v113
  %v116 = vadd.f32 %v71, %v114
  %117 = vst.msk [vmem:[%s2] sm:$0x3] %vm69, %v116
  // Predicated region
  $region10: #{generator_forward.21} parent=0 // pred_check
    _
  $region11: #{generator_forward.21} parent=0 // pred_check_branch
    %119 = sbr.rel (0) target = $region13
  $region12: #{generator_forward.21} parent=0 // pred_region
    _
  $region13: #{generator_forward.21} parent=0 // pred_fallthru
    _
  // Predicated region
  $region14: #{generator_forward.21} parent=0 // pred_check
    _
  $region15: #{generator_forward.21} parent=0 // pred_check_branch
    %121 = sbr.rel (0) target = $region17
  $region16: #{generator_forward.21} parent=0 // pred_region
    _
  $region17: #{generator_forward.21} parent=0 // pred_fallthru
    _
  // Predicated region
  $region18: #{generator_forward.21} parent=0 // pred_check
    _
  $region19: #{generator_forward.21} parent=0 // pred_check_branch
    %123 = sbr.rel (0) target = $region21
  $region20: #{generator_forward.21} parent=0 // pred_region
    _
  $region21: #{generator_forward.21} parent=0 // pred_fallthru
    _
  // Predicated region
  $region22: #{generator_forward.21} parent=0 // pred_check
    _
  $region23: #{generator_forward.21} parent=0 // pred_check_branch
    %125 = sbr.rel (0) target = $region25
  $region24: #{generator_forward.21} parent=0 // pred_region
    _
  $region25: #{generator_forward.21} parent=0 // pred_fallthru
    _

// kernel: generator_forward.22
$region0: #{generator_forward.22}
  #allocation0 [shape = 'u32[]', space=smem, size = 0x4, offset = 0x4, fixed_abs, tag = 'smem constant byte address 0x4 - core index']
  #allocation1 [shape = 'u32[144,128]{1,0:T(1,128)}', space=vmem, size = 0x12000, scoped, tag = 'internal scratch']
  %s0 = inlined_call_operand.vmem [shape: f32[32,256], index: 0, kind: input, shape index: {}]
  %s1 = inlined_call_operand.vmem [shape: f32[1,256], index: 1, kind: input, shape index: {}]
  %s2 = inlined_call_operand.vmem [shape: f32[1,256], index: 2, kind: input, shape index: {}]
  %s3 = inlined_call_operand.vmem [shape: f32[32,256], index: 3, kind: output, shape index: {}]
  %s4 = sld [smem:[#allocation0]]
  $region22: #{generator_forward.22} parent=0
    _
  %s6 = ssub.s32 1, %s4
  %s7 = scalar_select 0, %s6, %s4
  // Predicated region
  $region2: #{generator_forward.22} parent=0 // pred_check
    _
  $region3: #{generator_forward.22} parent=0 // pred_check_branch
    %9 = sbr.rel (0) target = $region5
  $region4: #{generator_forward.22} parent=0 // pred_region
    _
  $region5: #{generator_forward.22} parent=0 // pred_fallthru
    _
  // Predicated region
  $region6: #{generator_forward.22} parent=0 // pred_check
    _
  $region7: #{generator_forward.22} parent=0 // pred_check_branch
    %11 = sbr.rel (0) target = $region9
  $region8: #{generator_forward.22} parent=0 // pred_region
    _
  $region9: #{generator_forward.22} parent=0 // pred_fallthru
    _
  // Predicated region
  $region10: #{generator_forward.22} parent=0 // pred_check
    _
  $region11: #{generator_forward.22} parent=0 // pred_check_branch
    %13 = sbr.rel (0) target = $region13
  $region12: #{generator_forward.22} parent=0 // pred_region
    _
  $region13: #{generator_forward.22} parent=0 // pred_fallthru
    _
  %v14 = vld [vmem:[%s0] sm:$0xff]
  %v15 = vld [vmem:[%s0 + $0x8] sm:$0xff]
  %v16 = vld [vmem:[%s0 + $0x10] sm:$0xff]
  %v17 = vld [vmem:[%s0 + $0x18] sm:$0xff]
  %v18 = vld [vmem:[%s0 + $0x20] sm:$0xff]
  %v19 = vld [vmem:[%s0 + $0x28] sm:$0xff]
  %v20 = vld [vmem:[%s0 + $0x30] sm:$0xff]
  %v21 = vld [vmem:[%s0 + $0x38] sm:$0xff]
  %v22 = vld [vmem:[%s1] sm:$0x3]
  %v24 = vlaneseq
  %v25 = vshrl.u32 %v24, 7
  %v26 = vsub.s32 0, %v25
  %v27 = vrot.slane %v22, %v26
  %v28 = vlaneseq
  %v29 = vshrl.u32 %v28, 7
  %v30 = vsub.s32 1, %v29
  %v31 = vrot.slane %v22, %v30
  %v34 = vmul.f32 %v14, %v27
  %v35 = vmul.f32 %v15, %v31
  %v36 = vmul.f32 %v16, %v27
  %v37 = vmul.f32 %v17, %v31
  %v38 = vmul.f32 %v18, %v27
  %v39 = vmul.f32 %v19, %v31
  %v40 = vmul.f32 %v20, %v27
  %v41 = vmul.f32 %v21, %v31
  %v42 = vld [vmem:[%s2] sm:$0x3]
  %v44 = vlaneseq
  %v45 = vshrl.u32 %v44, 7
  %v46 = vsub.s32 0, %v45
  %v47 = vrot.slane %v42, %v46
  %v48 = vlaneseq
  %v49 = vshrl.u32 %v48, 7
  %v50 = vsub.s32 1, %v49
  %v51 = vrot.slane %v42, %v50
  %v54 = vadd.f32 %v34, %v47
  %v55 = vadd.f32 %v35, %v51
  %v56 = vadd.f32 %v36, %v47
  %v57 = vadd.f32 %v37, %v51
  %v58 = vadd.f32 %v38, %v47
  %v59 = vadd.f32 %v39, %v51
  %v60 = vadd.f32 %v40, %v47
  %v61 = vadd.f32 %v41, %v51
  %vm62 = vcmp.gt.f32.partialorder %v54, 0.0
  %vm63 = vcmp.gt.f32.partialorder %v55, 0.0
  %vm64 = vcmp.gt.f32.partialorder %v56, 0.0
  %vm65 = vcmp.gt.f32.partialorder %v57, 0.0
  %vm66 = vcmp.gt.f32.partialorder %v58, 0.0
  %vm67 = vcmp.gt.f32.partialorder %v59, 0.0
  %vm68 = vcmp.gt.f32.partialorder %v60, 0.0
  %vm69 = vcmp.gt.f32.partialorder %v61, 0.0
  %v70 = vmul.f32 %v54, 0.01
  %v71 = vmul.f32 %v55, 0.01
  %v72 = vmul.f32 %v56, 0.01
  %v73 = vmul.f32 %v57, 0.01
  %v74 = vmul.f32 %v58, 0.01
  %v75 = vmul.f32 %v59, 0.01
  %v76 = vmul.f32 %v60, 0.01
  %v77 = vmul.f32 %v61, 0.01
  %v78 = vsel %vm62, %v54, %v70
  %v79 = vsel %vm63, %v55, %v71
  %v80 = vsel %vm64, %v56, %v72
  %v81 = vsel %vm65, %v57, %v73
  %v82 = vsel %vm66, %v58, %v74
  %v83 = vsel %vm67, %v59, %v75
  %v84 = vsel %vm68, %v60, %v76
  %v85 = vsel %vm69, %v61, %v77
  %86 = vst [vmem:[%s3] sm:$0xff] %v78
  %87 = vst [vmem:[%s3 + $0x8] sm:$0xff] %v79
  %88 = vst [vmem:[%s3 + $0x10] sm:$0xff] %v80
  %89 = vst [vmem:[%s3 + $0x18] sm:$0xff] %v81
  %90 = vst [vmem:[%s3 + $0x20] sm:$0xff] %v82
  %91 = vst [vmem:[%s3 + $0x28] sm:$0xff] %v83
  %92 = vst [vmem:[%s3 + $0x30] sm:$0xff] %v84
  %93 = vst [vmem:[%s3 + $0x38] sm:$0xff] %v85
  // Predicated region
  $region14: #{generator_forward.22} parent=0 // pred_check
    _
  $region15: #{generator_forward.22} parent=0 // pred_check_branch
    %95 = sbr.rel (0) target = $region17
  $region16: #{generator_forward.22} parent=0 // pred_region
    _
  $region17: #{generator_forward.22} parent=0 // pred_fallthru
    _
  // Predicated region
  $region18: #{generator_forward.22} parent=0 // pred_check
    _
  $region19: #{generator_forward.22} parent=0 // pred_check_branch
    %97 = sbr.rel (0) target = $region21
  $region20: #{generator_forward.22} parent=0 // pred_region
    _
  $region21: #{generator_forward.22} parent=0 // pred_fallthru
    _

// kernel: generator_forward.23
$region0: #{generator_forward.23}
  #allocation0 [shape = 'u32[]', space=smem, size = 0x4, offset = 0x4, fixed_abs, tag = 'smem constant byte address 0x4 - core index']
  #allocation1 [shape = 'u32[144,128]{1,0:T(1,128)}', space=vmem, size = 0x12000, scoped, tag = 'internal scratch']
  #allocation2 [shape = 'f32[512,128]{1,0:T(8,128)}', space=vmem, size = 0x40000, scoped, tag = 'scratch operand']
  %s0 = inlined_call_operand.vmem [shape: f32[512,16], index: 0, kind: input, shape index: {}]
  %s1 = inlined_call_operand.vmem [shape: f32[16,128], index: 1, kind: input, shape index: {}]
  %s2 = inlined_call_operand.vmem [shape: f32[512,128], index: 2, kind: output, shape index: {}]
  %s3 = sld [smem:[#allocation0]]
  $region26: #{generator_forward.23} parent=0
    _
  %s5 = ssub.s32 1, %s3
  %s6 = scalar_select 0, %s5, %s3
  // Predicated region
  $region2: #{generator_forward.23} parent=0 // pred_check
    _
  $region3: #{generator_forward.23} parent=0 // pred_check_branch
    %8 = sbr.rel (0) target = $region5
  $region4: #{generator_forward.23} parent=0 // pred_region
    _
  $region5: #{generator_forward.23} parent=0 // pred_fallthru
    _
  // Predicated region
  $region6: #{generator_forward.23} parent=0 // pred_check
    _
  $region7: #{generator_forward.23} parent=0 // pred_check_branch
    %10 = sbr.rel (0) target = $region9
  $region8: #{generator_forward.23} parent=0 // pred_region
    _
  $region9: #{generator_forward.23} parent=0 // pred_fallthru
    _
  %p11 = scmp.eq.s32.totalorder 0, 0
  // Predicated region
  $region10: #{generator_forward.23} parent=0 // pred_check
    %p12 = pneg %p11
  $region11: #{generator_forward.23} parent=0 // pred_check_branch
    %14 = sbr.rel (%p12) target = $region13
  $region12: #{generator_forward.23} parent=0 // pred_region
    %15 = vst [vmem:[#allocation2] sm:$0xff] 0.0
    %16 = vst [vmem:[#allocation2 + $0x8] sm:$0xff] 0.0
    %17 = vst [vmem:[#allocation2 + $0x10] sm:$0xff] 0.0
    %18 = vst [vmem:[#allocation2 + $0x18] sm:$0xff] 0.0
    %19 = vst [vmem:[#allocation2 + $0x20] sm:$0xff] 0.0
    %20 = vst [vmem:[#allocation2 + $0x28] sm:$0xff] 0.0
    %21 = vst [vmem:[#allocation2 + $0x30] sm:$0xff] 0.0
    %22 = vst [vmem:[#allocation2 + $0x38] sm:$0xff] 0.0
    %23 = vst [vmem:[#allocation2 + $0x40] sm:$0xff] 0.0
    %24 = vst [vmem:[#allocation2 + $0x48] sm:$0xff] 0.0
    %25 = vst [vmem:[#allocation2 + $0x50] sm:$0xff] 0.0
    %26 = vst [vmem:[#allocation2 + $0x58] sm:$0xff] 0.0
    %27 = vst [vmem:[#allocation2 + $0x60] sm:$0xff] 0.0
    %28 = vst [vmem:[#allocation2 + $0x68] sm:$0xff] 0.0
    %29 = vst [vmem:[#allocation2 + $0x70] sm:$0xff] 0.0
    %30 = vst [vmem:[#allocation2 + $0x78] sm:$0xff] 0.0
    %31 = vst [vmem:[#allocation2 + $0x80] sm:$0xff] 0.0
    %32 = vst [vmem:[#allocation2 + $0x88] sm:$0xff] 0.0
    %33 = vst [vmem:[#allocation2 + $0x90] sm:$0xff] 0.0
    %34 = vst [vmem:[#allocation2 + $0x98] sm:$0xff] 0.0
    %35 = vst [vmem:[#allocation2 + $0xa0] sm:$0xff] 0.0
    %36 = vst [vmem:[#allocation2 + $0xa8] sm:$0xff] 0.0
    %37 = vst [vmem:[#allocation2 + $0xb0] sm:$0xff] 0.0
    %38 = vst [vmem:[#allocation2 + $0xb8] sm:$0xff] 0.0
    %39 = vst [vmem:[#allocation2 + $0xc0] sm:$0xff] 0.0
    %40 = vst [vmem:[#allocation2 + $0xc8] sm:$0xff] 0.0
    %41 = vst [vmem:[#allocation2 + $0xd0] sm:$0xff] 0.0
    %42 = vst [vmem:[#allocation2 + $0xd8] sm:$0xff] 0.0
    %43 = vst [vmem:[#allocation2 + $0xe0] sm:$0xff] 0.0
    %44 = vst [vmem:[#allocation2 + $0xe8] sm:$0xff] 0.0
    %45 = vst [vmem:[#allocation2 + $0xf0] sm:$0xff] 0.0
    %46 = vst [vmem:[#allocation2 + $0xf8] sm:$0xff] 0.0
    %47 = vst [vmem:[#allocation2 + $0x100] sm:$0xff] 0.0
    %48 = vst [vmem:[#allocation2 + $0x108] sm:$0xff] 0.0
    %49 = vst [vmem:[#allocation2 + $0x110] sm:$0xff] 0.0
    %50 = vst [vmem:[#allocation2 + $0x118] sm:$0xff] 0.0
    %51 = vst [vmem:[#allocation2 + $0x120] sm:$0xff] 0.0
    %52 = vst [vmem:[#allocation2 + $0x128] sm:$0xff] 0.0
    %53 = vst [vmem:[#allocation2 + $0x130] sm:$0xff] 0.0
    %54 = vst [vmem:[#allocation2 + $0x138] sm:$0xff] 0.0
    %55 = vst [vmem:[#allocation2 + $0x140] sm:$0xff] 0.0
    %56 = vst [vmem:[#allocation2 + $0x148] sm:$0xff] 0.0
    %57 = vst [vmem:[#allocation2 + $0x150] sm:$0xff] 0.0
    %58 = vst [vmem:[#allocation2 + $0x158] sm:$0xff] 0.0
    %59 = vst [vmem:[#allocation2 + $0x160] sm:$0xff] 0.0
    %60 = vst [vmem:[#allocation2 + $0x168] sm:$0xff] 0.0
    %61 = vst [vmem:[#allocation2 + $0x170] sm:$0xff] 0.0
    %62 = vst [vmem:[#allocation2 + $0x178] sm:$0xff] 0.0
    %63 = vst [vmem:[#allocation2 + $0x180] sm:$0xff] 0.0
    %64 = vst [vmem:[#allocation2 + $0x188] sm:$0xff] 0.0
    %65 = vst [vmem:[#allocation2 + $0x190] sm:$0xff] 0.0
    %66 = vst [vmem:[#allocation2 + $0x198] sm:$0xff] 0.0
    %67 = vst [vmem:[#allocation2 + $0x1a0] sm:$0xff] 0.0
    %68 = vst [vmem:[#allocation2 + $0x1a8] sm:$0xff] 0.0
    %69 = vst [vmem:[#allocation2 + $0x1b0] sm:$0xff] 0.0
    %70 = vst [vmem:[#allocation2 + $0x1b8] sm:$0xff] 0.0
    %71 = vst [vmem:[#allocation2 + $0x1c0] sm:$0xff] 0.0
    %72 = vst [vmem:[#allocation2 + $0x1c8] sm:$0xff] 0.0
    %73 = vst [vmem:[#allocation2 + $0x1d0] sm:$0xff] 0.0
    %74 = vst [vmem:[#allocation2 + $0x1d8] sm:$0xff] 0.0
    %75 = vst [vmem:[#allocation2 + $0x1e0] sm:$0xff] 0.0
    %76 = vst [vmem:[#allocation2 + $0x1e8] sm:$0xff] 0.0
    %77 = vst [vmem:[#allocation2 + $0x1f0] sm:$0xff] 0.0
    %78 = vst [vmem:[#allocation2 + $0x1f8] sm:$0xff] 0.0
  $region13: #{generator_forward.23} parent=0 // pred_fallthru
    _
  %v79 = vld [vmem:[#allocation2] sm:$0xff]
  %v80 = vld [vmem:[#allocation2 + $0x8] sm:$0xff]
  %v81 = vld [vmem:[#allocation2 + $0x10] sm:$0xff]
  %v82 = vld [vmem:[#allocation2 + $0x18] sm:$0xff]
  %v83 = vld [vmem:[#allocation2 + $0x20] sm:$0xff]
  %v84 = vld [vmem:[#allocation2 + $0x28] sm:$0xff]
  %v85 = vld [vmem:[#allocation2 + $0x30] sm:$0xff]
  %v86 = vld [vmem:[#allocation2 + $0x38] sm:$0xff]
  %v87 = vld [vmem:[#allocation2 + $0x40] sm:$0xff]
  %v88 = vld [vmem:[#allocation2 + $0x48] sm:$0xff]
  %v89 = vld [vmem:[#allocation2 + $0x50] sm:$0xff]
  %v90 = vld [vmem:[#allocation2 + $0x58] sm:$0xff]
  %v91 = vld [vmem:[#allocation2 + $0x60] sm:$0xff]
  %v92 = vld [vmem:[#allocation2 + $0x68] sm:$0xff]
  %v93 = vld [vmem:[#allocation2 + $0x70] sm:$0xff]
  %v94 = vld [vmem:[#allocation2 + $0x78] sm:$0xff]
  %v95 = vld [vmem:[#allocation2 + $0x80] sm:$0xff]
  %v96 = vld [vmem:[#allocation2 + $0x88] sm:$0xff]
  %v97 = vld [vmem:[#allocation2 + $0x90] sm:$0xff]
  %v98 = vld [vmem:[#allocation2 + $0x98] sm:$0xff]
  %v99 = vld [vmem:[#allocation2 + $0xa0] sm:$0xff]
  %v100 = vld [vmem:[#allocation2 + $0xa8] sm:$0xff]
  %v101 = vld [vmem:[#allocation2 + $0xb0] sm:$0xff]
  %v102 = vld [vmem:[#allocation2 + $0xb8] sm:$0xff]
  %v103 = vld [vmem:[#allocation2 + $0xc0] sm:$0xff]
  %v104 = vld [vmem:[#allocation2 + $0xc8] sm:$0xff]
  %v105 = vld [vmem:[#allocation2 + $0xd0] sm:$0xff]
  %v106 = vld [vmem:[#allocation2 + $0xd8] sm:$0xff]
  %v107 = vld [vmem:[#allocation2 + $0xe0] sm:$0xff]
  %v108 = vld [vmem:[#allocation2 + $0xe8] sm:$0xff]
  %v109 = vld [vmem:[#allocation2 + $0xf0] sm:$0xff]
  %v110 = vld [vmem:[#allocation2 + $0xf8] sm:$0xff]
  %v111 = vld [vmem:[#allocation2 + $0x100] sm:$0xff]
  %v112 = vld [vmem:[#allocation2 + $0x108] sm:$0xff]
  %v113 = vld [vmem:[#allocation2 + $0x110] sm:$0xff]
  %v114 = vld [vmem:[#allocation2 + $0x118] sm:$0xff]
  %v115 = vld [vmem:[#allocation2 + $0x120] sm:$0xff]
  %v116 = vld [vmem:[#allocation2 + $0x128] sm:$0xff]
  %v117 = vld [vmem:[#allocation2 + $0x130] sm:$0xff]
  %v118 = vld [vmem:[#allocation2 + $0x138] sm:$0xff]
  %v119 = vld [vmem:[#allocation2 + $0x140] sm:$0xff]
  %v120 = vld [vmem:[#allocation2 + $0x148] sm:$0xff]
  %v121 = vld [vmem:[#allocation2 + $0x150] sm:$0xff]
  %v122 = vld [vmem:[#allocation2 + $0x158] sm:$0xff]
  %v123 = vld [vmem:[#allocation2 + $0x160] sm:$0xff]
  %v124 = vld [vmem:[#allocation2 + $0x168] sm:$0xff]
  %v125 = vld [vmem:[#allocation2 + $0x170] sm:$0xff]
  %v126 = vld [vmem:[#allocation2 + $0x178] sm:$0xff]
  %v127 = vld [vmem:[#allocation2 + $0x180] sm:$0xff]
  %v128 = vld [vmem:[#allocation2 + $0x188] sm:$0xff]
  %v129 = vld [vmem:[#allocation2 + $0x190] sm:$0xff]
  %v130 = vld [vmem:[#allocation2 + $0x198] sm:$0xff]
  %v131 = vld [vmem:[#allocation2 + $0x1a0] sm:$0xff]
  %v132 = vld [vmem:[#allocation2 + $0x1a8] sm:$0xff]
  %v133 = vld [vmem:[#allocation2 + $0x1b0] sm:$0xff]
  %v134 = vld [vmem:[#allocation2 + $0x1b8] sm:$0xff]
  %v135 = vld [vmem:[#allocation2 + $0x1c0] sm:$0xff]
  %v136 = vld [vmem:[#allocation2 + $0x1c8] sm:$0xff]
  %v137 = vld [vmem:[#allocation2 + $0x1d0] sm:$0xff]
  %v138 = vld [vmem:[#allocation2 + $0x1d8] sm:$0xff]
  %v139 = vld [vmem:[#allocation2 + $0x1e0] sm:$0xff]
  %v140 = vld [vmem:[#allocation2 + $0x1e8] sm:$0xff]
  %v141 = vld [vmem:[#allocation2 + $0x1f0] sm:$0xff]
  %v142 = vld [vmem:[#allocation2 + $0x1f8] sm:$0xff]
  %v143 = vld [vmem:[%s0] sm:$0xff]
  %v144 = vld [vmem:[%s0 + $0x8] sm:$0xff]
  %v145 = vld [vmem:[%s0 + $0x10] sm:$0xff]
  %v146 = vld [vmem:[%s0 + $0x18] sm:$0xff]
  %v147 = vld [vmem:[%s0 + $0x20] sm:$0xff]
  %v148 = vld [vmem:[%s0 + $0x28] sm:$0xff]
  %v149 = vld [vmem:[%s0 + $0x30] sm:$0xff]
  %v150 = vld [vmem:[%s0 + $0x38] sm:$0xff]
  %v151 = vld [vmem:[%s0 + $0x40] sm:$0xff]
  %v152 = vld [vmem:[%s0 + $0x48] sm:$0xff]
  %v153 = vld [vmem:[%s0 + $0x50] sm:$0xff]
  %v154 = vld [vmem:[%s0 + $0x58] sm:$0xff]
  %v155 = vld [vmem:[%s0 + $0x60] sm:$0xff]
  %v156 = vld [vmem:[%s0 + $0x68] sm:$0xff]
  %v157 = vld [vmem:[%s0 + $0x70] sm:$0xff]
  %v158 = vld [vmem:[%s0 + $0x78] sm:$0xff]
  %v159 = vld [vmem:[%s0 + $0x80] sm:$0xff]
  %v160 = vld [vmem:[%s0 + $0x88] sm:$0xff]
  %v161 = vld [vmem:[%s0 + $0x90] sm:$0xff]
  %v162 = vld [vmem:[%s0 + $0x98] sm:$0xff]
  %v163 = vld [vmem:[%s0 + $0xa0] sm:$0xff]
  %v164 = vld [vmem:[%s0 + $0xa8] sm:$0xff]
  %v165 = vld [vmem:[%s0 + $0xb0] sm:$0xff]
  %v166 = vld [vmem:[%s0 + $0xb8] sm:$0xff]
  %v167 = vld [vmem:[%s0 + $0xc0] sm:$0xff]
  %v168 = vld [vmem:[%s0 + $0xc8] sm:$0xff]
  %v169 = vld [vmem:[%s0 + $0xd0] sm:$0xff]
  %v170 = vld [vmem:[%s0 + $0xd8] sm:$0xff]
  %v171 = vld [vmem:[%s0 + $0xe0] sm:$0xff]
  %v172 = vld [vmem:[%s0 + $0xe8] sm:$0xff]
  %v173 = vld [vmem:[%s0 + $0xf0] sm:$0xff]
  %v174 = vld [vmem:[%s0 + $0xf8] sm:$0xff]
  %v175 = vld [vmem:[%s0 + $0x100] sm:$0xff]
  %v176 = vld [vmem:[%s0 + $0x108] sm:$0xff]
  %v177 = vld [vmem:[%s0 + $0x110] sm:$0xff]
  %v178 = vld [vmem:[%s0 + $0x118] sm:$0xff]
  %v179 = vld [vmem:[%s0 + $0x120] sm:$0xff]
  %v180 = vld [vmem:[%s0 + $0x128] sm:$0xff]
  %v181 = vld [vmem:[%s0 + $0x130] sm:$0xff]
  %v182 = vld [vmem:[%s0 + $0x138] sm:$0xff]
  %v183 = vld [vmem:[%s0 + $0x140] sm:$0xff]
  %v184 = vld [vmem:[%s0 + $0x148] sm:$0xff]
  %v185 = vld [vmem:[%s0 + $0x150] sm:$0xff]
  %v186 = vld [vmem:[%s0 + $0x158] sm:$0xff]
  %v187 = vld [vmem:[%s0 + $0x160] sm:$0xff]
  %v188 = vld [vmem:[%s0 + $0x168] sm:$0xff]
  %v189 = vld [vmem:[%s0 + $0x170] sm:$0xff]
  %v190 = vld [vmem:[%s0 + $0x178] sm:$0xff]
  %v191 = vld [vmem:[%s0 + $0x180] sm:$0xff]
  %v192 = vld [vmem:[%s0 + $0x188] sm:$0xff]
  %v193 = vld [vmem:[%s0 + $0x190] sm:$0xff]
  %v194 = vld [vmem:[%s0 + $0x198] sm:$0xff]
  %v195 = vld [vmem:[%s0 + $0x1a0] sm:$0xff]
  %v196 = vld [vmem:[%s0 + $0x1a8] sm:$0xff]
  %v197 = vld [vmem:[%s0 + $0x1b0] sm:$0xff]
  %v198 = vld [vmem:[%s0 + $0x1b8] sm:$0xff]
  %v199 = vld [vmem:[%s0 + $0x1c0] sm:$0xff]
  %v200 = vld [vmem:[%s0 + $0x1c8] sm:$0xff]
  %v201 = vld [vmem:[%s0 + $0x1d0] sm:$0xff]
  %v202 = vld [vmem:[%s0 + $0x1d8] sm:$0xff]
  %v203 = vld [vmem:[%s0 + $0x1e0] sm:$0xff]
  %v204 = vld [vmem:[%s0 + $0x1e8] sm:$0xff]
  %v205 = vld [vmem:[%s0 + $0x1f0] sm:$0xff]
  %v206 = vld [vmem:[%s0 + $0x1f8] sm:$0xff]
  %v207 = vld [vmem:[%s1] sm:$0xff]
  %v208 = vld [vmem:[%s1 + $0x8] sm:$0xff]
  %vm209 = vcmask 130048
  %v211 = vsel %vm209, %v143, 0
  %v214 = vsel %vm209, %v144, 0
  %v217 = vsel %vm209, %v145, 0
  %v220 = vsel %vm209, %v146, 0
  %v223 = vsel %vm209, %v147, 0
  %v226 = vsel %vm209, %v148, 0
  %v229 = vsel %vm209, %v149, 0
  %v232 = vsel %vm209, %v150, 0
  %v235 = vsel %vm209, %v151, 0
  %v238 = vsel %vm209, %v152, 0
  %v241 = vsel %vm209, %v153, 0
  %v244 = vsel %vm209, %v154, 0
  %v247 = vsel %vm209, %v155, 0
  %v250 = vsel %vm209, %v156, 0
  %v253 = vsel %vm209, %v157, 0
  %v256 = vsel %vm209, %v158, 0
  %v259 = vsel %vm209, %v159, 0
  %v262 = vsel %vm209, %v160, 0
  %v265 = vsel %vm209, %v161, 0
  %v268 = vsel %vm209, %v162, 0
  %v271 = vsel %vm209, %v163, 0
  %v274 = vsel %vm209, %v164, 0
  %v277 = vsel %vm209, %v165, 0
  %v280 = vsel %vm209, %v166, 0
  %v283 = vsel %vm209, %v167, 0
  %v286 = vsel %vm209, %v168, 0
  %v289 = vsel %vm209, %v169, 0
  %v292 = vsel %vm209, %v170, 0
  %v295 = vsel %vm209, %v171, 0
  %v298 = vsel %vm209, %v172, 0
  %v301 = vsel %vm209, %v173, 0
  %v304 = vsel %vm209, %v174, 0
  %v307 = vsel %vm209, %v175, 0
  %v310 = vsel %vm209, %v176, 0
  %v313 = vsel %vm209, %v177, 0
  %v316 = vsel %vm209, %v178, 0
  %v319 = vsel %vm209, %v179, 0
  %v322 = vsel %vm209, %v180, 0
  %v325 = vsel %vm209, %v181, 0
  %v328 = vsel %vm209, %v182, 0
  %v331 = vsel %vm209, %v183, 0
  %v334 = vsel %vm209, %v184, 0
  %v337 = vsel %vm209, %v185, 0
  %v340 = vsel %vm209, %v186, 0
  %v343 = vsel %vm209, %v187, 0
  %v346 = vsel %vm209, %v188, 0
  %v349 = vsel %vm209, %v189, 0
  %v352 = vsel %vm209, %v190, 0
  %v355 = vsel %vm209, %v191, 0
  %v358 = vsel %vm209, %v192, 0
  %v361 = vsel %vm209, %v193, 0
  %v364 = vsel %vm209, %v194, 0
  %v367 = vsel %vm209, %v195, 0
  %v370 = vsel %vm209, %v196, 0
  %v373 = vsel %vm209, %v197, 0
  %v376 = vsel %vm209, %v198, 0
  %v379 = vsel %vm209, %v199, 0
  %v382 = vsel %vm209, %v200, 0
  %v385 = vsel %vm209, %v201, 0
  %v388 = vsel %vm209, %v202, 0
  %v391 = vsel %vm209, %v203, 0
  %v394 = vsel %vm209, %v204, 0
  %v397 = vsel %vm209, %v205, 0
  %v400 = vsel %vm209, %v206, 0
  %402 = vmatprep.subr.mxu0 0.0
  %403 = vmatpush1.msra.mxu0 %v207
  %404 = vmatprep.subr.mxu0 0.0
  %405 = vmatpush1.msra.mxu0 %v208
  %406 = vmatprep.subr.mxu0 0.0
  %407 = vmatpush1.msra.mxu0 0.0
  %408 = vmatprep.subr.mxu0 0.0
  %409 = vmatpush1.msra.mxu0 0.0
  %410 = vmatprep.subr.mxu0 0.0
  %411 = vmatpush1.msra.mxu0 0.0
  %412 = vmatprep.subr.mxu0 0.0
  %413 = vmatpush1.msra.mxu0 0.0
  %414 = vmatprep.subr.mxu0 0.0
  %415 = vmatpush1.msra.mxu0 0.0
  %416 = vmatprep.subr.mxu0 0.0
  %417 = vmatpush1.msra.mxu0 0.0
  %418 = vmatprep.subr.mxu0 0.0
  %419 = vmatpush1.msra.mxu0 0.0
  %420 = vmatprep.subr.mxu0 0.0
  %421 = vmatpush1.msra.mxu0 0.0
  %422 = vmatprep.subr.mxu0 0.0
  %423 = vmatpush1.msra.mxu0 0.0
  %424 = vmatprep.subr.mxu0 0.0
  %425 = vmatpush1.msra.mxu0 0.0
  %426 = vmatprep.subr.mxu0 0.0
  %427 = vmatpush1.msra.mxu0 0.0
  %428 = vmatprep.subr.mxu0 0.0
  %429 = vmatpush1.msra.mxu0 0.0
  %430 = vmatprep.subr.mxu0 0.0
  %431 = vmatpush1.msra.mxu0 0.0
  %432 = vmatprep.subr.mxu0 0.0
  %433 = vmatpush1.msra.mxu0 0.0
  %434 = vmatprep.subr.mxu0 0.0
  %435 = vmatpush1.msra.mxu0 0.0
  %436 = vmatprep.subr.mxu0 0.0
  %437 = vmatpush1.msra.mxu0 0.0
  %438 = vmatprep.subr.mxu0 0.0
  %439 = vmatpush1.msra.mxu0 0.0
  %440 = vmatprep.subr.mxu0 0.0
  %441 = vmatpush1.msra.mxu0 0.0
  %442 = vmatprep.subr.mxu0 0.0
  %443 = vmatpush1.msra.mxu0 0.0
  %444 = vmatprep.subr.mxu0 0.0
  %445 = vmatpush1.msra.mxu0 0.0
  %446 = vmatprep.subr.mxu0 0.0
  %447 = vmatpush1.msra.mxu0 0.0
  %448 = vmatprep.subr.mxu0 0.0
  %449 = vmatpush1.msra.mxu0 0.0
  %450 = vmatprep.subr.mxu0 0.0
  %451 = vmatpush1.msra.mxu0 0.0
  %452 = vmatprep.subr.mxu0 0.0
  %453 = vmatpush1.msra.mxu0 0.0
  %454 = vmatprep.subr.mxu0 0.0
  %455 = vmatpush1.msra.mxu0 0.0
  %456 = vmatprep.subr.mxu0 0.0
  %457 = vmatpush1.msra.mxu0 0.0
  %458 = vmatprep.subr.mxu0 0.0
  %459 = vmatpush1.msra.mxu0 0.0
  %460 = vmatprep.subr.mxu0 0.0
  %461 = vmatpush1.msra.mxu0 0.0
  %462 = vmatprep.subr.mxu0 0.0
  %463 = vmatpush1.msra.mxu0 0.0
  %464 = vmatprep.subr.mxu0 0.0
  %465 = vmatpush1.msra.mxu0 0.0
  %466 = vmatprep.mubr.f32.mxu0 0.0
  %467 = vmatmul.mubr.f32.gmra.mrb[0].mxu0 %v211
  %v468 = vpop.f32.mrb[0].mxu0
  %v469 = vadd.f32 0.0, %v468
  %v470 = vpop.f32.mrb[0].mxu0
  %471 = vmatprep.mubr.f32.mxu0 0.0
  %472 = vmatmul.mubr.f32.gmra.mrb[0].mxu0 %v214
  %v473 = vpop.f32.mrb[0].mxu0
  %v474 = vadd.f32 0.0, %v473
  %v475 = vpop.f32.mrb[0].mxu0
  %476 = vmatprep.mubr.f32.mxu0 0.0
  %477 = vmatmul.mubr.f32.gmra.mrb[0].mxu0 %v217
  %v478 = vpop.f32.mrb[0].mxu0
  %v479 = vadd.f32 0.0, %v478
  %v480 = vpop.f32.mrb[0].mxu0
  %481 = vmatprep.mubr.f32.mxu0 0.0
  %482 = vmatmul.mubr.f32.gmra.mrb[0].mxu0 %v220
  %v483 = vpop.f32.mrb[0].mxu0
  %v484 = vadd.f32 0.0, %v483
  %v485 = vpop.f32.mrb[0].mxu0
  %486 = vmatprep.mubr.f32.mxu0 0.0
  %487 = vmatmul.mubr.f32.gmra.mrb[0].mxu0 %v223
  %v488 = vpop.f32.mrb[0].mxu0
  %v489 = vadd.f32 0.0, %v488
  %v490 = vpop.f32.mrb[0].mxu0
  %491 = vmatprep.mubr.f32.mxu0 0.0
  %492 = vmatmul.mubr.f32.gmra.mrb[0].mxu0 %v226
  %v493 = vpop.f32.mrb[0].mxu0
  %v494 = vadd.f32 0.0, %v493
  %v495 = vpop.f32.mrb[0].mxu0
  %496 = vmatprep.mubr.f32.mxu0 0.0
  %497 = vmatmul.mubr.f32.gmra.mrb[0].mxu0 %v229
  %v498 = vpop.f32.mrb[0].mxu0
  %v499 = vadd.f32 0.0, %v498
  %v500 = vpop.f32.mrb[0].mxu0
  %501 = vmatprep.mubr.f32.mxu0 0.0
  %502 = vmatmul.mubr.f32.gmra.mrb[0].mxu0 %v232
  %v503 = vpop.f32.mrb[0].mxu0
  %v504 = vadd.f32 0.0, %v503
  %v505 = vpop.f32.mrb[0].mxu0
  %506 = vmatprep.mubr.f32.mxu0 0.0
  %507 = vmatmul.mubr.f32.gmra.mrb[0].mxu0 %v235
  %v508 = vpop.f32.mrb[0].mxu0
  %v509 = vadd.f32 0.0, %v508
  %v510 = vpop.f32.mrb[0].mxu0
  %511 = vmatprep.mubr.f32.mxu0 0.0
  %512 = vmatmul.mubr.f32.gmra.mrb[0].mxu0 %v238
  %v513 = vpop.f32.mrb[0].mxu0
  %v514 = vadd.f32 0.0, %v513
  %v515 = vpop.f32.mrb[0].mxu0
  %516 = vmatprep.mubr.f32.mxu0 0.0
  %517 = vmatmul.mubr.f32.gmra.mrb[0].mxu0 %v241
  %v518 = vpop.f32.mrb[0].mxu0
  %v519 = vadd.f32 0.0, %v518
  %v520 = vpop.f32.mrb[0].mxu0
  %521 = vmatprep.mubr.f32.mxu0 0.0
  %522 = vmatmul.mubr.f32.gmra.mrb[0].mxu0 %v244
  %v523 = vpop.f32.mrb[0].mxu0
  %v524 = vadd.f32 0.0, %v523
  %v525 = vpop.f32.mrb[0].mxu0
  %526 = vmatprep.mubr.f32.mxu0 0.0
  %527 = vmatmul.mubr.f32.gmra.mrb[0].mxu0 %v247
  %v528 = vpop.f32.mrb[0].mxu0
  %v529 = vadd.f32 0.0, %v528
  %v530 = vpop.f32.mrb[0].mxu0
  %531 = vmatprep.mubr.f32.mxu0 0.0
  %532 = vmatmul.mubr.f32.gmra.mrb[0].mxu0 %v250
  %v533 = vpop.f32.mrb[0].mxu0
  %v534 = vadd.f32 0.0, %v533
  %v535 = vpop.f32.mrb[0].mxu0
  %536 = vmatprep.mubr.f32.mxu0 0.0
  %537 = vmatmul.mubr.f32.gmra.mrb[0].mxu0 %v253
  %v538 = vpop.f32.mrb[0].mxu0
  %v539 = vadd.f32 0.0, %v538
  %v540 = vpop.f32.mrb[0].mxu0
  %541 = vmatprep.mubr.f32.mxu0 0.0
  %542 = vmatmul.mubr.f32.gmra.mrb[0].mxu0 %v256
  %v543 = vpop.f32.mrb[0].mxu0
  %v544 = vadd.f32 0.0, %v543
  %v545 = vpop.f32.mrb[0].mxu0
  %546 = vmatprep.mubr.f32.mxu0 0.0
  %547 = vmatmul.mubr.f32.gmra.mrb[0].mxu0 %v259
  %v548 = vpop.f32.mrb[0].mxu0
  %v549 = vadd.f32 0.0, %v548
  %v550 = vpop.f32.mrb[0].mxu0
  %551 = vmatprep.mubr.f32.mxu0 0.0
  %552 = vmatmul.mubr.f32.gmra.mrb[0].mxu0 %v262
  %v553 = vpop.f32.mrb[0].mxu0
  %v554 = vadd.f32 0.0, %v553
  %v555 = vpop.f32.mrb[0].mxu0
  %556 = vmatprep.mubr.f32.mxu0 0.0
  %557 = vmatmul.mubr.f32.gmra.mrb[0].mxu0 %v265
  %v558 = vpop.f32.mrb[0].mxu0
  %v559 = vadd.f32 0.0, %v558
  %v560 = vpop.f32.mrb[0].mxu0
  %561 = vmatprep.mubr.f32.mxu0 0.0
  %562 = vmatmul.mubr.f32.gmra.mrb[0].mxu0 %v268
  %v563 = vpop.f32.mrb[0].mxu0
  %v564 = vadd.f32 0.0, %v563
  %v565 = vpop.f32.mrb[0].mxu0
  %566 = vmatprep.mubr.f32.mxu0 0.0
  %567 = vmatmul.mubr.f32.gmra.mrb[0].mxu0 %v271
  %v568 = vpop.f32.mrb[0].mxu0
  %v569 = vadd.f32 0.0, %v568
  %v570 = vpop.f32.mrb[0].mxu0
  %571 = vmatprep.mubr.f32.mxu0 0.0
  %572 = vmatmul.mubr.f32.gmra.mrb[0].mxu0 %v274
  %v573 = vpop.f32.mrb[0].mxu0
  %v574 = vadd.f32 0.0, %v573
  %v575 = vpop.f32.mrb[0].mxu0
  %576 = vmatprep.mubr.f32.mxu0 0.0
  %577 = vmatmul.mubr.f32.gmra.mrb[0].mxu0 %v277
  %v578 = vpop.f32.mrb[0].mxu0
  %v579 = vadd.f32 0.0, %v578
  %v580 = vpop.f32.mrb[0].mxu0
  %581 = vmatprep.mubr.f32.mxu0 0.0
  %582 = vmatmul.mubr.f32.gmra.mrb[0].mxu0 %v280
  %v583 = vpop.f32.mrb[0].mxu0
  %v584 = vadd.f32 0.0, %v583
  %v585 = vpop.f32.mrb[0].mxu0
  %586 = vmatprep.mubr.f32.mxu0 0.0
  %587 = vmatmul.mubr.f32.gmra.mrb[0].mxu0 %v283
  %v588 = vpop.f32.mrb[0].mxu0
  %v589 = vadd.f32 0.0, %v588
  %v590 = vpop.f32.mrb[0].mxu0
  %591 = vmatprep.mubr.f32.mxu0 0.0
  %592 = vmatmul.mubr.f32.gmra.mrb[0].mxu0 %v286
  %v593 = vpop.f32.mrb[0].mxu0
  %v594 = vadd.f32 0.0, %v593
  %v595 = vpop.f32.mrb[0].mxu0
  %596 = vmatprep.mubr.f32.mxu0 0.0
  %597 = vmatmul.mubr.f32.gmra.mrb[0].mxu0 %v289
  %v598 = vpop.f32.mrb[0].mxu0
  %v599 = vadd.f32 0.0, %v598
  %v600 = vpop.f32.mrb[0].mxu0
  %601 = vmatprep.mubr.f32.mxu0 0.0
  %602 = vmatmul.mubr.f32.gmra.mrb[0].mxu0 %v292
  %v603 = vpop.f32.mrb[0].mxu0
  %v604 = vadd.f32 0.0, %v603
  %v605 = vpop.f32.mrb[0].mxu0
  %606 = vmatprep.mubr.f32.mxu0 0.0
  %607 = vmatmul.mubr.f32.gmra.mrb[0].mxu0 %v295
  %v608 = vpop.f32.mrb[0].mxu0
  %v609 = vadd.f32 0.0, %v608
  %v610 = vpop.f32.mrb[0].mxu0
  %611 = vmatprep.mubr.f32.mxu0 0.0
  %612 = vmatmul.mubr.f32.gmra.mrb[0].mxu0 %v298
  %v613 = vpop.f32.mrb[0].mxu0
  %v614 = vadd.f32 0.0, %v613
  %v615 = vpop.f32.mrb[0].mxu0
  %616 = vmatprep.mubr.f32.mxu0 0.0
  %617 = vmatmul.mubr.f32.gmra.mrb[0].mxu0 %v301
  %v618 = vpop.f32.mrb[0].mxu0
  %v619 = vadd.f32 0.0, %v618
  %v620 = vpop.f32.mrb[0].mxu0
  %621 = vmatprep.mubr.f32.mxu0 0.0
  %622 = vmatmul.mubr.f32.gmra.mrb[0].mxu0 %v304
  %v623 = vpop.f32.mrb[0].mxu0
  %v624 = vadd.f32 0.0, %v623
  %v625 = vpop.f32.mrb[0].mxu0
  %626 = vmatprep.mubr.f32.mxu0 0.0
  %627 = vmatmul.mubr.f32.gmra.mrb[0].mxu0 %v307
  %v628 = vpop.f32.mrb[0].mxu0
  %v629 = vadd.f32 0.0, %v628
  %v630 = vpop.f32.mrb[0].mxu0
  %631 = vmatprep.mubr.f32.mxu0 0.0
  %632 = vmatmul.mubr.f32.gmra.mrb[0].mxu0 %v310
  %v633 = vpop.f32.mrb[0].mxu0
  %v634 = vadd.f32 0.0, %v633
  %v635 = vpop.f32.mrb[0].mxu0
  %636 = vmatprep.mubr.f32.mxu0 0.0
  %637 = vmatmul.mubr.f32.gmra.mrb[0].mxu0 %v313
  %v638 = vpop.f32.mrb[0].mxu0
  %v639 = vadd.f32 0.0, %v638
  %v640 = vpop.f32.mrb[0].mxu0
  %641 = vmatprep.mubr.f32.mxu0 0.0
  %642 = vmatmul.mubr.f32.gmra.mrb[0].mxu0 %v316
  %v643 = vpop.f32.mrb[0].mxu0
  %v644 = vadd.f32 0.0, %v643
  %v645 = vpop.f32.mrb[0].mxu0
  %646 = vmatprep.mubr.f32.mxu0 0.0
  %647 = vmatmul.mubr.f32.gmra.mrb[0].mxu0 %v319
  %v648 = vpop.f32.mrb[0].mxu0
  %v649 = vadd.f32 0.0, %v648
  %v650 = vpop.f32.mrb[0].mxu0
  %651 = vmatprep.mubr.f32.mxu0 0.0
  %652 = vmatmul.mubr.f32.gmra.mrb[0].mxu0 %v322
  %v653 = vpop.f32.mrb[0].mxu0
  %v654 = vadd.f32 0.0, %v653
  %v655 = vpop.f32.mrb[0].mxu0
  %656 = vmatprep.mubr.f32.mxu0 0.0
  %657 = vmatmul.mubr.f32.gmra.mrb[0].mxu0 %v325
  %v658 = vpop.f32.mrb[0].mxu0
  %v659 = vadd.f32 0.0, %v658
  %v660 = vpop.f32.mrb[0].mxu0
  %661 = vmatprep.mubr.f32.mxu0 0.0
  %662 = vmatmul.mubr.f32.gmra.mrb[0].mxu0 %v328
  %v663 = vpop.f32.mrb[0].mxu0
  %v664 = vadd.f32 0.0, %v663
  %v665 = vpop.f32.mrb[0].mxu0
  %666 = vmatprep.mubr.f32.mxu0 0.0
  %667 = vmatmul.mubr.f32.gmra.mrb[0].mxu0 %v331
  %v668 = vpop.f32.mrb[0].mxu0
  %v669 = vadd.f32 0.0, %v668
  %v670 = vpop.f32.mrb[0].mxu0
  %671 = vmatprep.mubr.f32.mxu0 0.0
  %672 = vmatmul.mubr.f32.gmra.mrb[0].mxu0 %v334
  %v673 = vpop.f32.mrb[0].mxu0
  %v674 = vadd.f32 0.0, %v673
  %v675 = vpop.f32.mrb[0].mxu0
  %676 = vmatprep.mubr.f32.mxu0 0.0
  %677 = vmatmul.mubr.f32.gmra.mrb[0].mxu0 %v337
  %v678 = vpop.f32.mrb[0].mxu0
  %v679 = vadd.f32 0.0, %v678
  %v680 = vpop.f32.mrb[0].mxu0
  %681 = vmatprep.mubr.f32.mxu0 0.0
  %682 = vmatmul.mubr.f32.gmra.mrb[0].mxu0 %v340
  %v683 = vpop.f32.mrb[0].mxu0
  %v684 = vadd.f32 0.0, %v683
  %v685 = vpop.f32.mrb[0].mxu0
  %686 = vmatprep.mubr.f32.mxu0 0.0
  %687 = vmatmul.mubr.f32.gmra.mrb[0].mxu0 %v343
  %v688 = vpop.f32.mrb[0].mxu0
  %v689 = vadd.f32 0.0, %v688
  %v690 = vpop.f32.mrb[0].mxu0
  %691 = vmatprep.mubr.f32.mxu0 0.0
  %692 = vmatmul.mubr.f32.gmra.mrb[0].mxu0 %v346
  %v693 = vpop.f32.mrb[0].mxu0
  %v694 = vadd.f32 0.0, %v693
  %v695 = vpop.f32.mrb[0].mxu0
  %696 = vmatprep.mubr.f32.mxu0 0.0
  %697 = vmatmul.mubr.f32.gmra.mrb[0].mxu0 %v349
  %v698 = vpop.f32.mrb[0].mxu0
  %v699 = vadd.f32 0.0, %v698
  %v700 = vpop.f32.mrb[0].mxu0
  %701 = vmatprep.mubr.f32.mxu0 0.0
  %702 = vmatmul.mubr.f32.gmra.mrb[0].mxu0 %v352
  %v703 = vpop.f32.mrb[0].mxu0
  %v704 = vadd.f32 0.0, %v703
  %v705 = vpop.f32.mrb[0].mxu0
  %706 = vmatprep.mubr.f32.mxu0 0.0
  %707 = vmatmul.mubr.f32.gmra.mrb[0].mxu0 %v355
  %v708 = vpop.f32.mrb[0].mxu0
  %v709 = vadd.f32 0.0, %v708
  %v710 = vpop.f32.mrb[0].mxu0
  %711 = vmatprep.mubr.f32.mxu0 0.0
  %712 = vmatmul.mubr.f32.gmra.mrb[0].mxu0 %v358
  %v713 = vpop.f32.mrb[0].mxu0
  %v714 = vadd.f32 0.0, %v713
  %v715 = vpop.f32.mrb[0].mxu0
  %716 = vmatprep.mubr.f32.mxu0 0.0
  %717 = vmatmul.mubr.f32.gmra.mrb[0].mxu0 %v361
  %v718 = vpop.f32.mrb[0].mxu0
  %v719 = vadd.f32 0.0, %v718
  %v720 = vpop.f32.mrb[0].mxu0
  %721 = vmatprep.mubr.f32.mxu0 0.0
  %722 = vmatmul.mubr.f32.gmra.mrb[0].mxu0 %v364
  %v723 = vpop.f32.mrb[0].mxu0
  %v724 = vadd.f32 0.0, %v723
  %v725 = vpop.f32.mrb[0].mxu0
  %726 = vmatprep.mubr.f32.mxu0 0.0
  %727 = vmatmul.mubr.f32.gmra.mrb[0].mxu0 %v367
  %v728 = vpop.f32.mrb[0].mxu0
  %v729 = vadd.f32 0.0, %v728
  %v730 = vpop.f32.mrb[0].mxu0
  %731 = vmatprep.mubr.f32.mxu0 0.0
  %732 = vmatmul.mubr.f32.gmra.mrb[0].mxu0 %v370
  %v733 = vpop.f32.mrb[0].mxu0
  %v734 = vadd.f32 0.0, %v733
  %v735 = vpop.f32.mrb[0].mxu0
  %736 = vmatprep.mubr.f32.mxu0 0.0
  %737 = vmatmul.mubr.f32.gmra.mrb[0].mxu0 %v373
  %v738 = vpop.f32.mrb[0].mxu0
  %v739 = vadd.f32 0.0, %v738
  %v740 = vpop.f32.mrb[0].mxu0
  %741 = vmatprep.mubr.f32.mxu0 0.0
  %742 = vmatmul.mubr.f32.gmra.mrb[0].mxu0 %v376
  %v743 = vpop.f32.mrb[0].mxu0
  %v744 = vadd.f32 0.0, %v743
  %v745 = vpop.f32.mrb[0].mxu0
  %746 = vmatprep.mubr.f32.mxu0 0.0
  %747 = vmatmul.mubr.f32.gmra.mrb[0].mxu0 %v379
  %v748 = vpop.f32.mrb[0].mxu0
  %v749 = vadd.f32 0.0, %v748
  %v750 = vpop.f32.mrb[0].mxu0
  %751 = vmatprep.mubr.f32.mxu0 0.0
  %752 = vmatmul.mubr.f32.gmra.mrb[0].mxu0 %v382
  %v753 = vpop.f32.mrb[0].mxu0
  %v754 = vadd.f32 0.0, %v753
  %v755 = vpop.f32.mrb[0].mxu0
  %756 = vmatprep.mubr.f32.mxu0 0.0
  %757 = vmatmul.mubr.f32.gmra.mrb[0].mxu0 %v385
  %v758 = vpop.f32.mrb[0].mxu0
  %v759 = vadd.f32 0.0, %v758
  %v760 = vpop.f32.mrb[0].mxu0
  %761 = vmatprep.mubr.f32.mxu0 0.0
  %762 = vmatmul.mubr.f32.gmra.mrb[0].mxu0 %v388
  %v763 = vpop.f32.mrb[0].mxu0
  %v764 = vadd.f32 0.0, %v763
  %v765 = vpop.f32.mrb[0].mxu0
  %766 = vmatprep.mubr.f32.mxu0 0.0
  %767 = vmatmul.mubr.f32.gmra.mrb[0].mxu0 %v391
  %v768 = vpop.f32.mrb[0].mxu0
  %v769 = vadd.f32 0.0, %v768
  %v770 = vpop.f32.mrb[0].mxu0
  %771 = vmatprep.mubr.f32.mxu0 0.0
  %772 = vmatmul.mubr.f32.gmra.mrb[0].mxu0 %v394
  %v773 = vpop.f32.mrb[0].mxu0
  %v774 = vadd.f32 0.0, %v773
  %v775 = vpop.f32.mrb[0].mxu0
  %776 = vmatprep.mubr.f32.mxu0 0.0
  %777 = vmatmul.mubr.f32.gmra.mrb[0].mxu0 %v397
  %v778 = vpop.f32.mrb[0].mxu0
  %v779 = vadd.f32 0.0, %v778
  %v780 = vpop.f32.mrb[0].mxu0
  %781 = vmatprep.mubr.f32.mxu0 0.0
  %782 = vmatmul.mubr.f32.gmra.mrb[0].mxu0 %v400
  %v783 = vpop.f32.mrb[0].mxu0
  %v784 = vadd.f32 0.0, %v783
  %v785 = vpop.f32.mrb[0].mxu0
  %786 = vdwg.mxu0
  %v787 = vadd.f32 %v79, %v469
  %v788 = vadd.f32 %v80, %v474
  %v789 = vadd.f32 %v81, %v479
  %v790 = vadd.f32 %v82, %v484
  %v791 = vadd.f32 %v83, %v489
  %v792 = vadd.f32 %v84, %v494
  %v793 = vadd.f32 %v85, %v499
  %v794 = vadd.f32 %v86, %v504
  %v795 = vadd.f32 %v87, %v509
  %v796 = vadd.f32 %v88, %v514
  %v797 = vadd.f32 %v89, %v519
  %v798 = vadd.f32 %v90, %v524
  %v799 = vadd.f32 %v91, %v529
  %v800 = vadd.f32 %v92, %v534
  %v801 = vadd.f32 %v93, %v539
  %v802 = vadd.f32 %v94, %v544
  %v803 = vadd.f32 %v95, %v549
  %v804 = vadd.f32 %v96, %v554
  %v805 = vadd.f32 %v97, %v559
  %v806 = vadd.f32 %v98, %v564
  %v807 = vadd.f32 %v99, %v569
  %v808 = vadd.f32 %v100, %v574
  %v809 = vadd.f32 %v101, %v579
  %v810 = vadd.f32 %v102, %v584
  %v811 = vadd.f32 %v103, %v589
  %v812 = vadd.f32 %v104, %v594
  %v813 = vadd.f32 %v105, %v599
  %v814 = vadd.f32 %v106, %v604
  %v815 = vadd.f32 %v107, %v609
  %v816 = vadd.f32 %v108, %v614
  %v817 = vadd.f32 %v109, %v619
  %v818 = vadd.f32 %v110, %v624
  %v819 = vadd.f32 %v111, %v629
  %v820 = vadd.f32 %v112, %v634
  %v821 = vadd.f32 %v113, %v639
  %v822 = vadd.f32 %v114, %v644
  %v823 = vadd.f32 %v115, %v649
  %v824 = vadd.f32 %v116, %v654
  %v825 = vadd.f32 %v117, %v659
  %v826 = vadd.f32 %v118, %v664
  %v827 = vadd.f32 %v119, %v669
  %v828 = vadd.f32 %v120, %v674
  %v829 = vadd.f32 %v121, %v679
  %v830 = vadd.f32 %v122, %v684
  %v831 = vadd.f32 %v123, %v689
  %v832 = vadd.f32 %v124, %v694
  %v833 = vadd.f32 %v125, %v699
  %v834 = vadd.f32 %v126, %v704
  %v835 = vadd.f32 %v127, %v709
  %v836 = vadd.f32 %v128, %v714
  %v837 = vadd.f32 %v129, %v719
  %v838 = vadd.f32 %v130, %v724
  %v839 = vadd.f32 %v131, %v729
  %v840 = vadd.f32 %v132, %v734
  %v841 = vadd.f32 %v133, %v739
  %v842 = vadd.f32 %v134, %v744
  %v843 = vadd.f32 %v135, %v749
  %v844 = vadd.f32 %v136, %v754
  %v845 = vadd.f32 %v137, %v759
  %v846 = vadd.f32 %v138, %v764
  %v847 = vadd.f32 %v139, %v769
  %v848 = vadd.f32 %v140, %v774
  %v849 = vadd.f32 %v141, %v779
  %v850 = vadd.f32 %v142, %v784
  %851 = vst [vmem:[#allocation2] sm:$0xff] %v787
  %852 = vst [vmem:[#allocation2 + $0x8] sm:$0xff] %v788
  %853 = vst [vmem:[#allocation2 + $0x10] sm:$0xff] %v789
  %854 = vst [vmem:[#allocation2 + $0x18] sm:$0xff] %v790
  %855 = vst [vmem:[#allocation2 + $0x20] sm:$0xff] %v791
  %856 = vst [vmem:[#allocation2 + $0x28] sm:$0xff] %v792
  %857 = vst [vmem:[#allocation2 + $0x30] sm:$0xff] %v793
  %858 = vst [vmem:[#allocation2 + $0x38] sm:$0xff] %v794
  %859 = vst [vmem:[#allocation2 + $0x40] sm:$0xff] %v795
  %860 = vst [vmem:[#allocation2 + $0x48] sm:$0xff] %v796
  %861 = vst [vmem:[#allocation2 + $0x50] sm:$0xff] %v797
  %862 = vst [vmem:[#allocation2 + $0x58] sm:$0xff] %v798
  %863 = vst [vmem:[#allocation2 + $0x60] sm:$0xff] %v799
  %864 = vst [vmem:[#allocation2 + $0x68] sm:$0xff] %v800
  %865 = vst [vmem:[#allocation2 + $0x70] sm:$0xff] %v801
  %866 = vst [vmem:[#allocation2 + $0x78] sm:$0xff] %v802
  %867 = vst [vmem:[#allocation2 + $0x80] sm:$0xff] %v803
  %868 = vst [vmem:[#allocation2 + $0x88] sm:$0xff] %v804
  %869 = vst [vmem:[#allocation2 + $0x90] sm:$0xff] %v805
  %870 = vst [vmem:[#allocation2 + $0x98] sm:$0xff] %v806
  %871 = vst [vmem:[#allocation2 + $0xa0] sm:$0xff] %v807
  %872 = vst [vmem:[#allocation2 + $0xa8] sm:$0xff] %v808
  %873 = vst [vmem:[#allocation2 + $0xb0] sm:$0xff] %v809
  %874 = vst [vmem:[#allocation2 + $0xb8] sm:$0xff] %v810
  %875 = vst [vmem:[#allocation2 + $0xc0] sm:$0xff] %v811
  %876 = vst [vmem:[#allocation2 + $0xc8] sm:$0xff] %v812
  %877 = vst [vmem:[#allocation2 + $0xd0] sm:$0xff] %v813
  %878 = vst [vmem:[#allocation2 + $0xd8] sm:$0xff] %v814
  %879 = vst [vmem:[#allocation2 + $0xe0] sm:$0xff] %v815
  %880 = vst [vmem:[#allocation2 + $0xe8] sm:$0xff] %v816
  %881 = vst [vmem:[#allocation2 + $0xf0] sm:$0xff] %v817
  %882 = vst [vmem:[#allocation2 + $0xf8] sm:$0xff] %v818
  %883 = vst [vmem:[#allocation2 + $0x100] sm:$0xff] %v819
  %884 = vst [vmem:[#allocation2 + $0x108] sm:$0xff] %v820
  %885 = vst [vmem:[#allocation2 + $0x110] sm:$0xff] %v821
  %886 = vst [vmem:[#allocation2 + $0x118] sm:$0xff] %v822
  %887 = vst [vmem:[#allocation2 + $0x120] sm:$0xff] %v823
  %888 = vst [vmem:[#allocation2 + $0x128] sm:$0xff] %v824
  %889 = vst [vmem:[#allocation2 + $0x130] sm:$0xff] %v825
  %890 = vst [vmem:[#allocation2 + $0x138] sm:$0xff] %v826
  %891 = vst [vmem:[#allocation2 + $0x140] sm:$0xff] %v827
  %892 = vst [vmem:[#allocation2 + $0x148] sm:$0xff] %v828
  %893 = vst [vmem:[#allocation2 + $0x150] sm:$0xff] %v829
  %894 = vst [vmem:[#allocation2 + $0x158] sm:$0xff] %v830
  %895 = vst [vmem:[#allocation2 + $0x160] sm:$0xff] %v831
  %896 = vst [vmem:[#allocation2 + $0x168] sm:$0xff] %v832
  %897 = vst [vmem:[#allocation2 + $0x170] sm:$0xff] %v833
  %898 = vst [vmem:[#allocation2 + $0x178] sm:$0xff] %v834
  %899 = vst [vmem:[#allocation2 + $0x180] sm:$0xff] %v835
  %900 = vst [vmem:[#allocation2 + $0x188] sm:$0xff] %v836
  %901 = vst [vmem:[#allocation2 + $0x190] sm:$0xff] %v837
  %902 = vst [vmem:[#allocation2 + $0x198] sm:$0xff] %v838
  %903 = vst [vmem:[#allocation2 + $0x1a0] sm:$0xff] %v839
  %904 = vst [vmem:[#allocation2 + $0x1a8] sm:$0xff] %v840
  %905 = vst [vmem:[#allocation2 + $0x1b0] sm:$0xff] %v841
  %906 = vst [vmem:[#allocation2 + $0x1b8] sm:$0xff] %v842
  %907 = vst [vmem:[#allocation2 + $0x1c0] sm:$0xff] %v843
  %908 = vst [vmem:[#allocation2 + $0x1c8] sm:$0xff] %v844
  %909 = vst [vmem:[#allocation2 + $0x1d0] sm:$0xff] %v845
  %910 = vst [vmem:[#allocation2 + $0x1d8] sm:$0xff] %v846
  %911 = vst [vmem:[#allocation2 + $0x1e0] sm:$0xff] %v847
  %912 = vst [vmem:[#allocation2 + $0x1e8] sm:$0xff] %v848
  %913 = vst [vmem:[#allocation2 + $0x1f0] sm:$0xff] %v849
  %914 = vst [vmem:[#allocation2 + $0x1f8] sm:$0xff] %v850
  // Predicated region
  $region14: #{generator_forward.23} parent=0 // pred_check
    %p915 = pneg %p11
  $region15: #{generator_forward.23} parent=0 // pred_check_branch
    %917 = sbr.rel (%p915) target = $region17
  $region16: #{generator_forward.23} parent=0 // pred_region
    %v918 = vld [vmem:[#allocation2] sm:$0xff]
    %v919 = vld [vmem:[#allocation2 + $0x8] sm:$0xff]
    %v920 = vld [vmem:[#allocation2 + $0x10] sm:$0xff]
    %v921 = vld [vmem:[#allocation2 + $0x18] sm:$0xff]
    %v922 = vld [vmem:[#allocation2 + $0x20] sm:$0xff]
    %v923 = vld [vmem:[#allocation2 + $0x28] sm:$0xff]
    %v924 = vld [vmem:[#allocation2 + $0x30] sm:$0xff]
    %v925 = vld [vmem:[#allocation2 + $0x38] sm:$0xff]
    %v926 = vld [vmem:[#allocation2 + $0x40] sm:$0xff]
    %v927 = vld [vmem:[#allocation2 + $0x48] sm:$0xff]
    %v928 = vld [vmem:[#allocation2 + $0x50] sm:$0xff]
    %v929 = vld [vmem:[#allocation2 + $0x58] sm:$0xff]
    %v930 = vld [vmem:[#allocation2 + $0x60] sm:$0xff]
    %v931 = vld [vmem:[#allocation2 + $0x68] sm:$0xff]
    %v932 = vld [vmem:[#allocation2 + $0x70] sm:$0xff]
    %v933 = vld [vmem:[#allocation2 + $0x78] sm:$0xff]
    %v934 = vld [vmem:[#allocation2 + $0x80] sm:$0xff]
    %v935 = vld [vmem:[#allocation2 + $0x88] sm:$0xff]
    %v936 = vld [vmem:[#allocation2 + $0x90] sm:$0xff]
    %v937 = vld [vmem:[#allocation2 + $0x98] sm:$0xff]
    %v938 = vld [vmem:[#allocation2 + $0xa0] sm:$0xff]
    %v939 = vld [vmem:[#allocation2 + $0xa8] sm:$0xff]
    %v940 = vld [vmem:[#allocation2 + $0xb0] sm:$0xff]
    %v941 = vld [vmem:[#allocation2 + $0xb8] sm:$0xff]
    %v942 = vld [vmem:[#allocation2 + $0xc0] sm:$0xff]
    %v943 = vld [vmem:[#allocation2 + $0xc8] sm:$0xff]
    %v944 = vld [vmem:[#allocation2 + $0xd0] sm:$0xff]
    %v945 = vld [vmem:[#allocation2 + $0xd8] sm:$0xff]
    %v946 = vld [vmem:[#allocation2 + $0xe0] sm:$0xff]
    %v947 = vld [vmem:[#allocation2 + $0xe8] sm:$0xff]
    %v948 = vld [vmem:[#allocation2 + $0xf0] sm:$0xff]
    %v949 = vld [vmem:[#allocation2 + $0xf8] sm:$0xff]
    %v950 = vld [vmem:[#allocation2 + $0x100] sm:$0xff]
    %v951 = vld [vmem:[#allocation2 + $0x108] sm:$0xff]
    %v952 = vld [vmem:[#allocation2 + $0x110] sm:$0xff]
    %v953 = vld [vmem:[#allocation2 + $0x118] sm:$0xff]
    %v954 = vld [vmem:[#allocation2 + $0x120] sm:$0xff]
    %v955 = vld [vmem:[#allocation2 + $0x128] sm:$0xff]
    %v956 = vld [vmem:[#allocation2 + $0x130] sm:$0xff]
    %v957 = vld [vmem:[#allocation2 + $0x138] sm:$0xff]
    %v958 = vld [vmem:[#allocation2 + $0x140] sm:$0xff]
    %v959 = vld [vmem:[#allocation2 + $0x148] sm:$0xff]
    %v960 = vld [vmem:[#allocation2 + $0x150] sm:$0xff]
    %v961 = vld [vmem:[#allocation2 + $0x158] sm:$0xff]
    %v962 = vld [vmem:[#allocation2 + $0x160] sm:$0xff]
    %v963 = vld [vmem:[#allocation2 + $0x168] sm:$0xff]
    %v964 = vld [vmem:[#allocation2 + $0x170] sm:$0xff]
    %v965 = vld [vmem:[#allocation2 + $0x178] sm:$0xff]
    %v966 = vld [vmem:[#allocation2 + $0x180] sm:$0xff]
    %v967 = vld [vmem:[#allocation2 + $0x188] sm:$0xff]
    %v968 = vld [vmem:[#allocation2 + $0x190] sm:$0xff]
    %v969 = vld [vmem:[#allocation2 + $0x198] sm:$0xff]
    %v970 = vld [vmem:[#allocation2 + $0x1a0] sm:$0xff]
    %v971 = vld [vmem:[#allocation2 + $0x1a8] sm:$0xff]
    %v972 = vld [vmem:[#allocation2 + $0x1b0] sm:$0xff]
    %v973 = vld [vmem:[#allocation2 + $0x1b8] sm:$0xff]
    %v974 = vld [vmem:[#allocation2 + $0x1c0] sm:$0xff]
    %v975 = vld [vmem:[#allocation2 + $0x1c8] sm:$0xff]
    %v976 = vld [vmem:[#allocation2 + $0x1d0] sm:$0xff]
    %v977 = vld [vmem:[#allocation2 + $0x1d8] sm:$0xff]
    %v978 = vld [vmem:[#allocation2 + $0x1e0] sm:$0xff]
    %v979 = vld [vmem:[#allocation2 + $0x1e8] sm:$0xff]
    %v980 = vld [vmem:[#allocation2 + $0x1f0] sm:$0xff]
    %v981 = vld [vmem:[#allocation2 + $0x1f8] sm:$0xff]
    %982 = vst [vmem:[%s2] sm:$0xff] %v918
    %983 = vst [vmem:[%s2 + $0x8] sm:$0xff] %v919
    %984 = vst [vmem:[%s2 + $0x10] sm:$0xff] %v920
    %985 = vst [vmem:[%s2 + $0x18] sm:$0xff] %v921
    %986 = vst [vmem:[%s2 + $0x20] sm:$0xff] %v922
    %987 = vst [vmem:[%s2 + $0x28] sm:$0xff] %v923
    %988 = vst [vmem:[%s2 + $0x30] sm:$0xff] %v924
    %989 = vst [vmem:[%s2 + $0x38] sm:$0xff] %v925
    %990 = vst [vmem:[%s2 + $0x40] sm:$0xff] %v926
    %991 = vst [vmem:[%s2 + $0x48] sm:$0xff] %v927
    %992 = vst [vmem:[%s2 + $0x50] sm:$0xff] %v928
    %993 = vst [vmem:[%s2 + $0x58] sm:$0xff] %v929
    %994 = vst [vmem:[%s2 + $0x60] sm:$0xff] %v930
    %995 = vst [vmem:[%s2 + $0x68] sm:$0xff] %v931
    %996 = vst [vmem:[%s2 + $0x70] sm:$0xff] %v932
    %997 = vst [vmem:[%s2 + $0x78] sm:$0xff] %v933
    %998 = vst [vmem:[%s2 + $0x80] sm:$0xff] %v934
    %999 = vst [vmem:[%s2 + $0x88] sm:$0xff] %v935
    %1000 = vst [vmem:[%s2 + $0x90] sm:$0xff] %v936
    %1001 = vst [vmem:[%s2 + $0x98] sm:$0xff] %v937
    %1002 = vst [vmem:[%s2 + $0xa0] sm:$0xff] %v938
    %1003 = vst [vmem:[%s2 + $0xa8] sm:$0xff] %v939
    %1004 = vst [vmem:[%s2 + $0xb0] sm:$0xff] %v940
    %1005 = vst [vmem:[%s2 + $0xb8] sm:$0xff] %v941
    %1006 = vst [vmem:[%s2 + $0xc0] sm:$0xff] %v942
    %1007 = vst [vmem:[%s2 + $0xc8] sm:$0xff] %v943
    %1008 = vst [vmem:[%s2 + $0xd0] sm:$0xff] %v944
    %1009 = vst [vmem:[%s2 + $0xd8] sm:$0xff] %v945
    %1010 = vst [vmem:[%s2 + $0xe0] sm:$0xff] %v946
    %1011 = vst [vmem:[%s2 + $0xe8] sm:$0xff] %v947
    %1012 = vst [vmem:[%s2 + $0xf0] sm:$0xff] %v948
    %1013 = vst [vmem:[%s2 + $0xf8] sm:$0xff] %v949
    %1014 = vst [vmem:[%s2 + $0x100] sm:$0xff] %v950
    %1015 = vst [vmem:[%s2 + $0x108] sm:$0xff] %v951
    %1016 = vst [vmem:[%s2 + $0x110] sm:$0xff] %v952
    %1017 = vst [vmem:[%s2 + $0x118] sm:$0xff] %v953
    %1018 = vst [vmem:[%s2 + $0x120] sm:$0xff] %v954
    %1019 = vst [vmem:[%s2 + $0x128] sm:$0xff] %v955
    %1020 = vst [vmem:[%s2 + $0x130] sm:$0xff] %v956
    %1021 = vst [vmem:[%s2 + $0x138] sm:$0xff] %v957
    %1022 = vst [vmem:[%s2 + $0x140] sm:$0xff] %v958
    %1023 = vst [vmem:[%s2 + $0x148] sm:$0xff] %v959
    %1024 = vst [vmem:[%s2 + $0x150] sm:$0xff] %v960
    %1025 = vst [vmem:[%s2 + $0x158] sm:$0xff] %v961
    %1026 = vst [vmem:[%s2 + $0x160] sm:$0xff] %v962
    %1027 = vst [vmem:[%s2 + $0x168] sm:$0xff] %v963
    %1028 = vst [vmem:[%s2 + $0x170] sm:$0xff] %v964
    %1029 = vst [vmem:[%s2 + $0x178] sm:$0xff] %v965
    %1030 = vst [vmem:[%s2 + $0x180] sm:$0xff] %v966
    %1031 = vst [vmem:[%s2 + $0x188] sm:$0xff] %v967
    %1032 = vst [vmem:[%s2 + $0x190] sm:$0xff] %v968
    %1033 = vst [vmem:[%s2 + $0x198] sm:$0xff] %v969
    %1034 = vst [vmem:[%s2 + $0x1a0] sm:$0xff] %v970
    %1035 = vst [vmem:[%s2 + $0x1a8] sm:$0xff] %v971
    %1036 = vst [vmem:[%s2 + $0x1b0] sm:$0xff] %v972
    %1037 = vst [vmem:[%s2 + $0x1b8] sm:$0xff] %v973
    %1038 = vst [vmem:[%s2 + $0x1c0] sm:$0xff] %v974
    %1039 = vst [vmem:[%s2 + $0x1c8] sm:$0xff] %v975
    %1040 = vst [vmem:[%s2 + $0x1d0] sm:$0xff] %v976
    %1041 = vst [vmem:[%s2 + $0x1d8] sm:$0xff] %v977
    %1042 = vst [vmem:[%s2 + $0x1e0] sm:$0xff] %v978
    %1043 = vst [vmem:[%s2 + $0x1e8] sm:$0xff] %v979
    %1044 = vst [vmem:[%s2 + $0x1f0] sm:$0xff] %v980
    %1045 = vst [vmem:[%s2 + $0x1f8] sm:$0xff] %v981
  $region17: #{generator_forward.23} parent=0 // pred_fallthru
    _
  // Predicated region
  $region18: #{generator_forward.23} parent=0 // pred_check
    _
  $region19: #{generator_forward.23} parent=0 // pred_check_branch
    %1047 = sbr.rel (0) target = $region21
  $region20: #{generator_forward.23} parent=0 // pred_region
    _
  $region21: #{generator_forward.23} parent=0 // pred_fallthru
    _
  // Predicated region
  $region22: #{generator_forward.23} parent=0 // pred_check
    _
  $region23: #{generator_forward.23} parent=0 // pred_check_branch
    %1049 = sbr.rel (0) target = $region25
  $region24: #{generator_forward.23} parent=0 // pred_region
    _
  $region25: #{generator_forward.23} parent=0 // pred_fallthru
    _

// kernel: tile.73
$region0: #{tile.73}
  #allocation0 [shape = 's32[1]{0}', space=sflag, size = 0x4, scoped, tag = 'scoped memory for tile.73']
  %s0 = inlined_call_operand.vmem [shape: f32[8], index: 0, kind: input, shape index: {}]
  %s1 = inlined_call_operand.vmem [shape: f32[32,8], index: 1, kind: output, shape index: {}]
  // Predicated region
  $region2: #{tile.73} parent=0 // pred_check
    _
  $region3: #{tile.73} parent=0 // pred_check_branch
    %3 = sbr.rel (0) target = $region5
  $region4: #{tile.73} parent=0 // pred_region
    _
  $region5: #{tile.73} parent=0 // pred_fallthru
    _
  %v4 = vld [vmem:[%s0] ss:$0 sm:$0xff]
  %5 = vst [vmem:[%s1] sm:$0xff] %v4
  %s6 = scalar_lea.vmem %s1, 8
  %7 = vst [vmem:[%s6] sm:$0xff] %v4
  %s8 = scalar_lea.vmem %s1, 16
  %9 = vst [vmem:[%s8] sm:$0xff] %v4
  %s10 = scalar_lea.vmem %s1, 24
  %11 = vst [vmem:[%s10] sm:$0xff] %v4

// kernel: tile.74
$region0: #{tile.74}
  %s0 = inlined_call_operand.vmem [shape: f32[32,8], index: 0, kind: input, shape index: {}]
  %s1 = inlined_call_operand.vmem [shape: f32[1,256], index: 1, kind: output, shape index: {}]
  $region1: #{tile.74} parent=0
    #allocation0 [shape = 'u8[8192]{0}', space=vmem, size = 0x2000, scoped, tag = 'scoped mem for output reshape']
    %s2 = smov 3
    %v3 = vld [vmem:[%s0] ss:$16 sm:%s2]
    %vm4 = vcmask 64512
    %5 = vst.msk [vmem:[#allocation0] ss:$8 sm:$0x3] %vm4, %v3
    %s6 = scalar_lea.vmem %s0, 15
    %s7 = smov 3
    %v8 = vld [vmem:[%s6] ss:$16 sm:%s7]
    %9 = vrot.lane.b32.xlu0 %v8, 120
    %v10 = vpop.permute.xlu0 %9
    %vm11 = vcmask 1048512
    %12 = vst.msk [vmem:[#allocation0] ss:$8 sm:$0x3] %vm11, %v10
    %s13 = scalar_lea.vmem %s0, 14
    %s14 = smov 3
    %v15 = vld [vmem:[%s13] ss:$16 sm:%s14]
    %16 = vrot.lane.b32.xlu0 %v15, 112
    %v17 = vpop.permute.xlu0 %16
    %vm18 = vcmask 982912
    %19 = vst.msk [vmem:[#allocation0] ss:$8 sm:$0x3] %vm18, %v17
    %s20 = scalar_lea.vmem %s0, 13
    %s21 = smov 3
    %v22 = vld [vmem:[%s20] ss:$16 sm:%s21]
    %23 = vrot.lane.b32.xlu0 %v22, 104
    %v24 = vpop.permute.xlu0 %23
    %vm25 = vcmask 917312
    %26 = vst.msk [vmem:[#allocation0] ss:$8 sm:$0x3] %vm25, %v24
    %s27 = scalar_lea.vmem %s0, 12
    %s28 = smov 3
    %v29 = vld [vmem:[%s27] ss:$16 sm:%s28]
    %30 = vrot.lane.b32.xlu0 %v29, 96
    %v31 = vpop.permute.xlu0 %30
    %vm32 = vcmask 851712
    %33 = vst.msk [vmem:[#allocation0] ss:$8 sm:$0x3] %vm32, %v31
    %s34 = scalar_lea.vmem %s0, 11
    %s35 = smov 3
    %v36 = vld [vmem:[%s34] ss:$16 sm:%s35]
    %37 = vrot.lane.b32.xlu0 %v36, 88
    %v38 = vpop.permute.xlu0 %37
    %vm39 = vcmask 786112
    %40 = vst.msk [vmem:[#allocation0] ss:$8 sm:$0x3] %vm39, %v38
    %s41 = scalar_lea.vmem %s0, 10
    %s42 = smov 3
    %v43 = vld [vmem:[%s41] ss:$16 sm:%s42]
    %44 = vrot.lane.b32.xlu0 %v43, 80
    %v45 = vpop.permute.xlu0 %44
    %vm46 = vcmask 720512
    %47 = vst.msk [vmem:[#allocation0] ss:$8 sm:$0x3] %vm46, %v45
    %s48 = scalar_lea.vmem %s0, 9
    %s49 = smov 3
    %v50 = vld [vmem:[%s48] ss:$16 sm:%s49]
    %51 = vrot.lane.b32.xlu0 %v50, 72
    %v52 = vpop.permute.xlu0 %51
    %vm53 = vcmask 654912
    %54 = vst.msk [vmem:[#allocation0] ss:$8 sm:$0x3] %vm53, %v52
    %s55 = scalar_lea.vmem %s0, 8
    %s56 = smov 3
    %v57 = vld [vmem:[%s55] ss:$16 sm:%s56]
    %58 = vrot.lane.b32.xlu0 %v57, 64
    %v59 = vpop.permute.xlu0 %58
    %vm60 = vcmask 589312
    %61 = vst.msk [vmem:[#allocation0] ss:$8 sm:$0x3] %vm60, %v59
    %s62 = scalar_lea.vmem %s0, 7
    %s63 = smov 3
    %v64 = vld [vmem:[%s62] ss:$16 sm:%s63]
    %65 = vrot.lane.b32.xlu0 %v64, 56
    %v66 = vpop.permute.xlu0 %65
    %vm67 = vcmask 523712
    %68 = vst.msk [vmem:[#allocation0] ss:$8 sm:$0x3] %vm67, %v66
    %s69 = scalar_lea.vmem %s0, 6
    %s70 = smov 3
    %v71 = vld [vmem:[%s69] ss:$16 sm:%s70]
    %72 = vrot.lane.b32.xlu0 %v71, 48
    %v73 = vpop.permute.xlu0 %72
    %vm74 = vcmask 458112
    %75 = vst.msk [vmem:[#allocation0] ss:$8 sm:$0x3] %vm74, %v73
    %s76 = scalar_lea.vmem %s0, 5
    %s77 = smov 3
    %v78 = vld [vmem:[%s76] ss:$16 sm:%s77]
    %79 = vrot.lane.b32.xlu0 %v78, 40
    %v80 = vpop.permute.xlu0 %79
    %vm81 = vcmask 392512
    %82 = vst.msk [vmem:[#allocation0] ss:$8 sm:$0x3] %vm81, %v80
    %s83 = scalar_lea.vmem %s0, 4
    %s84 = smov 3
    %v85 = vld [vmem:[%s83] ss:$16 sm:%s84]
    %86 = vrot.lane.b32.xlu0 %v85, 32
    %v87 = vpop.permute.xlu0 %86
    %vm88 = vcmask 326912
    %89 = vst.msk [vmem:[#allocation0] ss:$8 sm:$0x3] %vm88, %v87
    %s90 = scalar_lea.vmem %s0, 3
    %s91 = smov 3
    %v92 = vld [vmem:[%s90] ss:$16 sm:%s91]
    %93 = vrot.lane.b32.xlu0 %v92, 24
    %v94 = vpop.permute.xlu0 %93
    %vm95 = vcmask 261312
    %96 = vst.msk [vmem:[#allocation0] ss:$8 sm:$0x3] %vm95, %v94
    %s97 = scalar_lea.vmem %s0, 2
    %s98 = smov 3
    %v99 = vld [vmem:[%s97] ss:$16 sm:%s98]
    %100 = vrot.lane.b32.xlu0 %v99, 16
    %v101 = vpop.permute.xlu0 %100
    %vm102 = vcmask 195712
    %103 = vst.msk [vmem:[#allocation0] ss:$8 sm:$0x3] %vm102, %v101
    %s104 = scalar_lea.vmem %s0, 1
    %s105 = smov 3
    %v106 = vld [vmem:[%s104] ss:$16 sm:%s105]
    %107 = vrot.lane.b32.xlu0 %v106, 8
    %v108 = vpop.permute.xlu0 %107
    %vm109 = vcmask 130112
    %110 = vst.msk [vmem:[#allocation0] ss:$8 sm:$0x3] %vm109, %v108
    %s112 = sshllo.u32 0, 1
    %v114 = vld [vmem:[#allocation0] sm:%s112]
    %s115 = sshllo.u32 0, 1
    %116 = vst [vmem:[%s1] sm:%s115] %v114
    %s117 = scalar_lea.vmem [#allocation0], 8
    %v118 = vld [vmem:[%s117] sm:%s112]
    %s119 = sshllo.u32 0, 1
    %s120 = scalar_lea.vmem %s1, 1
    %121 = vst [vmem:[%s120] sm:%s119] %v118

// kernel: generator_forward.24
$region0: #{generator_forward.24}
  #allocation0 [shape = 'u32[]', space=smem, size = 0x4, offset = 0x4, fixed_abs, tag = 'smem constant byte address 0x4 - core index']
  #allocation1 [shape = 'u32[144,128]{1,0:T(1,128)}', space=vmem, size = 0x12000, scoped, tag = 'internal scratch']
  %s0 = inlined_call_operand.vmem [shape: f32[64,256], index: 0, kind: input, shape index: {}]
  %s1 = inlined_call_operand.vmem [shape: f32[1,256], index: 1, kind: output, shape index: {0}]
  %s2 = inlined_call_operand.vmem [shape: f32[1,256], index: 2, kind: output, shape index: {1}]
  %3 = xla_tuple %s1, %s2
  %s4 = sld [smem:[#allocation0]]
  $region26: #{generator_forward.24} parent=0
    _
  %s6 = ssub.s32 1, %s4
  %s7 = scalar_select 0, %s6, %s4
  // Predicated region
  $region2: #{generator_forward.24} parent=0 // pred_check
    _
  $region3: #{generator_forward.24} parent=0 // pred_check_branch
    %9 = sbr.rel (0) target = $region5
  $region4: #{generator_forward.24} parent=0 // pred_region
    _
  $region5: #{generator_forward.24} parent=0 // pred_fallthru
    _
  %p10 = scmp.eq.s32.totalorder 0, 0
  // Predicated region
  $region6: #{generator_forward.24} parent=0 // pred_check
    %p11 = pneg %p10
  $region7: #{generator_forward.24} parent=0 // pred_check_branch
    %13 = sbr.rel (%p11) target = $region9
  $region8: #{generator_forward.24} parent=0 // pred_region
    %v14 = vlaneseq
    %vm15 = vcmp.ge.s32.totalorder %v14, 0
    %vm16 = vcmp.lt.s32.totalorder %v14, 256
    %vm17 = vmand %vm15, %vm16
    %18 = vst.msk [vmem:[%s1] sm:$0x3] %vm17, 0.0
    %19 = vst.msk [vmem:[%s2] sm:$0x3] %vm17, 0.0
  $region9: #{generator_forward.24} parent=0 // pred_fallthru
    _
  %v20 = vld [vmem:[%s0] sm:$0xff]
  %v21 = vld [vmem:[%s0 + $0x8] sm:$0xff]
  %v22 = vld [vmem:[%s0 + $0x10] sm:$0xff]
  %v23 = vld [vmem:[%s0 + $0x18] sm:$0xff]
  %v24 = vld [vmem:[%s0 + $0x20] sm:$0xff]
  %v25 = vld [vmem:[%s0 + $0x28] sm:$0xff]
  %v26 = vld [vmem:[%s0 + $0x30] sm:$0xff]
  %v27 = vld [vmem:[%s0 + $0x38] sm:$0xff]
  %v28 = vld [vmem:[%s0 + $0x40] sm:$0xff]
  %v29 = vld [vmem:[%s0 + $0x48] sm:$0xff]
  %v30 = vld [vmem:[%s0 + $0x50] sm:$0xff]
  %v31 = vld [vmem:[%s0 + $0x58] sm:$0xff]
  %v32 = vld [vmem:[%s0 + $0x60] sm:$0xff]
  %v33 = vld [vmem:[%s0 + $0x68] sm:$0xff]
  %v34 = vld [vmem:[%s0 + $0x70] sm:$0xff]
  %v35 = vld [vmem:[%s0 + $0x78] sm:$0xff]
  %v36 = vld [vmem:[%s1] sm:$0x3]
  %v37 = vadd.f32 %v20, %v22
  %v38 = vadd.f32 %v37, %v24
  %v39 = vadd.f32 %v38, %v26
  %v40 = vadd.f32 %v39, %v28
  %v41 = vadd.f32 %v40, %v30
  %v42 = vadd.f32 %v41, %v32
  %v43 = vadd.f32 %v42, %v34
  %v44 = vrot.slane %v43, 4
  %v45 = vadd.f32 %v43, %v44
  %v46 = vrot.slane %v45, 2
  %v47 = vadd.f32 %v45, %v46
  %v48 = vrot.slane %v47, 1
  %v49 = vadd.f32 %v47, %v48
  %v50 = vadd.f32 %v21, %v23
  %v51 = vadd.f32 %v50, %v25
  %v52 = vadd.f32 %v51, %v27
  %v53 = vadd.f32 %v52, %v29
  %v54 = vadd.f32 %v53, %v31
  %v55 = vadd.f32 %v54, %v33
  %v56 = vadd.f32 %v55, %v35
  %v57 = vrot.slane %v56, 4
  %v58 = vadd.f32 %v56, %v57
  %v59 = vrot.slane %v58, 2
  %v60 = vadd.f32 %v58, %v59
  %v61 = vrot.slane %v60, 1
  %v62 = vadd.f32 %v60, %v61
  %v65 = vcombine.low %v49, %v62
  %v67 = vunpack.c.l.s4 1966171168
  %v68 = vunpack.c.0.s8 %v67
  %v69 = vlaneseq
  %v70 = vshrl.u32 %v69, 7
  %v71 = vsub.s32 %v68, %v70
  %v72 = vrot.slane %v65, %v71
  %v74 = vunpack.c.l.s4 1966171168
  %v75 = vunpack.c.0.s8 %v74
  %v76 = vlaneseq
  %v77 = vshrl.u32 %v76, 7
  %v78 = vsub.s32 %v75, %v77
  %v79 = vrot.slane %v72, %v78
  %v81 = vadd.f32 %v36, %v79
  %v82 = vlaneseq
  %vm83 = vcmp.ge.s32.totalorder %v82, 0
  %vm84 = vcmp.lt.s32.totalorder %v82, 256
  %vm85 = vmand %vm83, %vm84
  %86 = vst.msk [vmem:[%s1] sm:$0x3] %vm85, %v81
  %v87 = vld [vmem:[%s2] sm:$0x3]
  %v88 = vmul.f32 %v20, %v20
  %v89 = vmul.f32 %v21, %v21
  %v90 = vmul.f32 %v22, %v22
  %v91 = vmul.f32 %v23, %v23
  %v92 = vmul.f32 %v24, %v24
  %v93 = vmul.f32 %v25, %v25
  %v94 = vmul.f32 %v26, %v26
  %v95 = vmul.f32 %v27, %v27
  %v96 = vmul.f32 %v28, %v28
  %v97 = vmul.f32 %v29, %v29
  %v98 = vmul.f32 %v30, %v30
  %v99 = vmul.f32 %v31, %v31
  %v100 = vmul.f32 %v32, %v32
  %v101 = vmul.f32 %v33, %v33
  %v102 = vmul.f32 %v34, %v34
  %v103 = vmul.f32 %v35, %v35
  %v104 = vadd.f32 %v88, %v90
  %v105 = vadd.f32 %v104, %v92
  %v106 = vadd.f32 %v105, %v94
  %v107 = vadd.f32 %v106, %v96
  %v108 = vadd.f32 %v107, %v98
  %v109 = vadd.f32 %v108, %v100
  %v110 = vadd.f32 %v109, %v102
  %v111 = vrot.slane %v110, 4
  %v112 = vadd.f32 %v110, %v111
  %v113 = vrot.slane %v112, 2
  %v114 = vadd.f32 %v112, %v113
  %v115 = vrot.slane %v114, 1
  %v116 = vadd.f32 %v114, %v115
  %v117 = vadd.f32 %v89, %v91
  %v118 = vadd.f32 %v117, %v93
  %v119 = vadd.f32 %v118, %v95
  %v120 = vadd.f32 %v119, %v97
  %v121 = vadd.f32 %v120, %v99
  %v122 = vadd.f32 %v121, %v101
  %v123 = vadd.f32 %v122, %v103
  %v124 = vrot.slane %v123, 4
  %v125 = vadd.f32 %v123, %v124
  %v126 = vrot.slane %v125, 2
  %v127 = vadd.f32 %v125, %v126
  %v128 = vrot.slane %v127, 1
  %v129 = vadd.f32 %v127, %v128
  %v132 = vcombine.low %v116, %v129
  %v134 = vunpack.c.l.s4 1966171168
  %v135 = vunpack.c.0.s8 %v134
  %v136 = vlaneseq
  %v137 = vshrl.u32 %v136, 7
  %v138 = vsub.s32 %v135, %v137
  %v139 = vrot.slane %v132, %v138
  %v141 = vunpack.c.l.s4 1966171168
  %v142 = vunpack.c.0.s8 %v141
  %v143 = vlaneseq
  %v144 = vshrl.u32 %v143, 7
  %v145 = vsub.s32 %v142, %v144
  %v146 = vrot.slane %v139, %v145
  %v148 = vadd.f32 %v87, %v146
  %149 = vst.msk [vmem:[%s2] sm:$0x3] %vm85, %v148
  // Predicated region
  $region10: #{generator_forward.24} parent=0 // pred_check
    _
  $region11: #{generator_forward.24} parent=0 // pred_check_branch
    %151 = sbr.rel (0) target = $region13
  $region12: #{generator_forward.24} parent=0 // pred_region
    _
  $region13: #{generator_forward.24} parent=0 // pred_fallthru
    _
  // Predicated region
  $region14: #{generator_forward.24} parent=0 // pred_check
    _
  $region15: #{generator_forward.24} parent=0 // pred_check_branch
    %153 = sbr.rel (0) target = $region17
  $region16: #{generator_forward.24} parent=0 // pred_region
    _
  $region17: #{generator_forward.24} parent=0 // pred_fallthru
    _
  // Predicated region
  $region18: #{generator_forward.24} parent=0 // pred_check
    _
  $region19: #{generator_forward.24} parent=0 // pred_check_branch
    %155 = sbr.rel (0) target = $region21
  $region20: #{generator_forward.24} parent=0 // pred_region
    _
  $region21: #{generator_forward.24} parent=0 // pred_fallthru
    _
  // Predicated region
  $region22: #{generator_forward.24} parent=0 // pred_check
    _
  $region23: #{generator_forward.24} parent=0 // pred_check_branch
    %157 = sbr.rel (0) target = $region25
  $region24: #{generator_forward.24} parent=0 // pred_region
    _
  $region25: #{generator_forward.24} parent=0 // pred_fallthru
    _

// kernel: generator_forward.25
$region0: #{generator_forward.25}
  #allocation0 [shape = 'u32[]', space=smem, size = 0x4, offset = 0x4, fixed_abs, tag = 'smem constant byte address 0x4 - core index']
  #allocation1 [shape = 'u32[144,128]{1,0:T(1,128)}', space=vmem, size = 0x12000, scoped, tag = 'internal scratch']
  %s0 = inlined_call_operand.vmem [shape: f32[64,256], index: 0, kind: input, shape index: {}]
  %s1 = inlined_call_operand.vmem [shape: f32[1,256], index: 1, kind: input, shape index: {}]
  %s2 = inlined_call_operand.vmem [shape: f32[1,256], index: 2, kind: input, shape index: {}]
  %s3 = inlined_call_operand.vmem [shape: f32[64,256], index: 3, kind: output, shape index: {}]
  %s4 = sld [smem:[#allocation0]]
  $region22: #{generator_forward.25} parent=0
    _
  %s6 = ssub.s32 1, %s4
  %s7 = scalar_select 0, %s6, %s4
  // Predicated region
  $region2: #{generator_forward.25} parent=0 // pred_check
    _
  $region3: #{generator_forward.25} parent=0 // pred_check_branch
    %9 = sbr.rel (0) target = $region5
  $region4: #{generator_forward.25} parent=0 // pred_region
    _
  $region5: #{generator_forward.25} parent=0 // pred_fallthru
    _
  // Predicated region
  $region6: #{generator_forward.25} parent=0 // pred_check
    _
  $region7: #{generator_forward.25} parent=0 // pred_check_branch
    %11 = sbr.rel (0) target = $region9
  $region8: #{generator_forward.25} parent=0 // pred_region
    _
  $region9: #{generator_forward.25} parent=0 // pred_fallthru
    _
  // Predicated region
  $region10: #{generator_forward.25} parent=0 // pred_check
    _
  $region11: #{generator_forward.25} parent=0 // pred_check_branch
    %13 = sbr.rel (0) target = $region13
  $region12: #{generator_forward.25} parent=0 // pred_region
    _
  $region13: #{generator_forward.25} parent=0 // pred_fallthru
    _
  %v14 = vld [vmem:[%s0] sm:$0xff]
  %v15 = vld [vmem:[%s0 + $0x8] sm:$0xff]
  %v16 = vld [vmem:[%s0 + $0x10] sm:$0xff]
  %v17 = vld [vmem:[%s0 + $0x18] sm:$0xff]
  %v18 = vld [vmem:[%s0 + $0x20] sm:$0xff]
  %v19 = vld [vmem:[%s0 + $0x28] sm:$0xff]
  %v20 = vld [vmem:[%s0 + $0x30] sm:$0xff]
  %v21 = vld [vmem:[%s0 + $0x38] sm:$0xff]
  %v22 = vld [vmem:[%s0 + $0x40] sm:$0xff]
  %v23 = vld [vmem:[%s0 + $0x48] sm:$0xff]
  %v24 = vld [vmem:[%s0 + $0x50] sm:$0xff]
  %v25 = vld [vmem:[%s0 + $0x58] sm:$0xff]
  %v26 = vld [vmem:[%s0 + $0x60] sm:$0xff]
  %v27 = vld [vmem:[%s0 + $0x68] sm:$0xff]
  %v28 = vld [vmem:[%s0 + $0x70] sm:$0xff]
  %v29 = vld [vmem:[%s0 + $0x78] sm:$0xff]
  %v30 = vld [vmem:[%s1] sm:$0x3]
  %v32 = vlaneseq
  %v33 = vshrl.u32 %v32, 7
  %v34 = vsub.s32 0, %v33
  %v35 = vrot.slane %v30, %v34
  %v36 = vlaneseq
  %v37 = vshrl.u32 %v36, 7
  %v38 = vsub.s32 1, %v37
  %v39 = vrot.slane %v30, %v38
  %v42 = vmul.f32 %v14, %v35
  %v43 = vmul.f32 %v15, %v39
  %v44 = vmul.f32 %v16, %v35
  %v45 = vmul.f32 %v17, %v39
  %v46 = vmul.f32 %v18, %v35
  %v47 = vmul.f32 %v19, %v39
  %v48 = vmul.f32 %v20, %v35
  %v49 = vmul.f32 %v21, %v39
  %v50 = vmul.f32 %v22, %v35
  %v51 = vmul.f32 %v23, %v39
  %v52 = vmul.f32 %v24, %v35
  %v53 = vmul.f32 %v25, %v39
  %v54 = vmul.f32 %v26, %v35
  %v55 = vmul.f32 %v27, %v39
  %v56 = vmul.f32 %v28, %v35
  %v57 = vmul.f32 %v29, %v39
  %v58 = vld [vmem:[%s2] sm:$0x3]
  %v60 = vlaneseq
  %v61 = vshrl.u32 %v60, 7
  %v62 = vsub.s32 0, %v61
  %v63 = vrot.slane %v58, %v62
  %v64 = vlaneseq
  %v65 = vshrl.u32 %v64, 7
  %v66 = vsub.s32 1, %v65
  %v67 = vrot.slane %v58, %v66
  %v70 = vadd.f32 %v42, %v63
  %v71 = vadd.f32 %v43, %v67
  %v72 = vadd.f32 %v44, %v63
  %v73 = vadd.f32 %v45, %v67
  %v74 = vadd.f32 %v46, %v63
  %v75 = vadd.f32 %v47, %v67
  %v76 = vadd.f32 %v48, %v63
  %v77 = vadd.f32 %v49, %v67
  %v78 = vadd.f32 %v50, %v63
  %v79 = vadd.f32 %v51, %v67
  %v80 = vadd.f32 %v52, %v63
  %v81 = vadd.f32 %v53, %v67
  %v82 = vadd.f32 %v54, %v63
  %v83 = vadd.f32 %v55, %v67
  %v84 = vadd.f32 %v56, %v63
  %v85 = vadd.f32 %v57, %v67
  %vm86 = vcmp.gt.f32.partialorder %v70, 0.0
  %vm87 = vcmp.gt.f32.partialorder %v71, 0.0
  %vm88 = vcmp.gt.f32.partialorder %v72, 0.0
  %vm89 = vcmp.gt.f32.partialorder %v73, 0.0
  %vm90 = vcmp.gt.f32.partialorder %v74, 0.0
  %vm91 = vcmp.gt.f32.partialorder %v75, 0.0
  %vm92 = vcmp.gt.f32.partialorder %v76, 0.0
  %vm93 = vcmp.gt.f32.partialorder %v77, 0.0
  %vm94 = vcmp.gt.f32.partialorder %v78, 0.0
  %vm95 = vcmp.gt.f32.partialorder %v79, 0.0
  %vm96 = vcmp.gt.f32.partialorder %v80, 0.0
  %vm97 = vcmp.gt.f32.partialorder %v81, 0.0
  %vm98 = vcmp.gt.f32.partialorder %v82, 0.0
  %vm99 = vcmp.gt.f32.partialorder %v83, 0.0
  %vm100 = vcmp.gt.f32.partialorder %v84, 0.0
  %vm101 = vcmp.gt.f32.partialorder %v85, 0.0
  %v102 = vmul.f32 %v70, 0.01
  %v103 = vmul.f32 %v71, 0.01
  %v104 = vmul.f32 %v72, 0.01
  %v105 = vmul.f32 %v73, 0.01
  %v106 = vmul.f32 %v74, 0.01
  %v107 = vmul.f32 %v75, 0.01
  %v108 = vmul.f32 %v76, 0.01
  %v109 = vmul.f32 %v77, 0.01
  %v110 = vmul.f32 %v78, 0.01
  %v111 = vmul.f32 %v79, 0.01
  %v112 = vmul.f32 %v80, 0.01
  %v113 = vmul.f32 %v81, 0.01
  %v114 = vmul.f32 %v82, 0.01
  %v115 = vmul.f32 %v83, 0.01
  %v116 = vmul.f32 %v84, 0.01
  %v117 = vmul.f32 %v85, 0.01
  %v118 = vsel %vm86, %v70, %v102
  %v119 = vsel %vm87, %v71, %v103
  %v120 = vsel %vm88, %v72, %v104
  %v121 = vsel %vm89, %v73, %v105
  %v122 = vsel %vm90, %v74, %v106
  %v123 = vsel %vm91, %v75, %v107
  %v124 = vsel %vm92, %v76, %v108
  %v125 = vsel %vm93, %v77, %v109
  %v126 = vsel %vm94, %v78, %v110
  %v127 = vsel %vm95, %v79, %v111
  %v128 = vsel %vm96, %v80, %v112
  %v129 = vsel %vm97, %v81, %v113
  %v130 = vsel %vm98, %v82, %v114
  %v131 = vsel %vm99, %v83, %v115
  %v132 = vsel %vm100, %v84, %v116
  %v133 = vsel %vm101, %v85, %v117
  %134 = vst [vmem:[%s3] sm:$0xff] %v118
  %135 = vst [vmem:[%s3 + $0x8] sm:$0xff] %v119
  %136 = vst [vmem:[%s3 + $0x10] sm:$0xff] %v120
  %137 = vst [vmem:[%s3 + $0x18] sm:$0xff] %v121
  %138 = vst [vmem:[%s3 + $0x20] sm:$0xff] %v122
  %139 = vst [vmem:[%s3 + $0x28] sm:$0xff] %v123
  %140 = vst [vmem:[%s3 + $0x30] sm:$0xff] %v124
  %141 = vst [vmem:[%s3 + $0x38] sm:$0xff] %v125
  %142 = vst [vmem:[%s3 + $0x40] sm:$0xff] %v126
  %143 = vst [vmem:[%s3 + $0x48] sm:$0xff] %v127
  %144 = vst [vmem:[%s3 + $0x50] sm:$0xff] %v128
  %145 = vst [vmem:[%s3 + $0x58] sm:$0xff] %v129
  %146 = vst [vmem:[%s3 + $0x60] sm:$0xff] %v130
  %147 = vst [vmem:[%s3 + $0x68] sm:$0xff] %v131
  %148 = vst [vmem:[%s3 + $0x70] sm:$0xff] %v132
  %149 = vst [vmem:[%s3 + $0x78] sm:$0xff] %v133
  // Predicated region
  $region14: #{generator_forward.25} parent=0 // pred_check
    _
  $region15: #{generator_forward.25} parent=0 // pred_check_branch
    %151 = sbr.rel (0) target = $region17
  $region16: #{generator_forward.25} parent=0 // pred_region
    _
  $region17: #{generator_forward.25} parent=0 // pred_fallthru
    _
  // Predicated region
  $region18: #{generator_forward.25} parent=0 // pred_check
    _
  $region19: #{generator_forward.25} parent=0 // pred_check_branch
    %153 = sbr.rel (0) target = $region21
  $region20: #{generator_forward.25} parent=0 // pred_region
    _
  $region21: #{generator_forward.25} parent=0 // pred_fallthru
    _

// kernel: generator_forward.26
$region0: #{generator_forward.26}
  #allocation0 [shape = 'u32[]', space=smem, size = 0x4, offset = 0x4, fixed_abs, tag = 'smem constant byte address 0x4 - core index']
  #allocation1 [shape = 'u32[144,128]{1,0:T(1,128)}', space=vmem, size = 0x12000, scoped, tag = 'internal scratch']
  #allocation2 [shape = 'f32[512,48]{1,0:T(8,128)}', space=vmem, size = 0x40000, scoped, tag = 'scratch operand']
  %s0 = inlined_call_operand.vmem [shape: f32[2048,8], index: 0, kind: input, shape index: {}]
  %s1 = inlined_call_operand.vmem [shape: f32[8,48], index: 1, kind: input, shape index: {}]
  %s2 = inlined_call_operand.vmem [shape: f32[2048,48], index: 2, kind: output, shape index: {}]
  %s3 = sld [smem:[#allocation0]]
  $region49: #{generator_forward.26} parent=0
    _
  %s5 = ssub.s32 1, %s3
  %s6 = scalar_select 0, %s5, %s3
  loop: start=0, step=1, limit=6
  $region2: #{generator_forward.26} parent=0 // loop_pre_header
    _
  $region3: #{generator_forward.26} parent=0 // loop_header
    %s8 = sphi 0, %s12
    %p9 = scmp.ge.s32.totalorder %s8, 6
    %s15 = sphi 0, %s34
    %s16 = sphi 0, %s30
    %s17 = sphi 0, %s26
    %s18 = sphi 0, %s15
    %s19 = sphi 0, %s16
    %s20 = sphi 0, %s17
    %s21 = sphi 0, %s18
    %s22 = sphi 0, %s19
    %s23 = sphi 0, %s20
    %s39 = sphi 0, %s41
    %s42 = sphi 0, %s39
    %s43 = sphi 0, %s42
    %s59 = sphi 0, %s43
    %s67 = sphi 0, %s69
    %s70 = sphi 0, %s67
    %s71 = sphi 0, %s70
    %s87 = sphi 0, %s71
    %s95 = sphi 0, %s97
    %s98 = sphi 0, %s95
    %s99 = sphi 0, %s98
    %s115 = sphi 0, %s99
  $region4: #{generator_forward.26} parent=0 // loop_header_branch
    %11 = sbr.rel (%p9) target = $region8
  $region5: #{generator_forward.26} parent=0 // loop_body
    %s13 = ssub.s32 %s8, 1
    %s14 = ssub.s32 %s8, 2
    %s24 = sadd.s32 1, %s17
    %p25 = scmp.ge.s32.totalorder %s24, 1
    %s26 = scalar_select %p25, 0, %s24
    %s27 = sadd.s32 1, %s16
    %s28 = scalar_select %p25, %s27, %s16
    %p29 = scmp.ge.s32.totalorder %s28, 1
    %s30 = scalar_select %p29, 0, %s28
    %s31 = sadd.s32 1, %s15
    %s32 = scalar_select %p29, %s31, %s15
    %p33 = scmp.ge.s32.totalorder %s32, 4
    %s34 = scalar_select %p33, 0, %s32
    %s35 = ssub.s32 %s15, %s34
    %s36 = ssub.s32 %s17, %s26
    %s37 = sor.u32 %s35, %s36
    %p38 = scmp.eq.s32.totalorder %s37, 0
    %s40 = sadd.s32 %s39, 1
    %s41 = scalar_select %p38, %s39, %s40
    %p44 = pneg %p38
    %p45 = scmp.eq.s32.totalorder %s8, 3
    %p46 = por %p44, %p45
    %p47 = scmp.ne.s32.totalorder %s39, %s42
    %p48 = scmp.eq.s32.totalorder %s8, 0
    %p49 = por %p47, %p48
    %p50 = scmp.ne.s32.totalorder %s39, %s42
    %p51 = scmp.eq.s32.totalorder %s13, 3
    %p52 = por %p50, %p51
    %p53 = scmp.ne.s32.totalorder %s42, %s43
    %p54 = scmp.eq.s32.totalorder %s13, 0
    %p55 = por %p53, %p54
    %p56 = scmp.ne.s32.totalorder %s42, %s43
    %p57 = scmp.eq.s32.totalorder %s14, 3
    %p58 = por %p56, %p57
    %p60 = scmp.ne.s32.totalorder %s43, %s59
    %p61 = scmp.eq.s32.totalorder %s14, 0
    %p62 = por %p60, %p61
    %s63 = ssub.s32 %s17, %s26
    %s64 = ssub.s32 %s16, %s30
    %s65 = sor.u32 %s63, %s64
    %p66 = scmp.eq.s32.totalorder %s65, 0
    %s68 = sadd.s32 %s67, 1
    %s69 = scalar_select %p66, %s67, %s68
    %p72 = pneg %p66
    %p73 = scmp.eq.s32.totalorder %s8, 3
    %p74 = por %p72, %p73
    %p75 = scmp.ne.s32.totalorder %s67, %s70
    %p76 = scmp.eq.s32.totalorder %s8, 0
    %p77 = por %p75, %p76
    %p78 = scmp.ne.s32.totalorder %s67, %s70
    %p79 = scmp.eq.s32.totalorder %s13, 3
    %p80 = por %p78, %p79
    %p81 = scmp.ne.s32.totalorder %s70, %s71
    %p82 = scmp.eq.s32.totalorder %s13, 0
    %p83 = por %p81, %p82
    %p84 = scmp.ne.s32.totalorder %s70, %s71
    %p85 = scmp.eq.s32.totalorder %s14, 3
    %p86 = por %p84, %p85
    %p88 = scmp.ne.s32.totalorder %s71, %s87
    %p89 = scmp.eq.s32.totalorder %s14, 0
    %p90 = por %p88, %p89
    %s91 = ssub.s32 %s15, %s34
    %s92 = ssub.s32 %s16, %s30
    %s93 = sor.u32 %s91, %s92
    %p94 = scmp.eq.s32.totalorder %s93, 0
    %s96 = sadd.s32 %s95, 1
    %s97 = scalar_select %p94, %s95, %s96
    %p100 = pneg %p94
    %p101 = scmp.eq.s32.totalorder %s8, 3
    %p102 = por %p100, %p101
    %p103 = scmp.ne.s32.totalorder %s95, %s98
    %p104 = scmp.eq.s32.totalorder %s8, 0
    %p105 = por %p103, %p104
    %p106 = scmp.ne.s32.totalorder %s95, %s98
    %p107 = scmp.eq.s32.totalorder %s13, 3
    %p108 = por %p106, %p107
    %p109 = scmp.ne.s32.totalorder %s98, %s99
    %p110 = scmp.eq.s32.totalorder %s13, 0
    %p111 = por %p109, %p110
    %p112 = scmp.ne.s32.totalorder %s98, %s99
    %p113 = scmp.eq.s32.totalorder %s14, 3
    %p114 = por %p112, %p113
    %p116 = scmp.ne.s32.totalorder %s99, %s115
    %p117 = scmp.eq.s32.totalorder %s14, 0
    %p118 = por %p116, %p117
    %p119 = scmp.le.s32.totalorder 1, %s8
    %p120 = scmp.lt.s32.totalorder %s8, 5
    %p121 = pnand %p119, %p120
    %p122 = pneg %p121
    // Predicated region
    $region9: #{generator_forward.26} parent=5 // pred_check
      _
    $region10: #{generator_forward.26} parent=5 // pred_check_branch
      %124 = sbr.rel (%p121) target = $region12
    $region11: #{generator_forward.26} parent=5 // pred_region
      %s125 = ssub.s32 %s8, 1
      // Predicated region
      $region13: #{generator_forward.26} parent=11 // pred_check
        %p126 = pneg %p83
      $region14: #{generator_forward.26} parent=11 // pred_check_branch
        %128 = sbr.rel (%p126) target = $region16
      $region15: #{generator_forward.26} parent=11 // pred_region
        %p129 = scmp.lt.s32.totalorder %s20, 0
        %s130 = scalar_select %p129, %s20, 0
        %p131 = scmp.lt.s32.totalorder %s19, 0
        %s132 = scalar_select %p131, %s19, 0
        %s133 = sadd.s32 %s132, %s130
        %s134 = smul.addr %s133, 8
        %s135 = scalar_lea.vmem %s1, %s134
      $region16: #{generator_forward.26} parent=11 // pred_fallthru
        _
    $region12: #{generator_forward.26} parent=5 // pred_fallthru
      _
    %p136 = scmp.lt.s32.totalorder %s8, 4
    // Predicated region
    $region17: #{generator_forward.26} parent=5 // pred_check
      %p137 = pneg %p136
    $region18: #{generator_forward.26} parent=5 // pred_check_branch
      %139 = sbr.rel (%p137) target = $region20
    $region19: #{generator_forward.26} parent=5 // pred_region
      // Predicated region
      $region21: #{generator_forward.26} parent=19 // pred_check
        %p140 = pneg %p49
      $region22: #{generator_forward.26} parent=19 // pred_check_branch
        %142 = sbr.rel (%p140) target = $region24
      $region23: #{generator_forward.26} parent=19 // pred_region
        %s143 = smul.u32 64, %s15
        %p144 = scmp.lt.s32.totalorder %s143, 255
        %s145 = scalar_select %p144, %s143, 255
        %p146 = scmp.lt.s32.totalorder %s17, 0
        %s147 = scalar_select %p146, %s17, 0
        %s148 = sadd.s32 %s147, %s145
        %s149 = smul.addr %s148, 8
        %s150 = scalar_lea.vmem %s0, %s149
        %s151 = smul.u32 64, %s15
      $region24: #{generator_forward.26} parent=19 // pred_fallthru
        _
    $region20: #{generator_forward.26} parent=5 // pred_fallthru
      _
    %p152 = scmp.le.s32.totalorder 1, %s8
    %p153 = scmp.lt.s32.totalorder %s8, 5
    %p154 = pnand %p152, %p153
    %p155 = pneg %p154
    // Predicated region
    $region25: #{generator_forward.26} parent=5 // pred_check
      _
    $region26: #{generator_forward.26} parent=5 // pred_check_branch
      %157 = sbr.rel (%p154) target = $region28
    $region27: #{generator_forward.26} parent=5 // pred_region
      %s158 = ssub.s32 %s8, 1
      %s159 = smul.u32 64, %s18
      %p160 = scmp.lt.s32.totalorder %s159, 255
      %s161 = scalar_select %p160, %s159, 255
      %p162 = scmp.lt.s32.totalorder %s20, 0
      %s163 = scalar_select %p162, %s20, 0
      %s164 = sadd.s32 %s163, %s161
      %s165 = smul.addr %s164, 8
      %s166 = scalar_lea.vmem %s0, %s165
      %p167 = pneg %p55
      %p168 = pneg %p52
      %p169 = scmp.lt.s32.totalorder %s20, 0
      %s170 = scalar_select %p169, %s20, 0
      %p171 = scmp.lt.s32.totalorder %s19, 0
      %s172 = scalar_select %p171, %s19, 0
      %s173 = sadd.s32 %s172, %s170
      %s174 = smul.addr %s173, 8
      %s175 = scalar_lea.vmem %s1, %s174
      %p176 = pneg %p83
      %p177 = pneg %p80
      %p178 = pneg %p111
      %p179 = pneg %p108
      %s180 = smul.u32 64, %s18
      %p181 = scmp.lt.s32.totalorder %s180, 255
      %s182 = scalar_select %p181, %s180, 255
      %p183 = scmp.lt.s32.totalorder %s19, 0
      %s184 = scalar_select %p183, %s19, 0
      %s185 = sadd.s32 %s184, %s182
      %s186 = smul.addr %s185, 8
      %s187 = scalar_lea.vmem %s2, %s186
      %s188 = smul.u32 64, %s18
      %p189 = scmp.lt.s32.totalorder %s188, 255
      %s190 = scalar_select %p189, %s188, 255
      %p191 = scmp.lt.s32.totalorder %s20, 0
      %s192 = scalar_select %p191, %s20, 0
      %s193 = sadd.s32 %s192, %s190
      %s194 = smul.addr %s193, 8
      %s195 = scalar_lea.vmem %s0, %s194
      %s196 = smul.u32 64, %s18
      %p197 = scmp.lt.s32.totalorder %s20, 0
      %s198 = scalar_select %p197, %s20, 0
      %p199 = scmp.lt.s32.totalorder %s19, 0
      %s200 = scalar_select %p199, %s19, 0
      %s201 = sadd.s32 %s200, %s198
      %s202 = smul.addr %s201, 8
      %s203 = scalar_lea.vmem %s1, %s202
      %s204 = smul.u32 64, %s18
      %p205 = scmp.lt.s32.totalorder %s204, 255
      %s206 = scalar_select %p205, %s204, 255
      %p207 = scmp.lt.s32.totalorder %s19, 0
      %s208 = scalar_select %p207, %s19, 0
      %s209 = sadd.s32 %s208, %s206
      %s210 = smul.addr %s209, 8
      %s211 = scalar_lea.vmem %s2, %s210
      %s212 = smul.u32 64, %s18
      %p213 = scmp.eq.s32.totalorder %s20, 0
      // Predicated region
      $region29: #{generator_forward.26} parent=27 // pred_check
        %p214 = pneg %p213
      $region30: #{generator_forward.26} parent=27 // pred_check_branch
        %216 = sbr.rel (%p214) target = $region32
      $region31: #{generator_forward.26} parent=27 // pred_region
        %vm217 = vcmask 392192
        %218 = vst.msk [vmem:[#allocation2] sm:$0xff] %vm217, 0.0
        %219 = vst.msk [vmem:[#allocation2 + $0x8] sm:$0xff] %vm217, 0.0
        %220 = vst.msk [vmem:[#allocation2 + $0x10] sm:$0xff] %vm217, 0.0
        %221 = vst.msk [vmem:[#allocation2 + $0x18] sm:$0xff] %vm217, 0.0
        %222 = vst.msk [vmem:[#allocation2 + $0x20] sm:$0xff] %vm217, 0.0
        %223 = vst.msk [vmem:[#allocation2 + $0x28] sm:$0xff] %vm217, 0.0
        %224 = vst.msk [vmem:[#allocation2 + $0x30] sm:$0xff] %vm217, 0.0
        %225 = vst.msk [vmem:[#allocation2 + $0x38] sm:$0xff] %vm217, 0.0
        %226 = vst.msk [vmem:[#allocation2 + $0x40] sm:$0xff] %vm217, 0.0
        %227 = vst.msk [vmem:[#allocation2 + $0x48] sm:$0xff] %vm217, 0.0
        %228 = vst.msk [vmem:[#allocation2 + $0x50] sm:$0xff] %vm217, 0.0
        %229 = vst.msk [vmem:[#allocation2 + $0x58] sm:$0xff] %vm217, 0.0
        %230 = vst.msk [vmem:[#allocation2 + $0x60] sm:$0xff] %vm217, 0.0
        %231 = vst.msk [vmem:[#allocation2 + $0x68] sm:$0xff] %vm217, 0.0
        %232 = vst.msk [vmem:[#allocation2 + $0x70] sm:$0xff] %vm217, 0.0
        %233 = vst.msk [vmem:[#allocation2 + $0x78] sm:$0xff] %vm217, 0.0
        %234 = vst.msk [vmem:[#allocation2 + $0x80] sm:$0xff] %vm217, 0.0
        %235 = vst.msk [vmem:[#allocation2 + $0x88] sm:$0xff] %vm217, 0.0
        %236 = vst.msk [vmem:[#allocation2 + $0x90] sm:$0xff] %vm217, 0.0
        %237 = vst.msk [vmem:[#allocation2 + $0x98] sm:$0xff] %vm217, 0.0
        %238 = vst.msk [vmem:[#allocation2 + $0xa0] sm:$0xff] %vm217, 0.0
        %239 = vst.msk [vmem:[#allocation2 + $0xa8] sm:$0xff] %vm217, 0.0
        %240 = vst.msk [vmem:[#allocation2 + $0xb0] sm:$0xff] %vm217, 0.0
        %241 = vst.msk [vmem:[#allocation2 + $0xb8] sm:$0xff] %vm217, 0.0
        %242 = vst.msk [vmem:[#allocation2 + $0xc0] sm:$0xff] %vm217, 0.0
        %243 = vst.msk [vmem:[#allocation2 + $0xc8] sm:$0xff] %vm217, 0.0
        %244 = vst.msk [vmem:[#allocation2 + $0xd0] sm:$0xff] %vm217, 0.0
        %245 = vst.msk [vmem:[#allocation2 + $0xd8] sm:$0xff] %vm217, 0.0
        %246 = vst.msk [vmem:[#allocation2 + $0xe0] sm:$0xff] %vm217, 0.0
        %247 = vst.msk [vmem:[#allocation2 + $0xe8] sm:$0xff] %vm217, 0.0
        %248 = vst.msk [vmem:[#allocation2 + $0xf0] sm:$0xff] %vm217, 0.0
        %249 = vst.msk [vmem:[#allocation2 + $0xf8] sm:$0xff] %vm217, 0.0
        %250 = vst.msk [vmem:[#allocation2 + $0x100] sm:$0xff] %vm217, 0.0
        %251 = vst.msk [vmem:[#allocation2 + $0x108] sm:$0xff] %vm217, 0.0
        %252 = vst.msk [vmem:[#allocation2 + $0x110] sm:$0xff] %vm217, 0.0
        %253 = vst.msk [vmem:[#allocation2 + $0x118] sm:$0xff] %vm217, 0.0
        %254 = vst.msk [vmem:[#allocation2 + $0x120] sm:$0xff] %vm217, 0.0
        %255 = vst.msk [vmem:[#allocation2 + $0x128] sm:$0xff] %vm217, 0.0
        %256 = vst.msk [vmem:[#allocation2 + $0x130] sm:$0xff] %vm217, 0.0
        %257 = vst.msk [vmem:[#allocation2 + $0x138] sm:$0xff] %vm217, 0.0
        %258 = vst.msk [vmem:[#allocation2 + $0x140] sm:$0xff] %vm217, 0.0
        %259 = vst.msk [vmem:[#allocation2 + $0x148] sm:$0xff] %vm217, 0.0
        %260 = vst.msk [vmem:[#allocation2 + $0x150] sm:$0xff] %vm217, 0.0
        %261 = vst.msk [vmem:[#allocation2 + $0x158] sm:$0xff] %vm217, 0.0
        %262 = vst.msk [vmem:[#allocation2 + $0x160] sm:$0xff] %vm217, 0.0
        %263 = vst.msk [vmem:[#allocation2 + $0x168] sm:$0xff] %vm217, 0.0
        %264 = vst.msk [vmem:[#allocation2 + $0x170] sm:$0xff] %vm217, 0.0
        %265 = vst.msk [vmem:[#allocation2 + $0x178] sm:$0xff] %vm217, 0.0
        %266 = vst.msk [vmem:[#allocation2 + $0x180] sm:$0xff] %vm217, 0.0
        %267 = vst.msk [vmem:[#allocation2 + $0x188] sm:$0xff] %vm217, 0.0
        %268 = vst.msk [vmem:[#allocation2 + $0x190] sm:$0xff] %vm217, 0.0
        %269 = vst.msk [vmem:[#allocation2 + $0x198] sm:$0xff] %vm217, 0.0
        %270 = vst.msk [vmem:[#allocation2 + $0x1a0] sm:$0xff] %vm217, 0.0
        %271 = vst.msk [vmem:[#allocation2 + $0x1a8] sm:$0xff] %vm217, 0.0
        %272 = vst.msk [vmem:[#allocation2 + $0x1b0] sm:$0xff] %vm217, 0.0
        %273 = vst.msk [vmem:[#allocation2 + $0x1b8] sm:$0xff] %vm217, 0.0
        %274 = vst.msk [vmem:[#allocation2 + $0x1c0] sm:$0xff] %vm217, 0.0
        %275 = vst.msk [vmem:[#allocation2 + $0x1c8] sm:$0xff] %vm217, 0.0
        %276 = vst.msk [vmem:[#allocation2 + $0x1d0] sm:$0xff] %vm217, 0.0
        %277 = vst.msk [vmem:[#allocation2 + $0x1d8] sm:$0xff] %vm217, 0.0
        %278 = vst.msk [vmem:[#allocation2 + $0x1e0] sm:$0xff] %vm217, 0.0
        %279 = vst.msk [vmem:[#allocation2 + $0x1e8] sm:$0xff] %vm217, 0.0
        %280 = vst.msk [vmem:[#allocation2 + $0x1f0] sm:$0xff] %vm217, 0.0
        %281 = vst.msk [vmem:[#allocation2 + $0x1f8] sm:$0xff] %vm217, 0.0
      $region32: #{generator_forward.26} parent=27 // pred_fallthru
        _
      %v282 = vld [vmem:[#allocation2] sm:$0xff]
      %v283 = vld [vmem:[#allocation2 + $0x8] sm:$0xff]
      %v284 = vld [vmem:[#allocation2 + $0x10] sm:$0xff]
      %v285 = vld [vmem:[#allocation2 + $0x18] sm:$0xff]
      %v286 = vld [vmem:[#allocation2 + $0x20] sm:$0xff]
      %v287 = vld [vmem:[#allocation2 + $0x28] sm:$0xff]
      %v288 = vld [vmem:[#allocation2 + $0x30] sm:$0xff]
      %v289 = vld [vmem:[#allocation2 + $0x38] sm:$0xff]
      %v290 = vld [vmem:[#allocation2 + $0x40] sm:$0xff]
      %v291 = vld [vmem:[#allocation2 + $0x48] sm:$0xff]
      %v292 = vld [vmem:[#allocation2 + $0x50] sm:$0xff]
      %v293 = vld [vmem:[#allocation2 + $0x58] sm:$0xff]
      %v294 = vld [vmem:[#allocation2 + $0x60] sm:$0xff]
      %v295 = vld [vmem:[#allocation2 + $0x68] sm:$0xff]
      %v296 = vld [vmem:[#allocation2 + $0x70] sm:$0xff]
      %v297 = vld [vmem:[#allocation2 + $0x78] sm:$0xff]
      %v298 = vld [vmem:[#allocation2 + $0x80] sm:$0xff]
      %v299 = vld [vmem:[#allocation2 + $0x88] sm:$0xff]
      %v300 = vld [vmem:[#allocation2 + $0x90] sm:$0xff]
      %v301 = vld [vmem:[#allocation2 + $0x98] sm:$0xff]
      %v302 = vld [vmem:[#allocation2 + $0xa0] sm:$0xff]
      %v303 = vld [vmem:[#allocation2 + $0xa8] sm:$0xff]
      %v304 = vld [vmem:[#allocation2 + $0xb0] sm:$0xff]
      %v305 = vld [vmem:[#allocation2 + $0xb8] sm:$0xff]
      %v306 = vld [vmem:[#allocation2 + $0xc0] sm:$0xff]
      %v307 = vld [vmem:[#allocation2 + $0xc8] sm:$0xff]
      %v308 = vld [vmem:[#allocation2 + $0xd0] sm:$0xff]
      %v309 = vld [vmem:[#allocation2 + $0xd8] sm:$0xff]
      %v310 = vld [vmem:[#allocation2 + $0xe0] sm:$0xff]
      %v311 = vld [vmem:[#allocation2 + $0xe8] sm:$0xff]
      %v312 = vld [vmem:[#allocation2 + $0xf0] sm:$0xff]
      %v313 = vld [vmem:[#allocation2 + $0xf8] sm:$0xff]
      %v314 = vld [vmem:[#allocation2 + $0x100] sm:$0xff]
      %v315 = vld [vmem:[#allocation2 + $0x108] sm:$0xff]
      %v316 = vld [vmem:[#allocation2 + $0x110] sm:$0xff]
      %v317 = vld [vmem:[#allocation2 + $0x118] sm:$0xff]
      %v318 = vld [vmem:[#allocation2 + $0x120] sm:$0xff]
      %v319 = vld [vmem:[#allocation2 + $0x128] sm:$0xff]
      %v320 = vld [vmem:[#allocation2 + $0x130] sm:$0xff]
      %v321 = vld [vmem:[#allocation2 + $0x138] sm:$0xff]
      %v322 = vld [vmem:[#allocation2 + $0x140] sm:$0xff]
      %v323 = vld [vmem:[#allocation2 + $0x148] sm:$0xff]
      %v324 = vld [vmem:[#allocation2 + $0x150] sm:$0xff]
      %v325 = vld [vmem:[#allocation2 + $0x158] sm:$0xff]
      %v326 = vld [vmem:[#allocation2 + $0x160] sm:$0xff]
      %v327 = vld [vmem:[#allocation2 + $0x168] sm:$0xff]
      %v328 = vld [vmem:[#allocation2 + $0x170] sm:$0xff]
      %v329 = vld [vmem:[#allocation2 + $0x178] sm:$0xff]
      %v330 = vld [vmem:[#allocation2 + $0x180] sm:$0xff]
      %v331 = vld [vmem:[#allocation2 + $0x188] sm:$0xff]
      %v332 = vld [vmem:[#allocation2 + $0x190] sm:$0xff]
      %v333 = vld [vmem:[#allocation2 + $0x198] sm:$0xff]
      %v334 = vld [vmem:[#allocation2 + $0x1a0] sm:$0xff]
      %v335 = vld [vmem:[#allocation2 + $0x1a8] sm:$0xff]
      %v336 = vld [vmem:[#allocation2 + $0x1b0] sm:$0xff]
      %v337 = vld [vmem:[#allocation2 + $0x1b8] sm:$0xff]
      %v338 = vld [vmem:[#allocation2 + $0x1c0] sm:$0xff]
      %v339 = vld [vmem:[#allocation2 + $0x1c8] sm:$0xff]
      %v340 = vld [vmem:[#allocation2 + $0x1d0] sm:$0xff]
      %v341 = vld [vmem:[#allocation2 + $0x1d8] sm:$0xff]
      %v342 = vld [vmem:[#allocation2 + $0x1e0] sm:$0xff]
      %v343 = vld [vmem:[#allocation2 + $0x1e8] sm:$0xff]
      %v344 = vld [vmem:[#allocation2 + $0x1f0] sm:$0xff]
      %v345 = vld [vmem:[#allocation2 + $0x1f8] sm:$0xff]
      %v346 = vld [vmem:[%s195] sm:$0xff]
      %v347 = vld [vmem:[%s195 + $0x8] sm:$0xff]
      %v348 = vld [vmem:[%s195 + $0x10] sm:$0xff]
      %v349 = vld [vmem:[%s195 + $0x18] sm:$0xff]
      %v350 = vld [vmem:[%s195 + $0x20] sm:$0xff]
      %v351 = vld [vmem:[%s195 + $0x28] sm:$0xff]
      %v352 = vld [vmem:[%s195 + $0x30] sm:$0xff]
      %v353 = vld [vmem:[%s195 + $0x38] sm:$0xff]
      %v354 = vld [vmem:[%s195 + $0x40] sm:$0xff]
      %v355 = vld [vmem:[%s195 + $0x48] sm:$0xff]
      %v356 = vld [vmem:[%s195 + $0x50] sm:$0xff]
      %v357 = vld [vmem:[%s195 + $0x58] sm:$0xff]
      %v358 = vld [vmem:[%s195 + $0x60] sm:$0xff]
      %v359 = vld [vmem:[%s195 + $0x68] sm:$0xff]
      %v360 = vld [vmem:[%s195 + $0x70] sm:$0xff]
      %v361 = vld [vmem:[%s195 + $0x78] sm:$0xff]
      %v362 = vld [vmem:[%s195 + $0x80] sm:$0xff]
      %v363 = vld [vmem:[%s195 + $0x88] sm:$0xff]
      %v364 = vld [vmem:[%s195 + $0x90] sm:$0xff]
      %v365 = vld [vmem:[%s195 + $0x98] sm:$0xff]
      %v366 = vld [vmem:[%s195 + $0xa0] sm:$0xff]
      %v367 = vld [vmem:[%s195 + $0xa8] sm:$0xff]
      %v368 = vld [vmem:[%s195 + $0xb0] sm:$0xff]
      %v369 = vld [vmem:[%s195 + $0xb8] sm:$0xff]
      %v370 = vld [vmem:[%s195 + $0xc0] sm:$0xff]
      %v371 = vld [vmem:[%s195 + $0xc8] sm:$0xff]
      %v372 = vld [vmem:[%s195 + $0xd0] sm:$0xff]
      %v373 = vld [vmem:[%s195 + $0xd8] sm:$0xff]
      %v374 = vld [vmem:[%s195 + $0xe0] sm:$0xff]
      %v375 = vld [vmem:[%s195 + $0xe8] sm:$0xff]
      %v376 = vld [vmem:[%s195 + $0xf0] sm:$0xff]
      %v377 = vld [vmem:[%s195 + $0xf8] sm:$0xff]
      %v378 = vld [vmem:[%s195 + $0x100] sm:$0xff]
      %v379 = vld [vmem:[%s195 + $0x108] sm:$0xff]
      %v380 = vld [vmem:[%s195 + $0x110] sm:$0xff]
      %v381 = vld [vmem:[%s195 + $0x118] sm:$0xff]
      %v382 = vld [vmem:[%s195 + $0x120] sm:$0xff]
      %v383 = vld [vmem:[%s195 + $0x128] sm:$0xff]
      %v384 = vld [vmem:[%s195 + $0x130] sm:$0xff]
      %v385 = vld [vmem:[%s195 + $0x138] sm:$0xff]
      %v386 = vld [vmem:[%s195 + $0x140] sm:$0xff]
      %v387 = vld [vmem:[%s195 + $0x148] sm:$0xff]
      %v388 = vld [vmem:[%s195 + $0x150] sm:$0xff]
      %v389 = vld [vmem:[%s195 + $0x158] sm:$0xff]
      %v390 = vld [vmem:[%s195 + $0x160] sm:$0xff]
      %v391 = vld [vmem:[%s195 + $0x168] sm:$0xff]
      %v392 = vld [vmem:[%s195 + $0x170] sm:$0xff]
      %v393 = vld [vmem:[%s195 + $0x178] sm:$0xff]
      %v394 = vld [vmem:[%s195 + $0x180] sm:$0xff]
      %v395 = vld [vmem:[%s195 + $0x188] sm:$0xff]
      %v396 = vld [vmem:[%s195 + $0x190] sm:$0xff]
      %v397 = vld [vmem:[%s195 + $0x198] sm:$0xff]
      %v398 = vld [vmem:[%s195 + $0x1a0] sm:$0xff]
      %v399 = vld [vmem:[%s195 + $0x1a8] sm:$0xff]
      %v400 = vld [vmem:[%s195 + $0x1b0] sm:$0xff]
      %v401 = vld [vmem:[%s195 + $0x1b8] sm:$0xff]
      %v402 = vld [vmem:[%s195 + $0x1c0] sm:$0xff]
      %v403 = vld [vmem:[%s195 + $0x1c8] sm:$0xff]
      %v404 = vld [vmem:[%s195 + $0x1d0] sm:$0xff]
      %v405 = vld [vmem:[%s195 + $0x1d8] sm:$0xff]
      %v406 = vld [vmem:[%s195 + $0x1e0] sm:$0xff]
      %v407 = vld [vmem:[%s195 + $0x1e8] sm:$0xff]
      %v408 = vld [vmem:[%s195 + $0x1f0] sm:$0xff]
      %v409 = vld [vmem:[%s195 + $0x1f8] sm:$0xff]
      %v410 = vld [vmem:[%s203] sm:$0xff]
      %vm411 = vcmask 64512
      %v413 = vsel %vm411, %v346, 0
      %v416 = vsel %vm411, %v347, 0
      %v419 = vsel %vm411, %v348, 0
      %v422 = vsel %vm411, %v349, 0
      %v425 = vsel %vm411, %v350, 0
      %v428 = vsel %vm411, %v351, 0
      %v431 = vsel %vm411, %v352, 0
      %v434 = vsel %vm411, %v353, 0
      %v437 = vsel %vm411, %v354, 0
      %v440 = vsel %vm411, %v355, 0
      %v443 = vsel %vm411, %v356, 0
      %v446 = vsel %vm411, %v357, 0
      %v449 = vsel %vm411, %v358, 0
      %v452 = vsel %vm411, %v359, 0
      %v455 = vsel %vm411, %v360, 0
      %v458 = vsel %vm411, %v361, 0
      %v461 = vsel %vm411, %v362, 0
      %v464 = vsel %vm411, %v363, 0
      %v467 = vsel %vm411, %v364, 0
      %v470 = vsel %vm411, %v365, 0
      %v473 = vsel %vm411, %v366, 0
      %v476 = vsel %vm411, %v367, 0
      %v479 = vsel %vm411, %v368, 0
      %v482 = vsel %vm411, %v369, 0
      %v485 = vsel %vm411, %v370, 0
      %v488 = vsel %vm411, %v371, 0
      %v491 = vsel %vm411, %v372, 0
      %v494 = vsel %vm411, %v373, 0
      %v497 = vsel %vm411, %v374, 0
      %v500 = vsel %vm411, %v375, 0
      %v503 = vsel %vm411, %v376, 0
      %v506 = vsel %vm411, %v377, 0
      %v509 = vsel %vm411, %v378, 0
      %v512 = vsel %vm411, %v379, 0
      %v515 = vsel %vm411, %v380, 0
      %v518 = vsel %vm411, %v381, 0
      %v521 = vsel %vm411, %v382, 0
      %v524 = vsel %vm411, %v383, 0
      %v527 = vsel %vm411, %v384, 0
      %v530 = vsel %vm411, %v385, 0
      %v533 = vsel %vm411, %v386, 0
      %v536 = vsel %vm411, %v387, 0
      %v539 = vsel %vm411, %v388, 0
      %v542 = vsel %vm411, %v389, 0
      %v545 = vsel %vm411, %v390, 0
      %v548 = vsel %vm411, %v391, 0
      %v551 = vsel %vm411, %v392, 0
      %v554 = vsel %vm411, %v393, 0
      %v557 = vsel %vm411, %v394, 0
      %v560 = vsel %vm411, %v395, 0
      %v563 = vsel %vm411, %v396, 0
      %v566 = vsel %vm411, %v397, 0
      %v569 = vsel %vm411, %v398, 0
      %v572 = vsel %vm411, %v399, 0
      %v575 = vsel %vm411, %v400, 0
      %v578 = vsel %vm411, %v401, 0
      %v581 = vsel %vm411, %v402, 0
      %v584 = vsel %vm411, %v403, 0
      %v587 = vsel %vm411, %v404, 0
      %v590 = vsel %vm411, %v405, 0
      %v593 = vsel %vm411, %v406, 0
      %v596 = vsel %vm411, %v407, 0
      %v599 = vsel %vm411, %v408, 0
      %v602 = vsel %vm411, %v409, 0
      %604 = vmatprep.subr.mxu0 0.0
      %605 = vmatpush1.msra.mxu0 %v410
      %606 = vmatprep.subr.mxu0 0.0
      %607 = vmatpush1.msra.mxu0 0.0
      %608 = vmatprep.subr.mxu0 0.0
      %609 = vmatpush1.msra.mxu0 0.0
      %610 = vmatprep.subr.mxu0 0.0
      %611 = vmatpush1.msra.mxu0 0.0
      %612 = vmatprep.subr.mxu0 0.0
      %613 = vmatpush1.msra.mxu0 0.0
      %614 = vmatprep.subr.mxu0 0.0
      %615 = vmatpush1.msra.mxu0 0.0
      %616 = vmatprep.subr.mxu0 0.0
      %617 = vmatpush1.msra.mxu0 0.0
      %618 = vmatprep.subr.mxu0 0.0
      %619 = vmatpush1.msra.mxu0 0.0
      %620 = vmatprep.subr.mxu0 0.0
      %621 = vmatpush1.msra.mxu0 0.0
      %622 = vmatprep.subr.mxu0 0.0
      %623 = vmatpush1.msra.mxu0 0.0
      %624 = vmatprep.subr.mxu0 0.0
      %625 = vmatpush1.msra.mxu0 0.0
      %626 = vmatprep.subr.mxu0 0.0
      %627 = vmatpush1.msra.mxu0 0.0
      %628 = vmatprep.subr.mxu0 0.0
      %629 = vmatpush1.msra.mxu0 0.0
      %630 = vmatprep.subr.mxu0 0.0
      %631 = vmatpush1.msra.mxu0 0.0
      %632 = vmatprep.subr.mxu0 0.0
      %633 = vmatpush1.msra.mxu0 0.0
      %634 = vmatprep.subr.mxu0 0.0
      %635 = vmatpush1.msra.mxu0 0.0
      %636 = vmatprep.subr.mxu0 0.0
      %637 = vmatpush1.msra.mxu0 0.0
      %638 = vmatprep.subr.mxu0 0.0
      %639 = vmatpush1.msra.mxu0 0.0
      %640 = vmatprep.subr.mxu0 0.0
      %641 = vmatpush1.msra.mxu0 0.0
      %642 = vmatprep.subr.mxu0 0.0
      %643 = vmatpush1.msra.mxu0 0.0
      %644 = vmatprep.subr.mxu0 0.0
      %645 = vmatpush1.msra.mxu0 0.0
      %646 = vmatprep.subr.mxu0 0.0
      %647 = vmatpush1.msra.mxu0 0.0
      %648 = vmatprep.subr.mxu0 0.0
      %649 = vmatpush1.msra.mxu0 0.0
      %650 = vmatprep.subr.mxu0 0.0
      %651 = vmatpush1.msra.mxu0 0.0
      %652 = vmatprep.subr.mxu0 0.0
      %653 = vmatpush1.msra.mxu0 0.0
      %654 = vmatprep.subr.mxu0 0.0
      %655 = vmatpush1.msra.mxu0 0.0
      %656 = vmatprep.subr.mxu0 0.0
      %657 = vmatpush1.msra.mxu0 0.0
      %658 = vmatprep.subr.mxu0 0.0
      %659 = vmatpush1.msra.mxu0 0.0
      %660 = vmatprep.subr.mxu0 0.0
      %661 = vmatpush1.msra.mxu0 0.0
      %662 = vmatprep.subr.mxu0 0.0
      %663 = vmatpush1.msra.mxu0 0.0
      %664 = vmatprep.subr.mxu0 0.0
      %665 = vmatpush1.msra.mxu0 0.0
      %666 = vmatprep.subr.mxu0 0.0
      %667 = vmatpush1.msra.mxu0 0.0
      %668 = vmatprep.mubr.f32.mxu0 0.0
      %669 = vmatmul.mubr.f32.gmra.mrb[0].mxu0 %v413
      %v670 = vpop.f32.mrb[0].mxu0
      %v671 = vadd.f32 0.0, %v670
      %v672 = vpop.f32.mrb[0].mxu0
      %673 = vmatprep.mubr.f32.mxu0 0.0
      %674 = vmatmul.mubr.f32.gmra.mrb[0].mxu0 %v416
      %v675 = vpop.f32.mrb[0].mxu0
      %v676 = vadd.f32 0.0, %v675
      %v677 = vpop.f32.mrb[0].mxu0
      %678 = vmatprep.mubr.f32.mxu0 0.0
      %679 = vmatmul.mubr.f32.gmra.mrb[0].mxu0 %v419
      %v680 = vpop.f32.mrb[0].mxu0
      %v681 = vadd.f32 0.0, %v680
      %v682 = vpop.f32.mrb[0].mxu0
      %683 = vmatprep.mubr.f32.mxu0 0.0
      %684 = vmatmul.mubr.f32.gmra.mrb[0].mxu0 %v422
      %v685 = vpop.f32.mrb[0].mxu0
      %v686 = vadd.f32 0.0, %v685
      %v687 = vpop.f32.mrb[0].mxu0
      %688 = vmatprep.mubr.f32.mxu0 0.0
      %689 = vmatmul.mubr.f32.gmra.mrb[0].mxu0 %v425
      %v690 = vpop.f32.mrb[0].mxu0
      %v691 = vadd.f32 0.0, %v690
      %v692 = vpop.f32.mrb[0].mxu0
      %693 = vmatprep.mubr.f32.mxu0 0.0
      %694 = vmatmul.mubr.f32.gmra.mrb[0].mxu0 %v428
      %v695 = vpop.f32.mrb[0].mxu0
      %v696 = vadd.f32 0.0, %v695
      %v697 = vpop.f32.mrb[0].mxu0
      %698 = vmatprep.mubr.f32.mxu0 0.0
      %699 = vmatmul.mubr.f32.gmra.mrb[0].mxu0 %v431
      %v700 = vpop.f32.mrb[0].mxu0
      %v701 = vadd.f32 0.0, %v700
      %v702 = vpop.f32.mrb[0].mxu0
      %703 = vmatprep.mubr.f32.mxu0 0.0
      %704 = vmatmul.mubr.f32.gmra.mrb[0].mxu0 %v434
      %v705 = vpop.f32.mrb[0].mxu0
      %v706 = vadd.f32 0.0, %v705
      %v707 = vpop.f32.mrb[0].mxu0
      %708 = vmatprep.mubr.f32.mxu0 0.0
      %709 = vmatmul.mubr.f32.gmra.mrb[0].mxu0 %v437
      %v710 = vpop.f32.mrb[0].mxu0
      %v711 = vadd.f32 0.0, %v710
      %v712 = vpop.f32.mrb[0].mxu0
      %713 = vmatprep.mubr.f32.mxu0 0.0
      %714 = vmatmul.mubr.f32.gmra.mrb[0].mxu0 %v440
      %v715 = vpop.f32.mrb[0].mxu0
      %v716 = vadd.f32 0.0, %v715
      %v717 = vpop.f32.mrb[0].mxu0
      %718 = vmatprep.mubr.f32.mxu0 0.0
      %719 = vmatmul.mubr.f32.gmra.mrb[0].mxu0 %v443
      %v720 = vpop.f32.mrb[0].mxu0
      %v721 = vadd.f32 0.0, %v720
      %v722 = vpop.f32.mrb[0].mxu0
      %723 = vmatprep.mubr.f32.mxu0 0.0
      %724 = vmatmul.mubr.f32.gmra.mrb[0].mxu0 %v446
      %v725 = vpop.f32.mrb[0].mxu0
      %v726 = vadd.f32 0.0, %v725
      %v727 = vpop.f32.mrb[0].mxu0
      %728 = vmatprep.mubr.f32.mxu0 0.0
      %729 = vmatmul.mubr.f32.gmra.mrb[0].mxu0 %v449
      %v730 = vpop.f32.mrb[0].mxu0
      %v731 = vadd.f32 0.0, %v730
      %v732 = vpop.f32.mrb[0].mxu0
      %733 = vmatprep.mubr.f32.mxu0 0.0
      %734 = vmatmul.mubr.f32.gmra.mrb[0].mxu0 %v452
      %v735 = vpop.f32.mrb[0].mxu0
      %v736 = vadd.f32 0.0, %v735
      %v737 = vpop.f32.mrb[0].mxu0
      %738 = vmatprep.mubr.f32.mxu0 0.0
      %739 = vmatmul.mubr.f32.gmra.mrb[0].mxu0 %v455
      %v740 = vpop.f32.mrb[0].mxu0
      %v741 = vadd.f32 0.0, %v740
      %v742 = vpop.f32.mrb[0].mxu0
      %743 = vmatprep.mubr.f32.mxu0 0.0
      %744 = vmatmul.mubr.f32.gmra.mrb[0].mxu0 %v458
      %v745 = vpop.f32.mrb[0].mxu0
      %v746 = vadd.f32 0.0, %v745
      %v747 = vpop.f32.mrb[0].mxu0
      %748 = vmatprep.mubr.f32.mxu0 0.0
      %749 = vmatmul.mubr.f32.gmra.mrb[0].mxu0 %v461
      %v750 = vpop.f32.mrb[0].mxu0
      %v751 = vadd.f32 0.0, %v750
      %v752 = vpop.f32.mrb[0].mxu0
      %753 = vmatprep.mubr.f32.mxu0 0.0
      %754 = vmatmul.mubr.f32.gmra.mrb[0].mxu0 %v464
      %v755 = vpop.f32.mrb[0].mxu0
      %v756 = vadd.f32 0.0, %v755
      %v757 = vpop.f32.mrb[0].mxu0
      %758 = vmatprep.mubr.f32.mxu0 0.0
      %759 = vmatmul.mubr.f32.gmra.mrb[0].mxu0 %v467
      %v760 = vpop.f32.mrb[0].mxu0
      %v761 = vadd.f32 0.0, %v760
      %v762 = vpop.f32.mrb[0].mxu0
      %763 = vmatprep.mubr.f32.mxu0 0.0
      %764 = vmatmul.mubr.f32.gmra.mrb[0].mxu0 %v470
      %v765 = vpop.f32.mrb[0].mxu0
      %v766 = vadd.f32 0.0, %v765
      %v767 = vpop.f32.mrb[0].mxu0
      %768 = vmatprep.mubr.f32.mxu0 0.0
      %769 = vmatmul.mubr.f32.gmra.mrb[0].mxu0 %v473
      %v770 = vpop.f32.mrb[0].mxu0
      %v771 = vadd.f32 0.0, %v770
      %v772 = vpop.f32.mrb[0].mxu0
      %773 = vmatprep.mubr.f32.mxu0 0.0
      %774 = vmatmul.mubr.f32.gmra.mrb[0].mxu0 %v476
      %v775 = vpop.f32.mrb[0].mxu0
      %v776 = vadd.f32 0.0, %v775
      %v777 = vpop.f32.mrb[0].mxu0
      %778 = vmatprep.mubr.f32.mxu0 0.0
      %779 = vmatmul.mubr.f32.gmra.mrb[0].mxu0 %v479
      %v780 = vpop.f32.mrb[0].mxu0
      %v781 = vadd.f32 0.0, %v780
      %v782 = vpop.f32.mrb[0].mxu0
      %783 = vmatprep.mubr.f32.mxu0 0.0
      %784 = vmatmul.mubr.f32.gmra.mrb[0].mxu0 %v482
      %v785 = vpop.f32.mrb[0].mxu0
      %v786 = vadd.f32 0.0, %v785
      %v787 = vpop.f32.mrb[0].mxu0
      %788 = vmatprep.mubr.f32.mxu0 0.0
      %789 = vmatmul.mubr.f32.gmra.mrb[0].mxu0 %v485
      %v790 = vpop.f32.mrb[0].mxu0
      %v791 = vadd.f32 0.0, %v790
      %v792 = vpop.f32.mrb[0].mxu0
      %793 = vmatprep.mubr.f32.mxu0 0.0
      %794 = vmatmul.mubr.f32.gmra.mrb[0].mxu0 %v488
      %v795 = vpop.f32.mrb[0].mxu0
      %v796 = vadd.f32 0.0, %v795
      %v797 = vpop.f32.mrb[0].mxu0
      %798 = vmatprep.mubr.f32.mxu0 0.0
      %799 = vmatmul.mubr.f32.gmra.mrb[0].mxu0 %v491
      %v800 = vpop.f32.mrb[0].mxu0
      %v801 = vadd.f32 0.0, %v800
      %v802 = vpop.f32.mrb[0].mxu0
      %803 = vmatprep.mubr.f32.mxu0 0.0
      %804 = vmatmul.mubr.f32.gmra.mrb[0].mxu0 %v494
      %v805 = vpop.f32.mrb[0].mxu0
      %v806 = vadd.f32 0.0, %v805
      %v807 = vpop.f32.mrb[0].mxu0
      %808 = vmatprep.mubr.f32.mxu0 0.0
      %809 = vmatmul.mubr.f32.gmra.mrb[0].mxu0 %v497
      %v810 = vpop.f32.mrb[0].mxu0
      %v811 = vadd.f32 0.0, %v810
      %v812 = vpop.f32.mrb[0].mxu0
      %813 = vmatprep.mubr.f32.mxu0 0.0
      %814 = vmatmul.mubr.f32.gmra.mrb[0].mxu0 %v500
      %v815 = vpop.f32.mrb[0].mxu0
      %v816 = vadd.f32 0.0, %v815
      %v817 = vpop.f32.mrb[0].mxu0
      %818 = vmatprep.mubr.f32.mxu0 0.0
      %819 = vmatmul.mubr.f32.gmra.mrb[0].mxu0 %v503
      %v820 = vpop.f32.mrb[0].mxu0
      %v821 = vadd.f32 0.0, %v820
      %v822 = vpop.f32.mrb[0].mxu0
      %823 = vmatprep.mubr.f32.mxu0 0.0
      %824 = vmatmul.mubr.f32.gmra.mrb[0].mxu0 %v506
      %v825 = vpop.f32.mrb[0].mxu0
      %v826 = vadd.f32 0.0, %v825
      %v827 = vpop.f32.mrb[0].mxu0
      %828 = vmatprep.mubr.f32.mxu0 0.0
      %829 = vmatmul.mubr.f32.gmra.mrb[0].mxu0 %v509
      %v830 = vpop.f32.mrb[0].mxu0
      %v831 = vadd.f32 0.0, %v830
      %v832 = vpop.f32.mrb[0].mxu0
      %833 = vmatprep.mubr.f32.mxu0 0.0
      %834 = vmatmul.mubr.f32.gmra.mrb[0].mxu0 %v512
      %v835 = vpop.f32.mrb[0].mxu0
      %v836 = vadd.f32 0.0, %v835
      %v837 = vpop.f32.mrb[0].mxu0
      %838 = vmatprep.mubr.f32.mxu0 0.0
      %839 = vmatmul.mubr.f32.gmra.mrb[0].mxu0 %v515
      %v840 = vpop.f32.mrb[0].mxu0
      %v841 = vadd.f32 0.0, %v840
      %v842 = vpop.f32.mrb[0].mxu0
      %843 = vmatprep.mubr.f32.mxu0 0.0
      %844 = vmatmul.mubr.f32.gmra.mrb[0].mxu0 %v518
      %v845 = vpop.f32.mrb[0].mxu0
      %v846 = vadd.f32 0.0, %v845
      %v847 = vpop.f32.mrb[0].mxu0
      %848 = vmatprep.mubr.f32.mxu0 0.0
      %849 = vmatmul.mubr.f32.gmra.mrb[0].mxu0 %v521
      %v850 = vpop.f32.mrb[0].mxu0
      %v851 = vadd.f32 0.0, %v850
      %v852 = vpop.f32.mrb[0].mxu0
      %853 = vmatprep.mubr.f32.mxu0 0.0
      %854 = vmatmul.mubr.f32.gmra.mrb[0].mxu0 %v524
      %v855 = vpop.f32.mrb[0].mxu0
      %v856 = vadd.f32 0.0, %v855
      %v857 = vpop.f32.mrb[0].mxu0
      %858 = vmatprep.mubr.f32.mxu0 0.0
      %859 = vmatmul.mubr.f32.gmra.mrb[0].mxu0 %v527
      %v860 = vpop.f32.mrb[0].mxu0
      %v861 = vadd.f32 0.0, %v860
      %v862 = vpop.f32.mrb[0].mxu0
      %863 = vmatprep.mubr.f32.mxu0 0.0
      %864 = vmatmul.mubr.f32.gmra.mrb[0].mxu0 %v530
      %v865 = vpop.f32.mrb[0].mxu0
      %v866 = vadd.f32 0.0, %v865
      %v867 = vpop.f32.mrb[0].mxu0
      %868 = vmatprep.mubr.f32.mxu0 0.0
      %869 = vmatmul.mubr.f32.gmra.mrb[0].mxu0 %v533
      %v870 = vpop.f32.mrb[0].mxu0
      %v871 = vadd.f32 0.0, %v870
      %v872 = vpop.f32.mrb[0].mxu0
      %873 = vmatprep.mubr.f32.mxu0 0.0
      %874 = vmatmul.mubr.f32.gmra.mrb[0].mxu0 %v536
      %v875 = vpop.f32.mrb[0].mxu0
      %v876 = vadd.f32 0.0, %v875
      %v877 = vpop.f32.mrb[0].mxu0
      %878 = vmatprep.mubr.f32.mxu0 0.0
      %879 = vmatmul.mubr.f32.gmra.mrb[0].mxu0 %v539
      %v880 = vpop.f32.mrb[0].mxu0
      %v881 = vadd.f32 0.0, %v880
      %v882 = vpop.f32.mrb[0].mxu0
      %883 = vmatprep.mubr.f32.mxu0 0.0
      %884 = vmatmul.mubr.f32.gmra.mrb[0].mxu0 %v542
      %v885 = vpop.f32.mrb[0].mxu0
      %v886 = vadd.f32 0.0, %v885
      %v887 = vpop.f32.mrb[0].mxu0
      %888 = vmatprep.mubr.f32.mxu0 0.0
      %889 = vmatmul.mubr.f32.gmra.mrb[0].mxu0 %v545
      %v890 = vpop.f32.mrb[0].mxu0
      %v891 = vadd.f32 0.0, %v890
      %v892 = vpop.f32.mrb[0].mxu0
      %893 = vmatprep.mubr.f32.mxu0 0.0
      %894 = vmatmul.mubr.f32.gmra.mrb[0].mxu0 %v548
      %v895 = vpop.f32.mrb[0].mxu0
      %v896 = vadd.f32 0.0, %v895
      %v897 = vpop.f32.mrb[0].mxu0
      %898 = vmatprep.mubr.f32.mxu0 0.0
      %899 = vmatmul.mubr.f32.gmra.mrb[0].mxu0 %v551
      %v900 = vpop.f32.mrb[0].mxu0
      %v901 = vadd.f32 0.0, %v900
      %v902 = vpop.f32.mrb[0].mxu0
      %903 = vmatprep.mubr.f32.mxu0 0.0
      %904 = vmatmul.mubr.f32.gmra.mrb[0].mxu0 %v554
      %v905 = vpop.f32.mrb[0].mxu0
      %v906 = vadd.f32 0.0, %v905
      %v907 = vpop.f32.mrb[0].mxu0
      %908 = vmatprep.mubr.f32.mxu0 0.0
      %909 = vmatmul.mubr.f32.gmra.mrb[0].mxu0 %v557
      %v910 = vpop.f32.mrb[0].mxu0
      %v911 = vadd.f32 0.0, %v910
      %v912 = vpop.f32.mrb[0].mxu0
      %913 = vmatprep.mubr.f32.mxu0 0.0
      %914 = vmatmul.mubr.f32.gmra.mrb[0].mxu0 %v560
      %v915 = vpop.f32.mrb[0].mxu0
      %v916 = vadd.f32 0.0, %v915
      %v917 = vpop.f32.mrb[0].mxu0
      %918 = vmatprep.mubr.f32.mxu0 0.0
      %919 = vmatmul.mubr.f32.gmra.mrb[0].mxu0 %v563
      %v920 = vpop.f32.mrb[0].mxu0
      %v921 = vadd.f32 0.0, %v920
      %v922 = vpop.f32.mrb[0].mxu0
      %923 = vmatprep.mubr.f32.mxu0 0.0
      %924 = vmatmul.mubr.f32.gmra.mrb[0].mxu0 %v566
      %v925 = vpop.f32.mrb[0].mxu0
      %v926 = vadd.f32 0.0, %v925
      %v927 = vpop.f32.mrb[0].mxu0
      %928 = vmatprep.mubr.f32.mxu0 0.0
      %929 = vmatmul.mubr.f32.gmra.mrb[0].mxu0 %v569
      %v930 = vpop.f32.mrb[0].mxu0
      %v931 = vadd.f32 0.0, %v930
      %v932 = vpop.f32.mrb[0].mxu0
      %933 = vmatprep.mubr.f32.mxu0 0.0
      %934 = vmatmul.mubr.f32.gmra.mrb[0].mxu0 %v572
      %v935 = vpop.f32.mrb[0].mxu0
      %v936 = vadd.f32 0.0, %v935
      %v937 = vpop.f32.mrb[0].mxu0
      %938 = vmatprep.mubr.f32.mxu0 0.0
      %939 = vmatmul.mubr.f32.gmra.mrb[0].mxu0 %v575
      %v940 = vpop.f32.mrb[0].mxu0
      %v941 = vadd.f32 0.0, %v940
      %v942 = vpop.f32.mrb[0].mxu0
      %943 = vmatprep.mubr.f32.mxu0 0.0
      %944 = vmatmul.mubr.f32.gmra.mrb[0].mxu0 %v578
      %v945 = vpop.f32.mrb[0].mxu0
      %v946 = vadd.f32 0.0, %v945
      %v947 = vpop.f32.mrb[0].mxu0
      %948 = vmatprep.mubr.f32.mxu0 0.0
      %949 = vmatmul.mubr.f32.gmra.mrb[0].mxu0 %v581
      %v950 = vpop.f32.mrb[0].mxu0
      %v951 = vadd.f32 0.0, %v950
      %v952 = vpop.f32.mrb[0].mxu0
      %953 = vmatprep.mubr.f32.mxu0 0.0
      %954 = vmatmul.mubr.f32.gmra.mrb[0].mxu0 %v584
      %v955 = vpop.f32.mrb[0].mxu0
      %v956 = vadd.f32 0.0, %v955
      %v957 = vpop.f32.mrb[0].mxu0
      %958 = vmatprep.mubr.f32.mxu0 0.0
      %959 = vmatmul.mubr.f32.gmra.mrb[0].mxu0 %v587
      %v960 = vpop.f32.mrb[0].mxu0
      %v961 = vadd.f32 0.0, %v960
      %v962 = vpop.f32.mrb[0].mxu0
      %963 = vmatprep.mubr.f32.mxu0 0.0
      %964 = vmatmul.mubr.f32.gmra.mrb[0].mxu0 %v590
      %v965 = vpop.f32.mrb[0].mxu0
      %v966 = vadd.f32 0.0, %v965
      %v967 = vpop.f32.mrb[0].mxu0
      %968 = vmatprep.mubr.f32.mxu0 0.0
      %969 = vmatmul.mubr.f32.gmra.mrb[0].mxu0 %v593
      %v970 = vpop.f32.mrb[0].mxu0
      %v971 = vadd.f32 0.0, %v970
      %v972 = vpop.f32.mrb[0].mxu0
      %973 = vmatprep.mubr.f32.mxu0 0.0
      %974 = vmatmul.mubr.f32.gmra.mrb[0].mxu0 %v596
      %v975 = vpop.f32.mrb[0].mxu0
      %v976 = vadd.f32 0.0, %v975
      %v977 = vpop.f32.mrb[0].mxu0
      %978 = vmatprep.mubr.f32.mxu0 0.0
      %979 = vmatmul.mubr.f32.gmra.mrb[0].mxu0 %v599
      %v980 = vpop.f32.mrb[0].mxu0
      %v981 = vadd.f32 0.0, %v980
      %v982 = vpop.f32.mrb[0].mxu0
      %983 = vmatprep.mubr.f32.mxu0 0.0
      %984 = vmatmul.mubr.f32.gmra.mrb[0].mxu0 %v602
      %v985 = vpop.f32.mrb[0].mxu0
      %v986 = vadd.f32 0.0, %v985
      %v987 = vpop.f32.mrb[0].mxu0
      %988 = vdwg.mxu0
      %v989 = vadd.f32 %v282, %v671
      %v990 = vadd.f32 %v283, %v676
      %v991 = vadd.f32 %v284, %v681
      %v992 = vadd.f32 %v285, %v686
      %v993 = vadd.f32 %v286, %v691
      %v994 = vadd.f32 %v287, %v696
      %v995 = vadd.f32 %v288, %v701
      %v996 = vadd.f32 %v289, %v706
      %v997 = vadd.f32 %v290, %v711
      %v998 = vadd.f32 %v291, %v716
      %v999 = vadd.f32 %v292, %v721
      %v1000 = vadd.f32 %v293, %v726
      %v1001 = vadd.f32 %v294, %v731
      %v1002 = vadd.f32 %v295, %v736
      %v1003 = vadd.f32 %v296, %v741
      %v1004 = vadd.f32 %v297, %v746
      %v1005 = vadd.f32 %v298, %v751
      %v1006 = vadd.f32 %v299, %v756
      %v1007 = vadd.f32 %v300, %v761
      %v1008 = vadd.f32 %v301, %v766
      %v1009 = vadd.f32 %v302, %v771
      %v1010 = vadd.f32 %v303, %v776
      %v1011 = vadd.f32 %v304, %v781
      %v1012 = vadd.f32 %v305, %v786
      %v1013 = vadd.f32 %v306, %v791
      %v1014 = vadd.f32 %v307, %v796
      %v1015 = vadd.f32 %v308, %v801
      %v1016 = vadd.f32 %v309, %v806
      %v1017 = vadd.f32 %v310, %v811
      %v1018 = vadd.f32 %v311, %v816
      %v1019 = vadd.f32 %v312, %v821
      %v1020 = vadd.f32 %v313, %v826
      %v1021 = vadd.f32 %v314, %v831
      %v1022 = vadd.f32 %v315, %v836
      %v1023 = vadd.f32 %v316, %v841
      %v1024 = vadd.f32 %v317, %v846
      %v1025 = vadd.f32 %v318, %v851
      %v1026 = vadd.f32 %v319, %v856
      %v1027 = vadd.f32 %v320, %v861
      %v1028 = vadd.f32 %v321, %v866
      %v1029 = vadd.f32 %v322, %v871
      %v1030 = vadd.f32 %v323, %v876
      %v1031 = vadd.f32 %v324, %v881
      %v1032 = vadd.f32 %v325, %v886
      %v1033 = vadd.f32 %v326, %v891
      %v1034 = vadd.f32 %v327, %v896
      %v1035 = vadd.f32 %v328, %v901
      %v1036 = vadd.f32 %v329, %v906
      %v1037 = vadd.f32 %v330, %v911
      %v1038 = vadd.f32 %v331, %v916
      %v1039 = vadd.f32 %v332, %v921
      %v1040 = vadd.f32 %v333, %v926
      %v1041 = vadd.f32 %v334, %v931
      %v1042 = vadd.f32 %v335, %v936
      %v1043 = vadd.f32 %v336, %v941
      %v1044 = vadd.f32 %v337, %v946
      %v1045 = vadd.f32 %v338, %v951
      %v1046 = vadd.f32 %v339, %v956
      %v1047 = vadd.f32 %v340, %v961
      %v1048 = vadd.f32 %v341, %v966
      %v1049 = vadd.f32 %v342, %v971
      %v1050 = vadd.f32 %v343, %v976
      %v1051 = vadd.f32 %v344, %v981
      %v1052 = vadd.f32 %v345, %v986
      %vm1053 = vcmask 392192
      %1054 = vst.msk [vmem:[#allocation2] sm:$0xff] %vm1053, %v989
      %1055 = vst.msk [vmem:[#allocation2 + $0x8] sm:$0xff] %vm1053, %v990
      %1056 = vst.msk [vmem:[#allocation2 + $0x10] sm:$0xff] %vm1053, %v991
      %1057 = vst.msk [vmem:[#allocation2 + $0x18] sm:$0xff] %vm1053, %v992
      %1058 = vst.msk [vmem:[#allocation2 + $0x20] sm:$0xff] %vm1053, %v993
      %1059 = vst.msk [vmem:[#allocation2 + $0x28] sm:$0xff] %vm1053, %v994
      %1060 = vst.msk [vmem:[#allocation2 + $0x30] sm:$0xff] %vm1053, %v995
      %1061 = vst.msk [vmem:[#allocation2 + $0x38] sm:$0xff] %vm1053, %v996
      %1062 = vst.msk [vmem:[#allocation2 + $0x40] sm:$0xff] %vm1053, %v997
      %1063 = vst.msk [vmem:[#allocation2 + $0x48] sm:$0xff] %vm1053, %v998
      %1064 = vst.msk [vmem:[#allocation2 + $0x50] sm:$0xff] %vm1053, %v999
      %1065 = vst.msk [vmem:[#allocation2 + $0x58] sm:$0xff] %vm1053, %v1000
      %1066 = vst.msk [vmem:[#allocation2 + $0x60] sm:$0xff] %vm1053, %v1001
      %1067 = vst.msk [vmem:[#allocation2 + $0x68] sm:$0xff] %vm1053, %v1002
      %1068 = vst.msk [vmem:[#allocation2 + $0x70] sm:$0xff] %vm1053, %v1003
      %1069 = vst.msk [vmem:[#allocation2 + $0x78] sm:$0xff] %vm1053, %v1004
      %1070 = vst.msk [vmem:[#allocation2 + $0x80] sm:$0xff] %vm1053, %v1005
      %1071 = vst.msk [vmem:[#allocation2 + $0x88] sm:$0xff] %vm1053, %v1006
      %1072 = vst.msk [vmem:[#allocation2 + $0x90] sm:$0xff] %vm1053, %v1007
      %1073 = vst.msk [vmem:[#allocation2 + $0x98] sm:$0xff] %vm1053, %v1008
      %1074 = vst.msk [vmem:[#allocation2 + $0xa0] sm:$0xff] %vm1053, %v1009
      %1075 = vst.msk [vmem:[#allocation2 + $0xa8] sm:$0xff] %vm1053, %v1010
      %1076 = vst.msk [vmem:[#allocation2 + $0xb0] sm:$0xff] %vm1053, %v1011
      %1077 = vst.msk [vmem:[#allocation2 + $0xb8] sm:$0xff] %vm1053, %v1012
      %1078 = vst.msk [vmem:[#allocation2 + $0xc0] sm:$0xff] %vm1053, %v1013
      %1079 = vst.msk [vmem:[#allocation2 + $0xc8] sm:$0xff] %vm1053, %v1014
      %1080 = vst.msk [vmem:[#allocation2 + $0xd0] sm:$0xff] %vm1053, %v1015
      %1081 = vst.msk [vmem:[#allocation2 + $0xd8] sm:$0xff] %vm1053, %v1016
      %1082 = vst.msk [vmem:[#allocation2 + $0xe0] sm:$0xff] %vm1053, %v1017
      %1083 = vst.msk [vmem:[#allocation2 + $0xe8] sm:$0xff] %vm1053, %v1018
      %1084 = vst.msk [vmem:[#allocation2 + $0xf0] sm:$0xff] %vm1053, %v1019
      %1085 = vst.msk [vmem:[#allocation2 + $0xf8] sm:$0xff] %vm1053, %v1020
      %1086 = vst.msk [vmem:[#allocation2 + $0x100] sm:$0xff] %vm1053, %v1021
      %1087 = vst.msk [vmem:[#allocation2 + $0x108] sm:$0xff] %vm1053, %v1022
      %1088 = vst.msk [vmem:[#allocation2 + $0x110] sm:$0xff] %vm1053, %v1023
      %1089 = vst.msk [vmem:[#allocation2 + $0x118] sm:$0xff] %vm1053, %v1024
      %1090 = vst.msk [vmem:[#allocation2 + $0x120] sm:$0xff] %vm1053, %v1025
      %1091 = vst.msk [vmem:[#allocation2 + $0x128] sm:$0xff] %vm1053, %v1026
      %1092 = vst.msk [vmem:[#allocation2 + $0x130] sm:$0xff] %vm1053, %v1027
      %1093 = vst.msk [vmem:[#allocation2 + $0x138] sm:$0xff] %vm1053, %v1028
      %1094 = vst.msk [vmem:[#allocation2 + $0x140] sm:$0xff] %vm1053, %v1029
      %1095 = vst.msk [vmem:[#allocation2 + $0x148] sm:$0xff] %vm1053, %v1030
      %1096 = vst.msk [vmem:[#allocation2 + $0x150] sm:$0xff] %vm1053, %v1031
      %1097 = vst.msk [vmem:[#allocation2 + $0x158] sm:$0xff] %vm1053, %v1032
      %1098 = vst.msk [vmem:[#allocation2 + $0x160] sm:$0xff] %vm1053, %v1033
      %1099 = vst.msk [vmem:[#allocation2 + $0x168] sm:$0xff] %vm1053, %v1034
      %1100 = vst.msk [vmem:[#allocation2 + $0x170] sm:$0xff] %vm1053, %v1035
      %1101 = vst.msk [vmem:[#allocation2 + $0x178] sm:$0xff] %vm1053, %v1036
      %1102 = vst.msk [vmem:[#allocation2 + $0x180] sm:$0xff] %vm1053, %v1037
      %1103 = vst.msk [vmem:[#allocation2 + $0x188] sm:$0xff] %vm1053, %v1038
      %1104 = vst.msk [vmem:[#allocation2 + $0x190] sm:$0xff] %vm1053, %v1039
      %1105 = vst.msk [vmem:[#allocation2 + $0x198] sm:$0xff] %vm1053, %v1040
      %1106 = vst.msk [vmem:[#allocation2 + $0x1a0] sm:$0xff] %vm1053, %v1041
      %1107 = vst.msk [vmem:[#allocation2 + $0x1a8] sm:$0xff] %vm1053, %v1042
      %1108 = vst.msk [vmem:[#allocation2 + $0x1b0] sm:$0xff] %vm1053, %v1043
      %1109 = vst.msk [vmem:[#allocation2 + $0x1b8] sm:$0xff] %vm1053, %v1044
      %1110 = vst.msk [vmem:[#allocation2 + $0x1c0] sm:$0xff] %vm1053, %v1045
      %1111 = vst.msk [vmem:[#allocation2 + $0x1c8] sm:$0xff] %vm1053, %v1046
      %1112 = vst.msk [vmem:[#allocation2 + $0x1d0] sm:$0xff] %vm1053, %v1047
      %1113 = vst.msk [vmem:[#allocation2 + $0x1d8] sm:$0xff] %vm1053, %v1048
      %1114 = vst.msk [vmem:[#allocation2 + $0x1e0] sm:$0xff] %vm1053, %v1049
      %1115 = vst.msk [vmem:[#allocation2 + $0x1e8] sm:$0xff] %vm1053, %v1050
      %1116 = vst.msk [vmem:[#allocation2 + $0x1f0] sm:$0xff] %vm1053, %v1051
      %1117 = vst.msk [vmem:[#allocation2 + $0x1f8] sm:$0xff] %vm1053, %v1052
      // Predicated region
      $region33: #{generator_forward.26} parent=27 // pred_check
        %p1118 = pneg %p213
      $region34: #{generator_forward.26} parent=27 // pred_check_branch
        %1120 = sbr.rel (%p1118) target = $region36
      $region35: #{generator_forward.26} parent=27 // pred_region
        %v1121 = vld [vmem:[#allocation2] sm:$0xff]
        %v1122 = vld [vmem:[#allocation2 + $0x8] sm:$0xff]
        %v1123 = vld [vmem:[#allocation2 + $0x10] sm:$0xff]
        %v1124 = vld [vmem:[#allocation2 + $0x18] sm:$0xff]
        %v1125 = vld [vmem:[#allocation2 + $0x20] sm:$0xff]
        %v1126 = vld [vmem:[#allocation2 + $0x28] sm:$0xff]
        %v1127 = vld [vmem:[#allocation2 + $0x30] sm:$0xff]
        %v1128 = vld [vmem:[#allocation2 + $0x38] sm:$0xff]
        %v1129 = vld [vmem:[#allocation2 + $0x40] sm:$0xff]
        %v1130 = vld [vmem:[#allocation2 + $0x48] sm:$0xff]
        %v1131 = vld [vmem:[#allocation2 + $0x50] sm:$0xff]
        %v1132 = vld [vmem:[#allocation2 + $0x58] sm:$0xff]
        %v1133 = vld [vmem:[#allocation2 + $0x60] sm:$0xff]
        %v1134 = vld [vmem:[#allocation2 + $0x68] sm:$0xff]
        %v1135 = vld [vmem:[#allocation2 + $0x70] sm:$0xff]
        %v1136 = vld [vmem:[#allocation2 + $0x78] sm:$0xff]
        %v1137 = vld [vmem:[#allocation2 + $0x80] sm:$0xff]
        %v1138 = vld [vmem:[#allocation2 + $0x88] sm:$0xff]
        %v1139 = vld [vmem:[#allocation2 + $0x90] sm:$0xff]
        %v1140 = vld [vmem:[#allocation2 + $0x98] sm:$0xff]
        %v1141 = vld [vmem:[#allocation2 + $0xa0] sm:$0xff]
        %v1142 = vld [vmem:[#allocation2 + $0xa8] sm:$0xff]
        %v1143 = vld [vmem:[#allocation2 + $0xb0] sm:$0xff]
        %v1144 = vld [vmem:[#allocation2 + $0xb8] sm:$0xff]
        %v1145 = vld [vmem:[#allocation2 + $0xc0] sm:$0xff]
        %v1146 = vld [vmem:[#allocation2 + $0xc8] sm:$0xff]
        %v1147 = vld [vmem:[#allocation2 + $0xd0] sm:$0xff]
        %v1148 = vld [vmem:[#allocation2 + $0xd8] sm:$0xff]
        %v1149 = vld [vmem:[#allocation2 + $0xe0] sm:$0xff]
        %v1150 = vld [vmem:[#allocation2 + $0xe8] sm:$0xff]
        %v1151 = vld [vmem:[#allocation2 + $0xf0] sm:$0xff]
        %v1152 = vld [vmem:[#allocation2 + $0xf8] sm:$0xff]
        %v1153 = vld [vmem:[#allocation2 + $0x100] sm:$0xff]
        %v1154 = vld [vmem:[#allocation2 + $0x108] sm:$0xff]
        %v1155 = vld [vmem:[#allocation2 + $0x110] sm:$0xff]
        %v1156 = vld [vmem:[#allocation2 + $0x118] sm:$0xff]
        %v1157 = vld [vmem:[#allocation2 + $0x120] sm:$0xff]
        %v1158 = vld [vmem:[#allocation2 + $0x128] sm:$0xff]
        %v1159 = vld [vmem:[#allocation2 + $0x130] sm:$0xff]
        %v1160 = vld [vmem:[#allocation2 + $0x138] sm:$0xff]
        %v1161 = vld [vmem:[#allocation2 + $0x140] sm:$0xff]
        %v1162 = vld [vmem:[#allocation2 + $0x148] sm:$0xff]
        %v1163 = vld [vmem:[#allocation2 + $0x150] sm:$0xff]
        %v1164 = vld [vmem:[#allocation2 + $0x158] sm:$0xff]
        %v1165 = vld [vmem:[#allocation2 + $0x160] sm:$0xff]
        %v1166 = vld [vmem:[#allocation2 + $0x168] sm:$0xff]
        %v1167 = vld [vmem:[#allocation2 + $0x170] sm:$0xff]
        %v1168 = vld [vmem:[#allocation2 + $0x178] sm:$0xff]
        %v1169 = vld [vmem:[#allocation2 + $0x180] sm:$0xff]
        %v1170 = vld [vmem:[#allocation2 + $0x188] sm:$0xff]
        %v1171 = vld [vmem:[#allocation2 + $0x190] sm:$0xff]
        %v1172 = vld [vmem:[#allocation2 + $0x198] sm:$0xff]
        %v1173 = vld [vmem:[#allocation2 + $0x1a0] sm:$0xff]
        %v1174 = vld [vmem:[#allocation2 + $0x1a8] sm:$0xff]
        %v1175 = vld [vmem:[#allocation2 + $0x1b0] sm:$0xff]
        %v1176 = vld [vmem:[#allocation2 + $0x1b8] sm:$0xff]
        %v1177 = vld [vmem:[#allocation2 + $0x1c0] sm:$0xff]
        %v1178 = vld [vmem:[#allocation2 + $0x1c8] sm:$0xff]
        %v1179 = vld [vmem:[#allocation2 + $0x1d0] sm:$0xff]
        %v1180 = vld [vmem:[#allocation2 + $0x1d8] sm:$0xff]
        %v1181 = vld [vmem:[#allocation2 + $0x1e0] sm:$0xff]
        %v1182 = vld [vmem:[#allocation2 + $0x1e8] sm:$0xff]
        %v1183 = vld [vmem:[#allocation2 + $0x1f0] sm:$0xff]
        %v1184 = vld [vmem:[#allocation2 + $0x1f8] sm:$0xff]
        %1185 = vst.msk [vmem:[%s211] sm:$0xff] %vm1053, %v1121
        %1186 = vst.msk [vmem:[%s211 + $0x8] sm:$0xff] %vm1053, %v1122
        %1187 = vst.msk [vmem:[%s211 + $0x10] sm:$0xff] %vm1053, %v1123
        %1188 = vst.msk [vmem:[%s211 + $0x18] sm:$0xff] %vm1053, %v1124
        %1189 = vst.msk [vmem:[%s211 + $0x20] sm:$0xff] %vm1053, %v1125
        %1190 = vst.msk [vmem:[%s211 + $0x28] sm:$0xff] %vm1053, %v1126
        %1191 = vst.msk [vmem:[%s211 + $0x30] sm:$0xff] %vm1053, %v1127
        %1192 = vst.msk [vmem:[%s211 + $0x38] sm:$0xff] %vm1053, %v1128
        %1193 = vst.msk [vmem:[%s211 + $0x40] sm:$0xff] %vm1053, %v1129
        %1194 = vst.msk [vmem:[%s211 + $0x48] sm:$0xff] %vm1053, %v1130
        %1195 = vst.msk [vmem:[%s211 + $0x50] sm:$0xff] %vm1053, %v1131
        %1196 = vst.msk [vmem:[%s211 + $0x58] sm:$0xff] %vm1053, %v1132
        %1197 = vst.msk [vmem:[%s211 + $0x60] sm:$0xff] %vm1053, %v1133
        %1198 = vst.msk [vmem:[%s211 + $0x68] sm:$0xff] %vm1053, %v1134
        %1199 = vst.msk [vmem:[%s211 + $0x70] sm:$0xff] %vm1053, %v1135
        %1200 = vst.msk [vmem:[%s211 + $0x78] sm:$0xff] %vm1053, %v1136
        %1201 = vst.msk [vmem:[%s211 + $0x80] sm:$0xff] %vm1053, %v1137
        %1202 = vst.msk [vmem:[%s211 + $0x88] sm:$0xff] %vm1053, %v1138
        %1203 = vst.msk [vmem:[%s211 + $0x90] sm:$0xff] %vm1053, %v1139
        %1204 = vst.msk [vmem:[%s211 + $0x98] sm:$0xff] %vm1053, %v1140
        %1205 = vst.msk [vmem:[%s211 + $0xa0] sm:$0xff] %vm1053, %v1141
        %1206 = vst.msk [vmem:[%s211 + $0xa8] sm:$0xff] %vm1053, %v1142
        %1207 = vst.msk [vmem:[%s211 + $0xb0] sm:$0xff] %vm1053, %v1143
        %1208 = vst.msk [vmem:[%s211 + $0xb8] sm:$0xff] %vm1053, %v1144
        %1209 = vst.msk [vmem:[%s211 + $0xc0] sm:$0xff] %vm1053, %v1145
        %1210 = vst.msk [vmem:[%s211 + $0xc8] sm:$0xff] %vm1053, %v1146
        %1211 = vst.msk [vmem:[%s211 + $0xd0] sm:$0xff] %vm1053, %v1147
        %1212 = vst.msk [vmem:[%s211 + $0xd8] sm:$0xff] %vm1053, %v1148
        %1213 = vst.msk [vmem:[%s211 + $0xe0] sm:$0xff] %vm1053, %v1149
        %1214 = vst.msk [vmem:[%s211 + $0xe8] sm:$0xff] %vm1053, %v1150
        %1215 = vst.msk [vmem:[%s211 + $0xf0] sm:$0xff] %vm1053, %v1151
        %1216 = vst.msk [vmem:[%s211 + $0xf8] sm:$0xff] %vm1053, %v1152
        %1217 = vst.msk [vmem:[%s211 + $0x100] sm:$0xff] %vm1053, %v1153
        %1218 = vst.msk [vmem:[%s211 + $0x108] sm:$0xff] %vm1053, %v1154
        %1219 = vst.msk [vmem:[%s211 + $0x110] sm:$0xff] %vm1053, %v1155
        %1220 = vst.msk [vmem:[%s211 + $0x118] sm:$0xff] %vm1053, %v1156
        %1221 = vst.msk [vmem:[%s211 + $0x120] sm:$0xff] %vm1053, %v1157
        %1222 = vst.msk [vmem:[%s211 + $0x128] sm:$0xff] %vm1053, %v1158
        %1223 = vst.msk [vmem:[%s211 + $0x130] sm:$0xff] %vm1053, %v1159
        %1224 = vst.msk [vmem:[%s211 + $0x138] sm:$0xff] %vm1053, %v1160
        %1225 = vst.msk [vmem:[%s211 + $0x140] sm:$0xff] %vm1053, %v1161
        %1226 = vst.msk [vmem:[%s211 + $0x148] sm:$0xff] %vm1053, %v1162
        %1227 = vst.msk [vmem:[%s211 + $0x150] sm:$0xff] %vm1053, %v1163
        %1228 = vst.msk [vmem:[%s211 + $0x158] sm:$0xff] %vm1053, %v1164
        %1229 = vst.msk [vmem:[%s211 + $0x160] sm:$0xff] %vm1053, %v1165
        %1230 = vst.msk [vmem:[%s211 + $0x168] sm:$0xff] %vm1053, %v1166
        %1231 = vst.msk [vmem:[%s211 + $0x170] sm:$0xff] %vm1053, %v1167
        %1232 = vst.msk [vmem:[%s211 + $0x178] sm:$0xff] %vm1053, %v1168
        %1233 = vst.msk [vmem:[%s211 + $0x180] sm:$0xff] %vm1053, %v1169
        %1234 = vst.msk [vmem:[%s211 + $0x188] sm:$0xff] %vm1053, %v1170
        %1235 = vst.msk [vmem:[%s211 + $0x190] sm:$0xff] %vm1053, %v1171
        %1236 = vst.msk [vmem:[%s211 + $0x198] sm:$0xff] %vm1053, %v1172
        %1237 = vst.msk [vmem:[%s211 + $0x1a0] sm:$0xff] %vm1053, %v1173
        %1238 = vst.msk [vmem:[%s211 + $0x1a8] sm:$0xff] %vm1053, %v1174
        %1239 = vst.msk [vmem:[%s211 + $0x1b0] sm:$0xff] %vm1053, %v1175
        %1240 = vst.msk [vmem:[%s211 + $0x1b8] sm:$0xff] %vm1053, %v1176
        %1241 = vst.msk [vmem:[%s211 + $0x1c0] sm:$0xff] %vm1053, %v1177
        %1242 = vst.msk [vmem:[%s211 + $0x1c8] sm:$0xff] %vm1053, %v1178
        %1243 = vst.msk [vmem:[%s211 + $0x1d0] sm:$0xff] %vm1053, %v1179
        %1244 = vst.msk [vmem:[%s211 + $0x1d8] sm:$0xff] %vm1053, %v1180
        %1245 = vst.msk [vmem:[%s211 + $0x1e0] sm:$0xff] %vm1053, %v1181
        %1246 = vst.msk [vmem:[%s211 + $0x1e8] sm:$0xff] %vm1053, %v1182
        %1247 = vst.msk [vmem:[%s211 + $0x1f0] sm:$0xff] %vm1053, %v1183
        %1248 = vst.msk [vmem:[%s211 + $0x1f8] sm:$0xff] %vm1053, %v1184
      $region36: #{generator_forward.26} parent=27 // pred_fallthru
        _
      %s1249 = smul.u32 64, %s18
      %p1250 = scmp.lt.s32.totalorder %s1249, 255
      %s1251 = scalar_select %p1250, %s1249, 255
      %p1252 = scmp.lt.s32.totalorder %s19, 0
      %s1253 = scalar_select %p1252, %s19, 0
      %s1254 = sadd.s32 %s1253, %s1251
      %s1255 = smul.addr %s1254, 8
      %s1256 = scalar_lea.vmem %s2, %s1255
      // Predicated region
      $region37: #{generator_forward.26} parent=27 // pred_check
        %p1257 = pneg %p108
      $region38: #{generator_forward.26} parent=27 // pred_check_branch
        %1259 = sbr.rel (%p1257) target = $region40
      $region39: #{generator_forward.26} parent=27 // pred_region
        %s1260 = smul.u32 64, %s18
      $region40: #{generator_forward.26} parent=27 // pred_fallthru
        _
    $region28: #{generator_forward.26} parent=5 // pred_fallthru
      _
    %p1261 = scmp.le.s32.totalorder 2, %s8
    // Predicated region
    $region41: #{generator_forward.26} parent=5 // pred_check
      %p1262 = pneg %p1261
    $region42: #{generator_forward.26} parent=5 // pred_check_branch
      %1264 = sbr.rel (%p1262) target = $region44
    $region43: #{generator_forward.26} parent=5 // pred_region
      %s1265 = ssub.s32 %s8, 2
      // Predicated region
      $region45: #{generator_forward.26} parent=43 // pred_check
        %p1266 = pneg %p114
      $region46: #{generator_forward.26} parent=43 // pred_check_branch
        %1268 = sbr.rel (%p1266) target = $region48
      $region47: #{generator_forward.26} parent=43 // pred_region
        %s1269 = smul.u32 64, %s21
        %p1270 = scmp.lt.s32.totalorder %s1269, 255
        %s1271 = scalar_select %p1270, %s1269, 255
        %p1272 = scmp.lt.s32.totalorder %s22, 0
        %s1273 = scalar_select %p1272, %s22, 0
        %s1274 = sadd.s32 %s1273, %s1271
        %s1275 = smul.addr %s1274, 8
        %s1276 = scalar_lea.vmem %s2, %s1275
      $region48: #{generator_forward.26} parent=43 // pred_fallthru
        _
    $region44: #{generator_forward.26} parent=5 // pred_fallthru
      _
  $region6: #{generator_forward.26} parent=0 // loop_footer
    %s12 = sadd.s32 1, %s8
  $region7: #{generator_forward.26} parent=0 // loop_footer_branch
    %7 = sbr.rel target = $region3
  $region8: #{generator_forward.26} parent=0 // loop_exit
    _

// kernel: generator_forward.27
$region0: #{generator_forward.27}
  #allocation0 [shape = 'u32[]', space=smem, size = 0x4, offset = 0x4, fixed_abs, tag = 'smem constant byte address 0x4 - core index']
  #allocation1 [shape = 'u32[144,128]{1,0:T(1,128)}', space=vmem, size = 0x12000, scoped, tag = 'internal scratch']
  %s0 = inlined_call_operand.vmem [shape: f32[24,1024], index: 0, kind: input, shape index: {}]
  %s1 = inlined_call_operand.vmem [shape: f32[24,1024], index: 1, kind: output, shape index: {}]
  %s2 = sld [smem:[#allocation0]]
  $region14: #{generator_forward.27} parent=0
    _
  %s4 = ssub.s32 1, %s2
  %s5 = scalar_select 0, %s4, %s2
  // Predicated region
  $region2: #{generator_forward.27} parent=0 // pred_check
    _
  $region3: #{generator_forward.27} parent=0 // pred_check_branch
    %7 = sbr.rel (0) target = $region5
  $region4: #{generator_forward.27} parent=0 // pred_region
    _
  $region5: #{generator_forward.27} parent=0 // pred_fallthru
    _
  %v8 = vld [vmem:[%s0] sm:$0xff]
  %v9 = vld [vmem:[%s0 + $0x8] sm:$0xff]
  %v10 = vld [vmem:[%s0 + $0x10] sm:$0xff]
  %v11 = vld [vmem:[%s0 + $0x18] sm:$0xff]
  %v12 = vld [vmem:[%s0 + $0x20] sm:$0xff]
  %v13 = vld [vmem:[%s0 + $0x28] sm:$0xff]
  %v14 = vld [vmem:[%s0 + $0x30] sm:$0xff]
  %v15 = vld [vmem:[%s0 + $0x38] sm:$0xff]
  %v16 = vld [vmem:[%s0 + $0x40] sm:$0xff]
  %v17 = vld [vmem:[%s0 + $0x48] sm:$0xff]
  %v18 = vld [vmem:[%s0 + $0x50] sm:$0xff]
  %v19 = vld [vmem:[%s0 + $0x58] sm:$0xff]
  %v20 = vld [vmem:[%s0 + $0x60] sm:$0xff]
  %v21 = vld [vmem:[%s0 + $0x68] sm:$0xff]
  %v22 = vld [vmem:[%s0 + $0x70] sm:$0xff]
  %v23 = vld [vmem:[%s0 + $0x78] sm:$0xff]
  %v24 = vld [vmem:[%s0 + $0x80] sm:$0xff]
  %v25 = vld [vmem:[%s0 + $0x88] sm:$0xff]
  %v26 = vld [vmem:[%s0 + $0x90] sm:$0xff]
  %v27 = vld [vmem:[%s0 + $0x98] sm:$0xff]
  %v28 = vld [vmem:[%s0 + $0xa0] sm:$0xff]
  %v29 = vld [vmem:[%s0 + $0xa8] sm:$0xff]
  %v30 = vld [vmem:[%s0 + $0xb0] sm:$0xff]
  %v31 = vld [vmem:[%s0 + $0xb8] sm:$0xff]
  %v32 = vtanh.pop %v8
  %v33 = vtanh.pop %v9
  %v34 = vtanh.pop %v10
  %v35 = vtanh.pop %v11
  %v36 = vtanh.pop %v12
  %v37 = vtanh.pop %v13
  %v38 = vtanh.pop %v14
  %v39 = vtanh.pop %v15
  %v40 = vtanh.pop %v16
  %v41 = vtanh.pop %v17
  %v42 = vtanh.pop %v18
  %v43 = vtanh.pop %v19
  %v44 = vtanh.pop %v20
  %v45 = vtanh.pop %v21
  %v46 = vtanh.pop %v22
  %v47 = vtanh.pop %v23
  %v48 = vtanh.pop %v24
  %v49 = vtanh.pop %v25
  %v50 = vtanh.pop %v26
  %v51 = vtanh.pop %v27
  %v52 = vtanh.pop %v28
  %v53 = vtanh.pop %v29
  %v54 = vtanh.pop %v30
  %v55 = vtanh.pop %v31
  %56 = vst [vmem:[%s1] sm:$0xff] %v32
  %57 = vst [vmem:[%s1 + $0x8] sm:$0xff] %v33
  %58 = vst [vmem:[%s1 + $0x10] sm:$0xff] %v34
  %59 = vst [vmem:[%s1 + $0x18] sm:$0xff] %v35
  %60 = vst [vmem:[%s1 + $0x20] sm:$0xff] %v36
  %61 = vst [vmem:[%s1 + $0x28] sm:$0xff] %v37
  %62 = vst [vmem:[%s1 + $0x30] sm:$0xff] %v38
  %63 = vst [vmem:[%s1 + $0x38] sm:$0xff] %v39
  %64 = vst [vmem:[%s1 + $0x40] sm:$0xff] %v40
  %65 = vst [vmem:[%s1 + $0x48] sm:$0xff] %v41
  %66 = vst [vmem:[%s1 + $0x50] sm:$0xff] %v42
  %67 = vst [vmem:[%s1 + $0x58] sm:$0xff] %v43
  %68 = vst [vmem:[%s1 + $0x60] sm:$0xff] %v44
  %69 = vst [vmem:[%s1 + $0x68] sm:$0xff] %v45
  %70 = vst [vmem:[%s1 + $0x70] sm:$0xff] %v46
  %71 = vst [vmem:[%s1 + $0x78] sm:$0xff] %v47
  %72 = vst [vmem:[%s1 + $0x80] sm:$0xff] %v48
  %73 = vst [vmem:[%s1 + $0x88] sm:$0xff] %v49
  %74 = vst [vmem:[%s1 + $0x90] sm:$0xff] %v50
  %75 = vst [vmem:[%s1 + $0x98] sm:$0xff] %v51
  %76 = vst [vmem:[%s1 + $0xa0] sm:$0xff] %v52
  %77 = vst [vmem:[%s1 + $0xa8] sm:$0xff] %v53
  %78 = vst [vmem:[%s1 + $0xb0] sm:$0xff] %v54
  %79 = vst [vmem:[%s1 + $0xb8] sm:$0xff] %v55
  // Predicated region
  $region6: #{generator_forward.27} parent=0 // pred_check
    _
  $region7: #{generator_forward.27} parent=0 // pred_check_branch
    %81 = sbr.rel (0) target = $region9
  $region8: #{generator_forward.27} parent=0 // pred_region
    _
  $region9: #{generator_forward.27} parent=0 // pred_fallthru
    _
  // Predicated region
  $region10: #{generator_forward.27} parent=0 // pred_check
    _
  $region11: #{generator_forward.27} parent=0 // pred_check_branch
    %83 = sbr.rel (0) target = $region13
  $region12: #{generator_forward.27} parent=0 // pred_region
    _
  $region13: #{generator_forward.27} parent=0 // pred_fallthru
    _

</llo_original>
